<compile_context>
chip_gen: v5e
topology: v5e:2x2
jax: 0.10.0
libtpu: 0.0.40
codegen_flags: <defaults>
</compile_context>

<pallas_src>
import functools

import jax
import jax.numpy as jnp
from jax.experimental import pallas as pl
from jax.experimental.pallas import tpu as pltpu

EPS = 1e-5      # nn.BatchNorm2d default
LANES = 128


def conv_residual_kernel(xp_ref, w1_ref, w2_ref, bias_ref, y_ref, stats_ref, p1_ref):
    # xp_ref:   (1, H+2, W+2, CP) f32  -- spatially pre-padded, channel-padded input
    # w1_ref/w2_ref: (9*CP, CP) bf16   -- im2col-packed 3x3 conv weights
    # bias_ref: (2, CP) f32            -- row 0: conv1 bias, row 1: conv2 bias
    # y_ref:    (1, H, W, CP) f32      -- conv2(relu(conv1(x))) + bias + skip
    # stats_ref:(1, 2, CP) f32         -- per-batch-tile [sum; sum of squares] of y
    # p1_ref:   (H+2, W+2, CP) bf16    -- VMEM scratch for conv2's padded input
    _, HP, WP, CP = xp_ref.shape
    H, W = HP - 2, WP - 2
    R = H * W

    xp = xp_ref[0]                                              # (HP, WP, CP) f32

    # ---- conv1: ONE im2col matmul (R, 9*CP) @ (9*CP, CP), bf16 in / f32 acc ----
    cols1 = [xp[dy:dy + H, dx:dx + W, :].reshape(R, CP)
             for dy in range(3) for dx in range(3)]
    patches1 = jnp.concatenate([c.astype(jnp.bfloat16) for c in cols1], axis=1)
    out1 = jnp.dot(patches1, w1_ref[...], preferred_element_type=jnp.float32)
    out1 = jnp.maximum(out1 + bias_ref[0:1, :], 0.0)            # bias + ReLU, (R, CP)

    # ---- re-pad conv1 output: zero ONLY the 1-px halo ring, then the interior ----
    zrow = jnp.zeros((1, WP, CP), jnp.bfloat16)
    zcol = jnp.zeros((HP, 1, CP), jnp.bfloat16)
    p1_ref[0:1, :, :] = zrow
    p1_ref[HP - 1:HP, :, :] = zrow
    p1_ref[:, 0:1, :] = zcol
    p1_ref[:, WP - 1:WP, :] = zcol
    p1_ref[1:H + 1, 1:W + 1, :] = out1.astype(jnp.bfloat16).reshape(H, W, CP)
    p1 = p1_ref[...]                                            # single full read

    # ---- conv2: ONE im2col matmul; fold conv2 bias + identity skip into epilogue ----
    cols2 = [p1[dy:dy + H, dx:dx + W, :].reshape(R, CP)
             for dy in range(3) for dx in range(3)]
    patches2 = jnp.concatenate(cols2, axis=1)                   # (R, 9*CP) bf16
    y = jnp.dot(patches2, w2_ref[...], preferred_element_type=jnp.float32)
    y = y + bias_ref[1:2, :] + cols1[4]     # cols1[4] == center window == identity skip (f32)

    y_ref[0] = y.reshape(H, W, CP)
    # per-tile BatchNorm partial stats (XLU cross-sublane reduce, f32)
    stats_ref[0, 0:1, :] = jnp.sum(y, axis=0, keepdims=True)
    stats_ref[0, 1:2, :] = jnp.sum(y * y, axis=0, keepdims=True)


def bn_relu_kernel(stats_ref, gb_ref, y_ref, o_ref, *, inv_count):
    # stats_ref: (N, 2, CP) f32 -- all per-tile partial sums (tiny, loaded fully)
    # gb_ref:    (2, CP) f32    -- row 0: gamma, row 1: beta
    # y_ref:     (1, H, W, CP) f32
    # o_ref:     (1, H, W, CP) f32
    _, H, W, CP = y_ref.shape
    totals = jnp.sum(stats_ref[...], axis=0)                    # (2, CP): [sum; sumsq]
    mean = totals[0:1, :] * inv_count                           # (1, CP)
    var = totals[1:2, :] * inv_count - mean * mean              # biased (training-mode) var
    scale = gb_ref[0:1, :] * jax.lax.rsqrt(var + EPS)           # gamma / sqrt(var+eps) (EUP)
    shift = gb_ref[1:2, :] - mean * scale                       # beta - mean*scale
    y = y_ref[0].reshape(H * W, CP)
    o_ref[0] = jnp.maximum(y * scale + shift, 0.0).reshape(H, W, CP)


def residual_forward(x_nchw, params):
    """x_nchw: (N, Cin, H, W) float32; returns (N, Cout, H, W).  same_shape=True."""
    w1, b1, w2, b2, gamma, beta = params     # w: (3,3,I,O) HWIO; vectors: (C,)
    N, Cin, H, W = x_nchw.shape
    Cout = w2.shape[-1]
    assert Cin == Cout, "same_shape=True requires in_channels == out_channels"
    # TODO(synk): same_shape=False branch (strided conv1 + 1x1 conv3 skip) not implemented.

    CP = ((max(Cin, Cout) + LANES - 1) // LANES) * LANES        # lane-dense channel pad

    # ---- layout prep (glue): NCHW -> NHWC, spatial pad 1, channel pad to CP ----
    x = jnp.transpose(x_nchw, (0, 2, 3, 1))
    xp = jnp.pad(x, ((0, 0), (1, 1), (1, 1), (0, CP - Cin)))

    def pack_w(w):                      # (3,3,I,O) HWIO -> (9*CP, CP) bf16, zero-padded
        i, o = w.shape[2], w.shape[3]
        wf = jnp.zeros((9, CP, CP), jnp.float32)
        wf = wf.at[:, :i, :o].set(w.reshape(9, i, o))
        return wf.reshape(9 * CP, CP).astype(jnp.bfloat16)

    def pack2(a, b):                    # two (C,) vectors -> one (2, CP) f32 operand
        pad = lambda v: jnp.pad(v, (0, CP - v.shape[0]))
        return jnp.stack([pad(a), pad(b)], axis=0)

    w1p, w2p = pack_w(w1), pack_w(w2)
    bias = pack2(b1, b2)
    gb = pack2(gamma, beta)

    # -------- pass 1: conv1 + ReLU + conv2 + skip, per-batch-tile BN partials --------
    flops1 = int(2 * 2 * N * H * W * (9 * CP) * CP)
    bytes1 = int(xp.size * 4 + w1p.size * 2 + w2p.size * 2 + bias.size * 4
                 + N * H * W * CP * 4 + N * 2 * CP * 4)
    y, stats = pl.pallas_call(
        conv_residual_kernel,
        out_shape=(jax.ShapeDtypeStruct((N, H, W, CP), jnp.float32),
                   jax.ShapeDtypeStruct((N, 2, CP), jnp.float32)),
        grid_spec=pltpu.PrefetchScalarGridSpec(
            num_scalar_prefetch=0,
            grid=(N,),
            in_specs=[
                pl.BlockSpec((1, H + 2, W + 2, CP), lambda n: (n, 0, 0, 0)),
                pl.BlockSpec((9 * CP, CP), lambda n: (0, 0)),
                pl.BlockSpec((9 * CP, CP), lambda n: (0, 0)),
                pl.BlockSpec((2, CP), lambda n: (0, 0)),
            ],
            out_specs=[
                pl.BlockSpec((1, H, W, CP), lambda n: (n, 0, 0, 0)),
                pl.BlockSpec((1, 2, CP), lambda n: (n, 0, 0)),
            ],
            scratch_shapes=[pltpu.VMEM((H + 2, W + 2, CP), jnp.bfloat16)],
        ),
        compiler_params=pltpu.CompilerParams(
            dimension_semantics=("parallel",),            # shard batch tiles across TCs (v7x)
            vmem_limit_bytes=48 * 1024 * 1024),           # explicit budget, fits v7x 64 MiB
        cost_estimate=pl.CostEstimate(flops=flops1, transcendentals=0,
                                      bytes_accessed=bytes1),
    )(xp, w1p, w2p, bias)

    # -------- pass 2: finalize BN stats, normalize + affine + ReLU --------
    flops2 = int(6 * N * H * W * CP)
    bytes2 = int(2 * N * H * W * CP * 4 + stats.size * 4 + gb.size * 4)
    kernel2 = functools.partial(bn_relu_kernel, inv_count=1.0 / float(N * H * W))
    out_nhwc = pl.pallas_call(
        kernel2,
        out_shape=jax.ShapeDtypeStruct((N, H, W, CP), jnp.float32),
        grid_spec=pltpu.PrefetchScalarGridSpec(
            num_scalar_prefetch=0,
            grid=(N,),
            in_specs=[
                pl.BlockSpec((N, 2, CP), lambda n: (0, 0, 0)),
                pl.BlockSpec((2, CP), lambda n: (0, 0)),
                pl.BlockSpec((1, H, W, CP), lambda n: (n, 0, 0, 0)),
            ],
            out_specs=pl.BlockSpec((1, H, W, CP), lambda n: (n, 0, 0, 0)),
        ),
        compiler_params=pltpu.CompilerParams(
            dimension_semantics=("parallel",),
            vmem_limit_bytes=48 * 1024 * 1024),
        cost_estimate=pl.CostEstimate(flops=flops2, transcendentals=2 * CP,
                                      bytes_accessed=bytes2),
    )(stats, gb, y)

    out = out_nhwc[..., :Cout]                            # drop channel padding
    return jnp.transpose(out, (0, 3, 1, 2))               # NHWC -> NCHW


def residual_reference(x_nchw, params):
    """Pure-JAX reference mirroring the PyTorch forward (training-mode BN)."""
    w1, b1, w2, b2, gamma, beta = params

    def conv(x, w, b):
        y = jax.lax.conv_general_dilated(
            x, w, window_strides=(1, 1), padding='SAME',
            dimension_numbers=('NCHW', 'HWIO', 'NCHW'))
        return y + b[None, :, None, None]

    out = jnp.maximum(conv(x_nchw, w1, b1), 0.0)
    out = conv(out, w2, b2)
    y = out + x_nchw
    mean = jnp.mean(y, axis=(0, 2, 3), keepdims=True)
    var = jnp.mean((y - mean) ** 2, axis=(0, 2, 3), keepdims=True)
    yn = (y - mean) * jax.lax.rsqrt(var + EPS)
    return jnp.maximum(gamma[None, :, None, None] * yn + beta[None, :, None, None], 0.0)


def init_params(key, cin, cout):
    k1, k2, k3, k4 = jax.random.split(key, 4)
    w1 = 0.1 * jax.random.normal(k1, (3, 3, cin, cin), jnp.float32)
    b1 = 0.1 * jax.random.normal(k2, (cin,), jnp.float32)
    w2 = 0.1 * jax.random.normal(k3, (3, 3, cin, cout), jnp.float32)
    b2 = 0.1 * jax.random.normal(k4, (cout,), jnp.float32)
    gamma = jnp.ones((cout,), jnp.float32)    # BatchNorm2d init: weight=1
    beta = jnp.zeros((cout,), jnp.float32)    # BatchNorm2d init: bias=0
    return (w1, b1, w2, b2, gamma, beta)


if __name__ == "__main__":
    # same_shape=True => in_channels == out_channels, stride 1
    N, C, H, W = 2, 4, 16, 16
    key = jax.random.PRNGKey(0)
    kx, kp = jax.random.split(key)
    x = jax.random.normal(kx, (N, C, H, W), jnp.float32)
    params = init_params(kp, C, C)

    out = jax.block_until_ready(residual_forward(x, params))
    ref = residual_reference(x, params)

    assert out.shape == ref.shape == (N, C, H, W)
    # bf16 MXU operands (f32 accumulation) -> slightly looser tolerance than pure f32.
    max_err = float(jnp.max(jnp.abs(out - ref)))
    assert jnp.allclose(out, ref, atol=2e-2, rtol=2e-2), max_err

    print("KERNEL_OK")
</pallas_src>

<mosaic_0001>
module attributes {stable_mosaic.version = 11 : i64} {
  func.func @conv_residual_kernel(%arg0: i32, %arg1: memref<1x18x18x128xf32, #tpu.memory_space<vmem>>, %arg2: memref<1152x128xbf16, #tpu.memory_space<vmem>>, %arg3: memref<1152x128xbf16, #tpu.memory_space<vmem>>, %arg4: memref<2x128xf32, #tpu.memory_space<vmem>>, %arg5: memref<1x16x16x128xf32, #tpu.memory_space<vmem>>, %arg6: memref<1x2x128xf32, #tpu.memory_space<vmem>>, %arg7: memref<18x18x128xbf16, #tpu.memory_space<vmem>>) attributes {dimension_semantics = [#tpu.dimension_semantics<parallel>], iteration_bounds = array<i64: 2>, scalar_prefetch = 0 : i64, scratch_operands = 1 : i64, tpu.core_type = #tpu.core_type<tc>, window_params = [{transform_indices = @transform_0, window_bounds = array<i64: 1, 18, 18, 128>}, {pipeline_mode = #tpu.pipeline_mode<synchronous>, transform_indices = @transform_1, window_bounds = array<i64: 1152, 128>}, {pipeline_mode = #tpu.pipeline_mode<synchronous>, transform_indices = @transform_2, window_bounds = array<i64: 1152, 128>}, {pipeline_mode = #tpu.pipeline_mode<synchronous>, transform_indices = @transform_3, window_bounds = array<i64: 2, 128>}, {transform_indices = @transform_4, window_bounds = array<i64: 1, 16, 16, 128>}, {transform_indices = @transform_5, window_bounds = array<i64: 1, 2, 128>}]} {
    %c0 = arith.constant 0 : index
    %c0_0 = arith.constant 0 : index
    %c0_1 = arith.constant 0 : index
    %c0_2 = arith.constant 0 : index
    %0 = vector.load %arg1[%c0, %c0_0, %c0_1, %c0_2] : memref<1x18x18x128xf32, #tpu.memory_space<vmem>>, vector<1x18x18x128xf32>
    %1 = vector.shape_cast %0 : vector<1x18x18x128xf32> to vector<18x18x128xf32>
    %2 = vector.extract_strided_slice %1 {offsets = [0, 0, 0], sizes = [16, 16, 128], strides = [1, 1, 1]} : vector<18x18x128xf32> to vector<16x16x128xf32>
    %3 = vector.shape_cast %2 : vector<16x16x128xf32> to vector<256x128xf32>
    %4 = vector.extract_strided_slice %1 {offsets = [0, 1, 0], sizes = [16, 16, 128], strides = [1, 1, 1]} : vector<18x18x128xf32> to vector<16x16x128xf32>
    %5 = vector.shape_cast %4 : vector<16x16x128xf32> to vector<256x128xf32>
    %6 = vector.extract_strided_slice %1 {offsets = [0, 2, 0], sizes = [16, 16, 128], strides = [1, 1, 1]} : vector<18x18x128xf32> to vector<16x16x128xf32>
    %7 = vector.shape_cast %6 : vector<16x16x128xf32> to vector<256x128xf32>
    %8 = vector.extract_strided_slice %1 {offsets = [1, 0, 0], sizes = [16, 16, 128], strides = [1, 1, 1]} : vector<18x18x128xf32> to vector<16x16x128xf32>
    %9 = vector.shape_cast %8 : vector<16x16x128xf32> to vector<256x128xf32>
    %10 = vector.extract_strided_slice %1 {offsets = [1, 1, 0], sizes = [16, 16, 128], strides = [1, 1, 1]} : vector<18x18x128xf32> to vector<16x16x128xf32>
    %11 = vector.shape_cast %10 : vector<16x16x128xf32> to vector<256x128xf32>
    %12 = vector.extract_strided_slice %1 {offsets = [1, 2, 0], sizes = [16, 16, 128], strides = [1, 1, 1]} : vector<18x18x128xf32> to vector<16x16x128xf32>
    %13 = vector.shape_cast %12 : vector<16x16x128xf32> to vector<256x128xf32>
    %14 = vector.extract_strided_slice %1 {offsets = [2, 0, 0], sizes = [16, 16, 128], strides = [1, 1, 1]} : vector<18x18x128xf32> to vector<16x16x128xf32>
    %15 = vector.shape_cast %14 : vector<16x16x128xf32> to vector<256x128xf32>
    %16 = vector.extract_strided_slice %1 {offsets = [2, 1, 0], sizes = [16, 16, 128], strides = [1, 1, 1]} : vector<18x18x128xf32> to vector<16x16x128xf32>
    %17 = vector.shape_cast %16 : vector<16x16x128xf32> to vector<256x128xf32>
    %18 = vector.extract_strided_slice %1 {offsets = [2, 2, 0], sizes = [16, 16, 128], strides = [1, 1, 1]} : vector<18x18x128xf32> to vector<16x16x128xf32>
    %19 = vector.shape_cast %18 : vector<16x16x128xf32> to vector<256x128xf32>
    %20 = arith.truncf %3 : vector<256x128xf32> to vector<256x128xbf16>
    %21 = arith.truncf %5 : vector<256x128xf32> to vector<256x128xbf16>
    %22 = arith.truncf %7 : vector<256x128xf32> to vector<256x128xbf16>
    %23 = arith.truncf %9 : vector<256x128xf32> to vector<256x128xbf16>
    %24 = arith.truncf %11 : vector<256x128xf32> to vector<256x128xbf16>
    %25 = arith.truncf %13 : vector<256x128xf32> to vector<256x128xbf16>
    %26 = arith.truncf %15 : vector<256x128xf32> to vector<256x128xbf16>
    %27 = arith.truncf %17 : vector<256x128xf32> to vector<256x128xbf16>
    %28 = arith.truncf %19 : vector<256x128xf32> to vector<256x128xbf16>
    %29 = tpu.concatenate %20, %21, %22, %23, %24, %25, %26, %27, %28 in 1 : vector<256x128xbf16>, vector<256x128xbf16>, vector<256x128xbf16>, vector<256x128xbf16>, vector<256x128xbf16>, vector<256x128xbf16>, vector<256x128xbf16>, vector<256x128xbf16>, vector<256x128xbf16> -> vector<256x1152xbf16>
    %c0_3 = arith.constant 0 : index
    %c0_4 = arith.constant 0 : index
    %30 = vector.load %arg2[%c0_3, %c0_4] : memref<1152x128xbf16, #tpu.memory_space<vmem>>, vector<1152x128xbf16>
    %cst = arith.constant dense<0.000000e+00> : vector<256x128xf32>
    %31 = tpu.matmul %29, %30, %cst {dimension_numbers = #tpu.dot_dimension_numbers<[1], [0], [0], [1], [0, 0, 1, 1], [], []>} : vector<256x1152xbf16>, vector<1152x128xbf16>, vector<256x128xf32> -> vector<256x128xf32>
    %c0_5 = arith.constant 0 : index
    %c0_6 = arith.constant 0 : index
    %32 = vector.load %arg4[%c0_5, %c0_6] : memref<2x128xf32, #tpu.memory_space<vmem>>, vector<1x128xf32>
    %33 = vector.broadcast %32 : vector<1x128xf32> to vector<256x128xf32>
    %34 = arith.addf %31, %33 : vector<256x128xf32>
    %cst_7 = arith.constant 0.000000e+00 : f32
    %35 = vector.broadcast %cst_7 : f32 to vector<256x128xf32>
    %36 = arith.maximumf %34, %35 : vector<256x128xf32>
    %cst_8 = arith.constant 0.000000e+00 : bf16
    %37 = vector.broadcast %cst_8 : bf16 to vector<1x18x128xbf16>
    %cst_9 = arith.constant 0.000000e+00 : bf16
    %38 = vector.broadcast %cst_9 : bf16 to vector<18x1x128xbf16>
    %c0_10 = arith.constant 0 : index
    %c0_11 = arith.constant 0 : index
    %c0_12 = arith.constant 0 : index
    %39 = vector.load %arg7[%c0_10, %c0_11, %c0_12] : memref<18x18x128xbf16, #tpu.memory_space<vmem>>, vector<1x18x128xbf16>
    tpu.vector_store %arg7[%c0_10, %c0_11, %c0_12], %37 {strides = array<i32>} : memref<18x18x128xbf16, #tpu.memory_space<vmem>>, vector<1x18x128xbf16>,
    %c17 = arith.constant 17 : index
    %c0_13 = arith.constant 0 : index
    %c0_14 = arith.constant 0 : index
    %40 = vector.load %arg7[%c17, %c0_13, %c0_14] : memref<18x18x128xbf16, #tpu.memory_space<vmem>>, vector<1x18x128xbf16>
    tpu.vector_store %arg7[%c17, %c0_13, %c0_14], %37 {strides = array<i32>} : memref<18x18x128xbf16, #tpu.memory_space<vmem>>, vector<1x18x128xbf16>,
    %c0_15 = arith.constant 0 : index
    %c0_16 = arith.constant 0 : index
    %c0_17 = arith.constant 0 : index
    %41 = vector.load %arg7[%c0_15, %c0_16, %c0_17] : memref<18x18x128xbf16, #tpu.memory_space<vmem>>, vector<18x1x128xbf16>
    tpu.vector_store %arg7[%c0_15, %c0_16, %c0_17], %38 {strides = array<i32>} : memref<18x18x128xbf16, #tpu.memory_space<vmem>>, vector<18x1x128xbf16>,
    %c0_18 = arith.constant 0 : index
    %c17_19 = arith.constant 17 : index
    %c0_20 = arith.constant 0 : index
    %42 = vector.load %arg7[%c0_18, %c17_19, %c0_20] : memref<18x18x128xbf16, #tpu.memory_space<vmem>>, vector<18x1x128xbf16>
    tpu.vector_store %arg7[%c0_18, %c17_19, %c0_20], %38 {strides = array<i32>} : memref<18x18x128xbf16, #tpu.memory_space<vmem>>, vector<18x1x128xbf16>,
    %43 = arith.truncf %36 : vector<256x128xf32> to vector<256x128xbf16>
    %44 = vector.shape_cast %43 : vector<256x128xbf16> to vector<16x16x128xbf16>
    %c1 = arith.constant 1 : index
    %c1_21 = arith.constant 1 : index
    %c0_22 = arith.constant 0 : index
    %45 = vector.load %arg7[%c1, %c1_21, %c0_22] : memref<18x18x128xbf16, #tpu.memory_space<vmem>>, vector<16x16x128xbf16>
    tpu.vector_store %arg7[%c1, %c1_21, %c0_22], %44 {strides = array<i32>} : memref<18x18x128xbf16, #tpu.memory_space<vmem>>, vector<16x16x128xbf16>,
    %c0_23 = arith.constant 0 : index
    %c0_24 = arith.constant 0 : index
    %c0_25 = arith.constant 0 : index
    %46 = vector.load %arg7[%c0_23, %c0_24, %c0_25] : memref<18x18x128xbf16, #tpu.memory_space<vmem>>, vector<18x18x128xbf16>
    %47 = vector.extract_strided_slice %46 {offsets = [0, 0, 0], sizes = [16, 16, 128], strides = [1, 1, 1]} : vector<18x18x128xbf16> to vector<16x16x128xbf16>
    %48 = vector.shape_cast %47 : vector<16x16x128xbf16> to vector<256x128xbf16>
    %49 = vector.extract_strided_slice %46 {offsets = [0, 1, 0], sizes = [16, 16, 128], strides = [1, 1, 1]} : vector<18x18x128xbf16> to vector<16x16x128xbf16>
    %50 = vector.shape_cast %49 : vector<16x16x128xbf16> to vector<256x128xbf16>
    %51 = vector.extract_strided_slice %46 {offsets = [0, 2, 0], sizes = [16, 16, 128], strides = [1, 1, 1]} : vector<18x18x128xbf16> to vector<16x16x128xbf16>
    %52 = vector.shape_cast %51 : vector<16x16x128xbf16> to vector<256x128xbf16>
    %53 = vector.extract_strided_slice %46 {offsets = [1, 0, 0], sizes = [16, 16, 128], strides = [1, 1, 1]} : vector<18x18x128xbf16> to vector<16x16x128xbf16>
    %54 = vector.shape_cast %53 : vector<16x16x128xbf16> to vector<256x128xbf16>
    %55 = vector.extract_strided_slice %46 {offsets = [1, 1, 0], sizes = [16, 16, 128], strides = [1, 1, 1]} : vector<18x18x128xbf16> to vector<16x16x128xbf16>
    %56 = vector.shape_cast %55 : vector<16x16x128xbf16> to vector<256x128xbf16>
    %57 = vector.extract_strided_slice %46 {offsets = [1, 2, 0], sizes = [16, 16, 128], strides = [1, 1, 1]} : vector<18x18x128xbf16> to vector<16x16x128xbf16>
    %58 = vector.shape_cast %57 : vector<16x16x128xbf16> to vector<256x128xbf16>
    %59 = vector.extract_strided_slice %46 {offsets = [2, 0, 0], sizes = [16, 16, 128], strides = [1, 1, 1]} : vector<18x18x128xbf16> to vector<16x16x128xbf16>
    %60 = vector.shape_cast %59 : vector<16x16x128xbf16> to vector<256x128xbf16>
    %61 = vector.extract_strided_slice %46 {offsets = [2, 1, 0], sizes = [16, 16, 128], strides = [1, 1, 1]} : vector<18x18x128xbf16> to vector<16x16x128xbf16>
    %62 = vector.shape_cast %61 : vector<16x16x128xbf16> to vector<256x128xbf16>
    %63 = vector.extract_strided_slice %46 {offsets = [2, 2, 0], sizes = [16, 16, 128], strides = [1, 1, 1]} : vector<18x18x128xbf16> to vector<16x16x128xbf16>
    %64 = vector.shape_cast %63 : vector<16x16x128xbf16> to vector<256x128xbf16>
    %65 = tpu.concatenate %48, %50, %52, %54, %56, %58, %60, %62, %64 in 1 : vector<256x128xbf16>, vector<256x128xbf16>, vector<256x128xbf16>, vector<256x128xbf16>, vector<256x128xbf16>, vector<256x128xbf16>, vector<256x128xbf16>, vector<256x128xbf16>, vector<256x128xbf16> -> vector<256x1152xbf16>
    %c0_26 = arith.constant 0 : index
    %c0_27 = arith.constant 0 : index
    %66 = vector.load %arg3[%c0_26, %c0_27] : memref<1152x128xbf16, #tpu.memory_space<vmem>>, vector<1152x128xbf16>
    %cst_28 = arith.constant dense<0.000000e+00> : vector<256x128xf32>
    %67 = tpu.matmul %65, %66, %cst_28 {dimension_numbers = #tpu.dot_dimension_numbers<[1], [0], [0], [1], [0, 0, 1, 1], [], []>} : vector<256x1152xbf16>, vector<1152x128xbf16>, vector<256x128xf32> -> vector<256x128xf32>
    %c1_29 = arith.constant 1 : index
    %c0_30 = arith.constant 0 : index
    %68 = vector.load %arg4[%c1_29, %c0_30] : memref<2x128xf32, #tpu.memory_space<vmem>>, vector<1x128xf32>
    %69 = vector.broadcast %68 : vector<1x128xf32> to vector<256x128xf32>
    %70 = arith.addf %67, %69 : vector<256x128xf32>
    %71 = arith.addf %70, %11 : vector<256x128xf32>
    %72 = vector.shape_cast %71 : vector<256x128xf32> to vector<16x16x128xf32>
    %c0_31 = arith.constant 0 : index
    %c0_32 = arith.constant 0 : index
    %c0_33 = arith.constant 0 : index
    %c0_34 = arith.constant 0 : index
    %73 = vector.load %arg5[%c0_31, %c0_32, %c0_33, %c0_34] : memref<1x16x16x128xf32, #tpu.memory_space<vmem>>, vector<1x16x16x128xf32>
    %74 = vector.shape_cast %73 : vector<1x16x16x128xf32> to vector<16x16x128xf32>
    %75 = vector.shape_cast %72 : vector<16x16x128xf32> to vector<1x16x16x128xf32>
    tpu.vector_store %arg5[%c0_31, %c0_32, %c0_33, %c0_34], %75 {strides = array<i32>} : memref<1x16x16x128xf32, #tpu.memory_space<vmem>>, vector<1x16x16x128xf32>,
    %cst_35 = arith.constant dense<0.000000e+00> : vector<128xf32>
    %76 = vector.multi_reduction <add>, %71, %cst_35 [0] : vector<256x128xf32> to vector<128xf32>
    %77 = vector.shape_cast %76 : vector<128xf32> to vector<1x128xf32>
    %c0_36 = arith.constant 0 : index
    %c0_37 = arith.constant 0 : index
    %c0_38 = arith.constant 0 : index
    %78 = vector.load %arg6[%c0_36, %c0_37, %c0_38] : memref<1x2x128xf32, #tpu.memory_space<vmem>>, vector<1x1x128xf32>
    %79 = vector.shape_cast %78 : vector<1x1x128xf32> to vector<1x128xf32>
    %80 = vector.shape_cast %77 : vector<1x128xf32> to vector<1x1x128xf32>
    tpu.vector_store %arg6[%c0_36, %c0_37, %c0_38], %80 {strides = array<i32>} : memref<1x2x128xf32, #tpu.memory_space<vmem>>, vector<1x1x128xf32>,
    %81 = arith.mulf %71, %71 : vector<256x128xf32>
    %cst_39 = arith.constant dense<0.000000e+00> : vector<128xf32>
    %82 = vector.multi_reduction <add>, %81, %cst_39 [0] : vector<256x128xf32> to vector<128xf32>
    %83 = vector.shape_cast %82 : vector<128xf32> to vector<1x128xf32>
    %c0_40 = arith.constant 0 : index
    %c1_41 = arith.constant 1 : index
    %c0_42 = arith.constant 0 : index
    %84 = vector.load %arg6[%c0_40, %c1_41, %c0_42] : memref<1x2x128xf32, #tpu.memory_space<vmem>>, vector<1x1x128xf32>
    %85 = vector.shape_cast %84 : vector<1x1x128xf32> to vector<1x128xf32>
    %86 = vector.shape_cast %83 : vector<1x128xf32> to vector<1x1x128xf32>
    tpu.vector_store %arg6[%c0_40, %c1_41, %c0_42], %86 {strides = array<i32>} : memref<1x2x128xf32, #tpu.memory_space<vmem>>, vector<1x1x128xf32>,
    return
  }
  func.func @transform_0(%arg0: i32) -> (i32, i32, i32, i32) {
    %c0_i32 = arith.constant 0 : i32
    %c0_i32_0 = arith.constant 0 : i32
    %c0_i32_1 = arith.constant 0 : i32
    %c0_i32_2 = arith.constant 0 : i32
    return %arg0, %c0_i32, %c0_i32_0, %c0_i32_1 : i32, i32, i32, i32
  }
  func.func @transform_1(%arg0: i32) -> (i32, i32) {
    %c0_i32 = arith.constant 0 : i32
    %c0_i32_0 = arith.constant 0 : i32
    %c0_i32_1 = arith.constant 0 : i32
    return %c0_i32, %c0_i32_0 : i32, i32
  }
  func.func @transform_2(%arg0: i32) -> (i32, i32) {
    %c0_i32 = arith.constant 0 : i32
    %c0_i32_0 = arith.constant 0 : i32
    %c0_i32_1 = arith.constant 0 : i32
    return %c0_i32, %c0_i32_0 : i32, i32
  }
  func.func @transform_3(%arg0: i32) -> (i32, i32) {
    %c0_i32 = arith.constant 0 : i32
    %c0_i32_0 = arith.constant 0 : i32
    %c0_i32_1 = arith.constant 0 : i32
    return %c0_i32, %c0_i32_0 : i32, i32
  }
  func.func @transform_4(%arg0: i32) -> (i32, i32, i32, i32) {
    %c0_i32 = arith.constant 0 : i32
    %c0_i32_0 = arith.constant 0 : i32
    %c0_i32_1 = arith.constant 0 : i32
    %c0_i32_2 = arith.constant 0 : i32
    return %arg0, %c0_i32, %c0_i32_0, %c0_i32_1 : i32, i32, i32, i32
  }
  func.func @transform_5(%arg0: i32) -> (i32, i32, i32) {
    %c0_i32 = arith.constant 0 : i32
    %c0_i32_0 = arith.constant 0 : i32
    %c0_i32_1 = arith.constant 0 : i32
    return %arg0, %c0_i32, %c0_i32_0 : i32, i32, i32
  }
}

</mosaic_0001>

<llo_original>
// kernel: tpu_custom_call.1
$region0: #{tpu_custom_call.1}
  #allocation0 [shape = 'u32[]', space=smem, size = 0x4, offset = 0x4, fixed_abs, tag = 'smem constant byte address 0x4 - core index']
  #allocation1 [shape = 'u32[72,128]{1,0:T(1,128)}', space=vmem, size = 0x9000, scoped, tag = 'internal scratch']
  #allocation2 [shape = 'bf16[18,18,128]{2,1,0:T(8,128)(2,1)}', space=vmem, size = 0x1b000, scoped, tag = 'scratch operand']
  %s0 = inlined_call_operand.vmem [shape: f32[2,18,18,128], index: 0, kind: input, shape index: {}]
  %s1 = inlined_call_operand.vmem [shape: bf16[1152,128], index: 1, kind: input, shape index: {}]
  %s2 = inlined_call_operand.vmem [shape: bf16[1152,128], index: 2, kind: input, shape index: {}]
  %s3 = inlined_call_operand.vmem [shape: f32[2,128], index: 3, kind: input, shape index: {}]
  %s4 = inlined_call_operand.hbm [shape: f32[2,16,16,128], index: 4, kind: output, shape index: {0}]
  %s5 = inlined_call_operand.hbm [shape: f32[2,2,128], index: 5, kind: output, shape index: {1}]
  %6 = xla_tuple %s4, %s5
  %s7 = sld [smem:[#allocation0]]
  $region57: #{tpu_custom_call.1} parent=0
    _
  %s9 = ssub.s32 1, %s7
  %s10 = scalar_select 0, %s9, %s7
  $region1: #{tpu_custom_call.1} parent=0
    #allocation3 [shape = 'u8[262144]{0}', space=vmem, size = 0x40000, scoped, tag = 'output window, operand 0']
    #allocation4 [shape = 's32[2]{0}', space=sflag, size = 0x8, scoped, tag = 'scoped memory for tpu_custom_call.1']
    #allocation5 [shape = 'u8[2048]{0}', space=vmem, size = 0x800, scoped, tag = 'output window, operand 1']
    #allocation6 [shape = 's32[2]{0}', space=sflag, size = 0x8, scoped, tag = 'scoped memory for tpu_custom_call.1']
    %11 = vsyncpa [#allocation4], 0
    %s12 = scalar_lea.sflag [#allocation4], 1
    %13 = vsyncpa %s12, 0
    %14 = vsyncpa [#allocation6], 0
    %s15 = scalar_lea.sflag [#allocation6], 1
    %16 = vsyncpa %s15, 0
    loop: start=0, step=1, limit=4
    $region2: #{tpu_custom_call.1} parent=1 // loop_pre_header
      _
    $region3: #{tpu_custom_call.1} parent=1 // loop_header
      %s18 = sphi 0, %s22
      %p19 = scmp.ge.s32.totalorder %s18, 4
      %s28 = sphi 0, %s30
      %s31 = sphi 0, %s28
      %s32 = sphi 0, %s31
      %s48 = sphi 0, %s32
      %s52 = sphi 0, %s52
      %s54 = sphi 0, %s52
      %s55 = sphi 0, %s54
      %s69 = sphi 0, %s55
      %s73 = sphi 0, %s73
      %s75 = sphi 0, %s73
      %s76 = sphi 0, %s75
      %s90 = sphi 0, %s76
      %s94 = sphi 0, %s94
      %s96 = sphi 0, %s94
      %s97 = sphi 0, %s96
      %s111 = sphi 0, %s97
      %s117 = sphi 0, %s119
      %s120 = sphi 0, %s117
      %s121 = sphi 0, %s120
      %s137 = sphi 0, %s121
      %s143 = sphi 0, %s145
      %s146 = sphi 0, %s143
      %s147 = sphi 0, %s146
      %s163 = sphi 0, %s147
    $region4: #{tpu_custom_call.1} parent=1 // loop_header_branch
      %21 = sbr.rel (%p19) target = $region8
    $region5: #{tpu_custom_call.1} parent=1 // loop_body
      %s23 = ssub.s32 %s18, 1
      %s24 = ssub.s32 %s18, 2
      %s25 = sadd.s32 %s18, 1
      %s26 = ssub.s32 %s18, %s25
      %p27 = scmp.eq.s32.totalorder %s26, 0
      %s29 = sadd.s32 %s28, 1
      %s30 = scalar_select %p27, %s28, %s29
      %p33 = pneg %p27
      %p34 = scmp.eq.s32.totalorder %s18, 1
      %p35 = por %p33, %p34
      %p36 = scmp.ne.s32.totalorder %s28, %s31
      %p37 = scmp.eq.s32.totalorder %s18, 0
      %p38 = por %p36, %p37
      %p39 = scmp.ne.s32.totalorder %s28, %s31
      %p40 = scmp.eq.s32.totalorder %s23, 1
      %p41 = por %p39, %p40
      %p42 = scmp.ne.s32.totalorder %s31, %s32
      %p43 = scmp.eq.s32.totalorder %s23, 0
      %p44 = por %p42, %p43
      %p45 = scmp.ne.s32.totalorder %s31, %s32
      %p46 = scmp.eq.s32.totalorder %s24, 1
      %p47 = por %p45, %p46
      %p49 = scmp.ne.s32.totalorder %s32, %s48
      %p50 = scmp.eq.s32.totalorder %s24, 0
      %p51 = por %p49, %p50
      %s53 = sadd.s32 %s52, 1
      %p56 = scmp.eq.s32.totalorder %s18, 1
      %p57 = scmp.ne.s32.totalorder %s52, %s54
      %p58 = scmp.eq.s32.totalorder %s18, 0
      %p59 = por %p57, %p58
      %p60 = scmp.ne.s32.totalorder %s52, %s54
      %p61 = scmp.eq.s32.totalorder %s23, 1
      %p62 = por %p60, %p61
      %p63 = scmp.ne.s32.totalorder %s54, %s55
      %p64 = scmp.eq.s32.totalorder %s23, 0
      %p65 = por %p63, %p64
      %p66 = scmp.ne.s32.totalorder %s54, %s55
      %p67 = scmp.eq.s32.totalorder %s24, 1
      %p68 = por %p66, %p67
      %p70 = scmp.ne.s32.totalorder %s55, %s69
      %p71 = scmp.eq.s32.totalorder %s24, 0
      %p72 = por %p70, %p71
      %s74 = sadd.s32 %s73, 1
      %p77 = scmp.eq.s32.totalorder %s18, 1
      %p78 = scmp.ne.s32.totalorder %s73, %s75
      %p79 = scmp.eq.s32.totalorder %s18, 0
      %p80 = por %p78, %p79
      %p81 = scmp.ne.s32.totalorder %s73, %s75
      %p82 = scmp.eq.s32.totalorder %s23, 1
      %p83 = por %p81, %p82
      %p84 = scmp.ne.s32.totalorder %s75, %s76
      %p85 = scmp.eq.s32.totalorder %s23, 0
      %p86 = por %p84, %p85
      %p87 = scmp.ne.s32.totalorder %s75, %s76
      %p88 = scmp.eq.s32.totalorder %s24, 1
      %p89 = por %p87, %p88
      %p91 = scmp.ne.s32.totalorder %s76, %s90
      %p92 = scmp.eq.s32.totalorder %s24, 0
      %p93 = por %p91, %p92
      %s95 = sadd.s32 %s94, 1
      %p98 = scmp.eq.s32.totalorder %s18, 1
      %p99 = scmp.ne.s32.totalorder %s94, %s96
      %p100 = scmp.eq.s32.totalorder %s18, 0
      %p101 = por %p99, %p100
      %p102 = scmp.ne.s32.totalorder %s94, %s96
      %p103 = scmp.eq.s32.totalorder %s23, 1
      %p104 = por %p102, %p103
      %p105 = scmp.ne.s32.totalorder %s96, %s97
      %p106 = scmp.eq.s32.totalorder %s23, 0
      %p107 = por %p105, %p106
      %p108 = scmp.ne.s32.totalorder %s96, %s97
      %p109 = scmp.eq.s32.totalorder %s24, 1
      %p110 = por %p108, %p109
      %p112 = scmp.ne.s32.totalorder %s97, %s111
      %p113 = scmp.eq.s32.totalorder %s24, 0
      %p114 = por %p112, %p113
      %s115 = ssub.s32 %s18, %s25
      %p116 = scmp.eq.s32.totalorder %s115, 0
      %s118 = sadd.s32 %s117, 1
      %s119 = scalar_select %p116, %s117, %s118
      %p122 = pneg %p116
      %p123 = scmp.eq.s32.totalorder %s18, 1
      %p124 = por %p122, %p123
      %p125 = scmp.ne.s32.totalorder %s117, %s120
      %p126 = scmp.eq.s32.totalorder %s18, 0
      %p127 = por %p125, %p126
      %p128 = scmp.ne.s32.totalorder %s117, %s120
      %p129 = scmp.eq.s32.totalorder %s23, 1
      %p130 = por %p128, %p129
      %p131 = scmp.ne.s32.totalorder %s120, %s121
      %p132 = scmp.eq.s32.totalorder %s23, 0
      %p133 = por %p131, %p132
      %p134 = scmp.ne.s32.totalorder %s120, %s121
      %p135 = scmp.eq.s32.totalorder %s24, 1
      %p136 = por %p134, %p135
      %p138 = scmp.ne.s32.totalorder %s121, %s137
      %p139 = scmp.eq.s32.totalorder %s24, 0
      %p140 = por %p138, %p139
      %s141 = ssub.s32 %s18, %s25
      %p142 = scmp.eq.s32.totalorder %s141, 0
      %s144 = sadd.s32 %s143, 1
      %s145 = scalar_select %p142, %s143, %s144
      %p148 = pneg %p142
      %p149 = scmp.eq.s32.totalorder %s18, 1
      %p150 = por %p148, %p149
      %p151 = scmp.ne.s32.totalorder %s143, %s146
      %p152 = scmp.eq.s32.totalorder %s18, 0
      %p153 = por %p151, %p152
      %p154 = scmp.ne.s32.totalorder %s143, %s146
      %p155 = scmp.eq.s32.totalorder %s23, 1
      %p156 = por %p154, %p155
      %p157 = scmp.ne.s32.totalorder %s146, %s147
      %p158 = scmp.eq.s32.totalorder %s23, 0
      %p159 = por %p157, %p158
      %p160 = scmp.ne.s32.totalorder %s146, %s147
      %p161 = scmp.eq.s32.totalorder %s24, 1
      %p162 = por %p160, %p161
      %p164 = scmp.ne.s32.totalorder %s147, %s163
      %p165 = scmp.eq.s32.totalorder %s24, 0
      %p166 = por %p164, %p165
      %p167 = scmp.le.s32.totalorder 1, %s18
      %p168 = scmp.lt.s32.totalorder %s18, 3
      %p169 = pnand %p167, %p168
      %p170 = pneg %p169
      // Predicated region
      $region9: #{tpu_custom_call.1} parent=5 // pred_check
        _
      $region10: #{tpu_custom_call.1} parent=5 // pred_check_branch
        %172 = sbr.rel (%p169) target = $region12
      $region11: #{tpu_custom_call.1} parent=5 // pred_region
        %s173 = ssub.s32 %s18, 1
        // Predicated region
        $region13: #{tpu_custom_call.1} parent=11 // pred_check
          %p174 = pneg %p65
        $region14: #{tpu_custom_call.1} parent=11 // pred_check_branch
          %176 = sbr.rel (%p174) target = $region16
        $region15: #{tpu_custom_call.1} parent=11 // pred_region
          _
        $region16: #{tpu_custom_call.1} parent=11 // pred_fallthru
          _
        // Predicated region
        $region17: #{tpu_custom_call.1} parent=11 // pred_check
          %p177 = pneg %p86
        $region18: #{tpu_custom_call.1} parent=11 // pred_check_branch
          %179 = sbr.rel (%p177) target = $region20
        $region19: #{tpu_custom_call.1} parent=11 // pred_region
          _
        $region20: #{tpu_custom_call.1} parent=11 // pred_fallthru
          _
        // Predicated region
        $region21: #{tpu_custom_call.1} parent=11 // pred_check
          %p180 = pneg %p107
        $region22: #{tpu_custom_call.1} parent=11 // pred_check_branch
          %182 = sbr.rel (%p180) target = $region24
        $region23: #{tpu_custom_call.1} parent=11 // pred_region
          _
        $region24: #{tpu_custom_call.1} parent=11 // pred_fallthru
          _
      $region12: #{tpu_custom_call.1} parent=5 // pred_fallthru
        _
      %p183 = scmp.lt.s32.totalorder %s18, 2
      // Predicated region
      $region25: #{tpu_custom_call.1} parent=5 // pred_check
        %p184 = pneg %p183
      $region26: #{tpu_custom_call.1} parent=5 // pred_check_branch
        %186 = sbr.rel (%p184) target = $region28
      $region27: #{tpu_custom_call.1} parent=5 // pred_region
        // Predicated region
        $region29: #{tpu_custom_call.1} parent=27 // pred_check
          %p187 = pneg %p38
        $region30: #{tpu_custom_call.1} parent=27 // pred_check_branch
          %189 = sbr.rel (%p187) target = $region32
        $region31: #{tpu_custom_call.1} parent=27 // pred_region
          %p190 = scmp.lt.s32.totalorder %s18, 1
          %s191 = scalar_select %p190, %s18, 1
          %s192 = smul.addr %s191, 54
          %s193 = smul.addr %s192, 8
          %s194 = scalar_lea.vmem %s0, %s193
        $region32: #{tpu_custom_call.1} parent=27 // pred_fallthru
          _
      $region28: #{tpu_custom_call.1} parent=5 // pred_fallthru
        _
      %p195 = scmp.le.s32.totalorder 1, %s18
      %p196 = scmp.lt.s32.totalorder %s18, 3
      %p197 = pnand %p195, %p196
      %p198 = pneg %p197
      // Predicated region
      $region33: #{tpu_custom_call.1} parent=5 // pred_check
        _
      $region34: #{tpu_custom_call.1} parent=5 // pred_check_branch
        %200 = sbr.rel (%p197) target = $region36
      $region35: #{tpu_custom_call.1} parent=5 // pred_region
        %s201 = ssub.s32 %s18, 1
        %p202 = scmp.lt.s32.totalorder %s23, 1
        %s203 = scalar_select %p202, %s23, 1
        %s204 = smul.addr %s203, 54
        %s205 = smul.addr %s204, 8
        %s206 = scalar_lea.vmem %s0, %s205
        %p207 = pneg %p44
        %p208 = pneg %p41
        %p209 = pneg %p65
        %p210 = pneg %p62
        %p211 = pneg %p86
        %p212 = pneg %p83
        %p213 = pneg %p107
        %p214 = pneg %p104
        %p215 = pneg %p133
        %p216 = pneg %p130
        %s217 = sand.u32 %s120, 1
        %s218 = scalar_lea.sflag [#allocation4], %s217
        %s219 = sand.u32 %s120, 1
        %s220 = smul.addr %s219, 256
        %s221 = scalar_lea.vmem [#allocation3], %s220
        %p222 = pneg %p159
        %p223 = pneg %p156
        %s224 = sand.u32 %s146, 1
        %s225 = scalar_lea.sflag [#allocation6], %s224
        %s226 = sand.u32 %s146, 1
        %s227 = smul.addr %s226, 2
        %s228 = scalar_lea.vmem [#allocation5], %s227
        %p229 = scmp.lt.s32.totalorder %s23, 1
        %s230 = scalar_select %p229, %s23, 1
        %s231 = smul.addr %s230, 54
        %s232 = smul.addr %s231, 8
        %s233 = scalar_lea.vmem %s0, %s232
        %v235 = vld [vmem:[%s233] sm:$0xff]
        %v236 = vld [vmem:[%s233 + $0x8] sm:$0xff]
        %v237 = vld [vmem:[%s233 + $0x10] sm:$0x3]
        %v238 = vld [vmem:[%s233 + $0x18] sm:$0xff]
        %v239 = vld [vmem:[%s233 + $0x20] sm:$0xff]
        %v240 = vld [vmem:[%s233 + $0x28] sm:$0x3]
        %v241 = vld [vmem:[%s233 + $0x30] sm:$0xff]
        %v242 = vld [vmem:[%s233 + $0x38] sm:$0xff]
        %v243 = vld [vmem:[%s233 + $0x40] sm:$0x3]
        %v244 = vld [vmem:[%s233 + $0x48] sm:$0xff]
        %v245 = vld [vmem:[%s233 + $0x50] sm:$0xff]
        %v246 = vld [vmem:[%s233 + $0x58] sm:$0x3]
        %v247 = vld [vmem:[%s233 + $0x60] sm:$0xff]
        %v248 = vld [vmem:[%s233 + $0x68] sm:$0xff]
        %v249 = vld [vmem:[%s233 + $0x70] sm:$0x3]
        %v250 = vld [vmem:[%s233 + $0x78] sm:$0xff]
        %v251 = vld [vmem:[%s233 + $0x80] sm:$0xff]
        %v252 = vld [vmem:[%s233 + $0x88] sm:$0x3]
        %v253 = vld [vmem:[%s233 + $0x90] sm:$0xff]
        %v254 = vld [vmem:[%s233 + $0x98] sm:$0xff]
        %v255 = vld [vmem:[%s233 + $0xa0] sm:$0x3]
        %v256 = vld [vmem:[%s233 + $0xa8] sm:$0xff]
        %v257 = vld [vmem:[%s233 + $0xb0] sm:$0xff]
        %v258 = vld [vmem:[%s233 + $0xb8] sm:$0x3]
        %v259 = vld [vmem:[%s233 + $0xc0] sm:$0xff]
        %v260 = vld [vmem:[%s233 + $0xc8] sm:$0xff]
        %v261 = vld [vmem:[%s233 + $0xd0] sm:$0x3]
        %v262 = vld [vmem:[%s233 + $0xd8] sm:$0xff]
        %v263 = vld [vmem:[%s233 + $0xe0] sm:$0xff]
        %v264 = vld [vmem:[%s233 + $0xe8] sm:$0x3]
        %v265 = vld [vmem:[%s233 + $0xf0] sm:$0xff]
        %v266 = vld [vmem:[%s233 + $0xf8] sm:$0xff]
        %v267 = vld [vmem:[%s233 + $0x100] sm:$0x3]
        %v268 = vld [vmem:[%s233 + $0x108] sm:$0xff]
        %v269 = vld [vmem:[%s233 + $0x110] sm:$0xff]
        %v270 = vld [vmem:[%s233 + $0x118] sm:$0x3]
        %v271 = vld [vmem:[%s233 + $0x120] sm:$0xff]
        %v272 = vld [vmem:[%s233 + $0x128] sm:$0xff]
        %v273 = vld [vmem:[%s233 + $0x130] sm:$0x3]
        %v274 = vld [vmem:[%s233 + $0x138] sm:$0xff]
        %v275 = vld [vmem:[%s233 + $0x140] sm:$0xff]
        %v276 = vld [vmem:[%s233 + $0x148] sm:$0x3]
        %v277 = vld [vmem:[%s233 + $0x150] sm:$0xff]
        %v278 = vld [vmem:[%s233 + $0x158] sm:$0xff]
        %v279 = vld [vmem:[%s233 + $0x160] sm:$0x3]
        %v280 = vld [vmem:[%s233 + $0x168] sm:$0xff]
        %v281 = vld [vmem:[%s233 + $0x170] sm:$0xff]
        %v282 = vld [vmem:[%s233 + $0x178] sm:$0x3]
        %v283 = vld [vmem:[%s233 + $0x180] sm:$0xff]
        %v284 = vld [vmem:[%s233 + $0x188] sm:$0xff]
        %v285 = vld [vmem:[%s233 + $0x190] sm:$0x3]
        %v286 = vld [vmem:[%s233 + $0x198] sm:$0xff]
        %v287 = vld [vmem:[%s233 + $0x1a0] sm:$0xff]
        %v288 = vld [vmem:[%s233 + $0x1a8] sm:$0x3]
        %vm337 = vcmask 1046528
        %v338 = vrot.slane %v235, 1
        %v339 = vrot.slane %v236, 1
        %v340 = vsel %vm337, %v338, %v339
        %v341 = vrot.slane %v237, 1
        %v342 = vsel %vm337, %v339, %v341
        %v343 = vrot.slane %v238, 1
        %v344 = vrot.slane %v239, 1
        %v345 = vsel %vm337, %v343, %v344
        %v346 = vrot.slane %v240, 1
        %v347 = vsel %vm337, %v344, %v346
        %v348 = vrot.slane %v241, 1
        %v349 = vrot.slane %v242, 1
        %v350 = vsel %vm337, %v348, %v349
        %v351 = vrot.slane %v243, 1
        %v352 = vsel %vm337, %v349, %v351
        %v353 = vrot.slane %v244, 1
        %v354 = vrot.slane %v245, 1
        %v355 = vsel %vm337, %v353, %v354
        %v356 = vrot.slane %v246, 1
        %v357 = vsel %vm337, %v354, %v356
        %v358 = vrot.slane %v247, 1
        %v359 = vrot.slane %v248, 1
        %v360 = vsel %vm337, %v358, %v359
        %v361 = vrot.slane %v249, 1
        %v362 = vsel %vm337, %v359, %v361
        %v363 = vrot.slane %v250, 1
        %v364 = vrot.slane %v251, 1
        %v365 = vsel %vm337, %v363, %v364
        %v366 = vrot.slane %v252, 1
        %v367 = vsel %vm337, %v364, %v366
        %v368 = vrot.slane %v253, 1
        %v369 = vrot.slane %v254, 1
        %v370 = vsel %vm337, %v368, %v369
        %v371 = vrot.slane %v255, 1
        %v372 = vsel %vm337, %v369, %v371
        %v373 = vrot.slane %v256, 1
        %v374 = vrot.slane %v257, 1
        %v375 = vsel %vm337, %v373, %v374
        %v376 = vrot.slane %v258, 1
        %v377 = vsel %vm337, %v374, %v376
        %v378 = vrot.slane %v259, 1
        %v379 = vrot.slane %v260, 1
        %v380 = vsel %vm337, %v378, %v379
        %v381 = vrot.slane %v261, 1
        %v382 = vsel %vm337, %v379, %v381
        %v383 = vrot.slane %v262, 1
        %v384 = vrot.slane %v263, 1
        %v385 = vsel %vm337, %v383, %v384
        %v386 = vrot.slane %v264, 1
        %v387 = vsel %vm337, %v384, %v386
        %v388 = vrot.slane %v265, 1
        %v389 = vrot.slane %v266, 1
        %v390 = vsel %vm337, %v388, %v389
        %v391 = vrot.slane %v267, 1
        %v392 = vsel %vm337, %v389, %v391
        %v393 = vrot.slane %v268, 1
        %v394 = vrot.slane %v269, 1
        %v395 = vsel %vm337, %v393, %v394
        %v396 = vrot.slane %v270, 1
        %v397 = vsel %vm337, %v394, %v396
        %v398 = vrot.slane %v271, 1
        %v399 = vrot.slane %v272, 1
        %v400 = vsel %vm337, %v398, %v399
        %v401 = vrot.slane %v273, 1
        %v402 = vsel %vm337, %v399, %v401
        %v403 = vrot.slane %v274, 1
        %v404 = vrot.slane %v275, 1
        %v405 = vsel %vm337, %v403, %v404
        %v406 = vrot.slane %v276, 1
        %v407 = vsel %vm337, %v404, %v406
        %v408 = vrot.slane %v277, 1
        %v409 = vrot.slane %v278, 1
        %v410 = vsel %vm337, %v408, %v409
        %v411 = vrot.slane %v279, 1
        %v412 = vsel %vm337, %v409, %v411
        %v413 = vrot.slane %v280, 1
        %v414 = vrot.slane %v281, 1
        %v415 = vsel %vm337, %v413, %v414
        %v416 = vrot.slane %v282, 1
        %v417 = vsel %vm337, %v414, %v416
        %vm450 = vcmask 1045504
        %v451 = vrot.slane %v235, 2
        %v452 = vrot.slane %v236, 2
        %v453 = vsel %vm450, %v451, %v452
        %v454 = vrot.slane %v237, 2
        %v455 = vsel %vm450, %v452, %v454
        %v456 = vrot.slane %v238, 2
        %v457 = vrot.slane %v239, 2
        %v458 = vsel %vm450, %v456, %v457
        %v459 = vrot.slane %v240, 2
        %v460 = vsel %vm450, %v457, %v459
        %v461 = vrot.slane %v241, 2
        %v462 = vrot.slane %v242, 2
        %v463 = vsel %vm450, %v461, %v462
        %v464 = vrot.slane %v243, 2
        %v465 = vsel %vm450, %v462, %v464
        %v466 = vrot.slane %v244, 2
        %v467 = vrot.slane %v245, 2
        %v468 = vsel %vm450, %v466, %v467
        %v469 = vrot.slane %v246, 2
        %v470 = vsel %vm450, %v467, %v469
        %v471 = vrot.slane %v247, 2
        %v472 = vrot.slane %v248, 2
        %v473 = vsel %vm450, %v471, %v472
        %v474 = vrot.slane %v249, 2
        %v475 = vsel %vm450, %v472, %v474
        %v476 = vrot.slane %v250, 2
        %v477 = vrot.slane %v251, 2
        %v478 = vsel %vm450, %v476, %v477
        %v479 = vrot.slane %v252, 2
        %v480 = vsel %vm450, %v477, %v479
        %v481 = vrot.slane %v253, 2
        %v482 = vrot.slane %v254, 2
        %v483 = vsel %vm450, %v481, %v482
        %v484 = vrot.slane %v255, 2
        %v485 = vsel %vm450, %v482, %v484
        %v486 = vrot.slane %v256, 2
        %v487 = vrot.slane %v257, 2
        %v488 = vsel %vm450, %v486, %v487
        %v489 = vrot.slane %v258, 2
        %v490 = vsel %vm450, %v487, %v489
        %v491 = vrot.slane %v259, 2
        %v492 = vrot.slane %v260, 2
        %v493 = vsel %vm450, %v491, %v492
        %v494 = vrot.slane %v261, 2
        %v495 = vsel %vm450, %v492, %v494
        %v496 = vrot.slane %v262, 2
        %v497 = vrot.slane %v263, 2
        %v498 = vsel %vm450, %v496, %v497
        %v499 = vrot.slane %v264, 2
        %v500 = vsel %vm450, %v497, %v499
        %v501 = vrot.slane %v265, 2
        %v502 = vrot.slane %v266, 2
        %v503 = vsel %vm450, %v501, %v502
        %v504 = vrot.slane %v267, 2
        %v505 = vsel %vm450, %v502, %v504
        %v506 = vrot.slane %v268, 2
        %v507 = vrot.slane %v269, 2
        %v508 = vsel %vm450, %v506, %v507
        %v509 = vrot.slane %v270, 2
        %v510 = vsel %vm450, %v507, %v509
        %v511 = vrot.slane %v271, 2
        %v512 = vrot.slane %v272, 2
        %v513 = vsel %vm450, %v511, %v512
        %v514 = vrot.slane %v273, 2
        %v515 = vsel %vm450, %v512, %v514
        %v516 = vrot.slane %v274, 2
        %v517 = vrot.slane %v275, 2
        %v518 = vsel %vm450, %v516, %v517
        %v519 = vrot.slane %v276, 2
        %v520 = vsel %vm450, %v517, %v519
        %v521 = vrot.slane %v277, 2
        %v522 = vrot.slane %v278, 2
        %v523 = vsel %vm450, %v521, %v522
        %v524 = vrot.slane %v279, 2
        %v525 = vsel %vm450, %v522, %v524
        %v526 = vrot.slane %v280, 2
        %v527 = vrot.slane %v281, 2
        %v528 = vsel %vm450, %v526, %v527
        %v529 = vrot.slane %v282, 2
        %v530 = vsel %vm450, %v527, %v529
        %v566 = vrot.slane %v283, 1
        %v567 = vrot.slane %v284, 1
        %v568 = vsel %vm337, %v566, %v567
        %v569 = vrot.slane %v285, 1
        %v570 = vsel %vm337, %v567, %v569
        %v573 = vrot.slane %v283, 2
        %v574 = vrot.slane %v284, 2
        %v575 = vsel %vm450, %v573, %v574
        %v576 = vrot.slane %v285, 2
        %v577 = vsel %vm450, %v574, %v576
        %v583 = vrot.slane %v286, 1
        %v584 = vrot.slane %v287, 1
        %v585 = vsel %vm337, %v583, %v584
        %v586 = vrot.slane %v288, 1
        %v587 = vsel %vm337, %v584, %v586
        %v590 = vrot.slane %v286, 2
        %v591 = vrot.slane %v287, 2
        %v592 = vsel %vm450, %v590, %v591
        %v593 = vrot.slane %v288, 2
        %v594 = vsel %vm450, %v591, %v593
        %v597 = vpack.c.bf16 %v235, %v235
        %v598 = vpack.c.bf16 %v236, %v236
        %v599 = vpack.c.bf16 %v238, %v238
        %v600 = vpack.c.bf16 %v239, %v239
        %v601 = vpack.c.bf16 %v241, %v241
        %v602 = vpack.c.bf16 %v242, %v242
        %v603 = vpack.c.bf16 %v244, %v244
        %v604 = vpack.c.bf16 %v245, %v245
        %v605 = vpack.c.bf16 %v247, %v247
        %v606 = vpack.c.bf16 %v248, %v248
        %v607 = vpack.c.bf16 %v250, %v250
        %v608 = vpack.c.bf16 %v251, %v251
        %v609 = vpack.c.bf16 %v253, %v253
        %v610 = vpack.c.bf16 %v254, %v254
        %v611 = vpack.c.bf16 %v256, %v256
        %v612 = vpack.c.bf16 %v257, %v257
        %v613 = vpack.c.bf16 %v259, %v259
        %v614 = vpack.c.bf16 %v260, %v260
        %v615 = vpack.c.bf16 %v262, %v262
        %v616 = vpack.c.bf16 %v263, %v263
        %v617 = vpack.c.bf16 %v265, %v265
        %v618 = vpack.c.bf16 %v266, %v266
        %v619 = vpack.c.bf16 %v268, %v268
        %v620 = vpack.c.bf16 %v269, %v269
        %v621 = vpack.c.bf16 %v271, %v271
        %v622 = vpack.c.bf16 %v272, %v272
        %v623 = vpack.c.bf16 %v274, %v274
        %v624 = vpack.c.bf16 %v275, %v275
        %v625 = vpack.c.bf16 %v277, %v277
        %v626 = vpack.c.bf16 %v278, %v278
        %v627 = vpack.c.bf16 %v280, %v280
        %v628 = vpack.c.bf16 %v281, %v281
        %v629 = vpack.c.bf16 %v340, %v340
        %v630 = vpack.c.bf16 %v342, %v342
        %v631 = vpack.c.bf16 %v345, %v345
        %v632 = vpack.c.bf16 %v347, %v347
        %v633 = vpack.c.bf16 %v350, %v350
        %v634 = vpack.c.bf16 %v352, %v352
        %v635 = vpack.c.bf16 %v355, %v355
        %v636 = vpack.c.bf16 %v357, %v357
        %v637 = vpack.c.bf16 %v360, %v360
        %v638 = vpack.c.bf16 %v362, %v362
        %v639 = vpack.c.bf16 %v365, %v365
        %v640 = vpack.c.bf16 %v367, %v367
        %v641 = vpack.c.bf16 %v370, %v370
        %v642 = vpack.c.bf16 %v372, %v372
        %v643 = vpack.c.bf16 %v375, %v375
        %v644 = vpack.c.bf16 %v377, %v377
        %v645 = vpack.c.bf16 %v380, %v380
        %v646 = vpack.c.bf16 %v382, %v382
        %v647 = vpack.c.bf16 %v385, %v385
        %v648 = vpack.c.bf16 %v387, %v387
        %v649 = vpack.c.bf16 %v390, %v390
        %v650 = vpack.c.bf16 %v392, %v392
        %v651 = vpack.c.bf16 %v395, %v395
        %v652 = vpack.c.bf16 %v397, %v397
        %v653 = vpack.c.bf16 %v400, %v400
        %v654 = vpack.c.bf16 %v402, %v402
        %v655 = vpack.c.bf16 %v405, %v405
        %v656 = vpack.c.bf16 %v407, %v407
        %v657 = vpack.c.bf16 %v410, %v410
        %v658 = vpack.c.bf16 %v412, %v412
        %v659 = vpack.c.bf16 %v415, %v415
        %v660 = vpack.c.bf16 %v417, %v417
        %v661 = vpack.c.bf16 %v453, %v453
        %v662 = vpack.c.bf16 %v455, %v455
        %v663 = vpack.c.bf16 %v458, %v458
        %v664 = vpack.c.bf16 %v460, %v460
        %v665 = vpack.c.bf16 %v463, %v463
        %v666 = vpack.c.bf16 %v465, %v465
        %v667 = vpack.c.bf16 %v468, %v468
        %v668 = vpack.c.bf16 %v470, %v470
        %v669 = vpack.c.bf16 %v473, %v473
        %v670 = vpack.c.bf16 %v475, %v475
        %v671 = vpack.c.bf16 %v478, %v478
        %v672 = vpack.c.bf16 %v480, %v480
        %v673 = vpack.c.bf16 %v483, %v483
        %v674 = vpack.c.bf16 %v485, %v485
        %v675 = vpack.c.bf16 %v488, %v488
        %v676 = vpack.c.bf16 %v490, %v490
        %v677 = vpack.c.bf16 %v493, %v493
        %v678 = vpack.c.bf16 %v495, %v495
        %v679 = vpack.c.bf16 %v498, %v498
        %v680 = vpack.c.bf16 %v500, %v500
        %v681 = vpack.c.bf16 %v503, %v503
        %v682 = vpack.c.bf16 %v505, %v505
        %v683 = vpack.c.bf16 %v508, %v508
        %v684 = vpack.c.bf16 %v510, %v510
        %v685 = vpack.c.bf16 %v513, %v513
        %v686 = vpack.c.bf16 %v515, %v515
        %v687 = vpack.c.bf16 %v518, %v518
        %v688 = vpack.c.bf16 %v520, %v520
        %v689 = vpack.c.bf16 %v523, %v523
        %v690 = vpack.c.bf16 %v525, %v525
        %v691 = vpack.c.bf16 %v528, %v528
        %v692 = vpack.c.bf16 %v530, %v530
        %v693 = vpack.c.bf16 %v283, %v283
        %v694 = vpack.c.bf16 %v284, %v284
        %v695 = vpack.c.bf16 %v568, %v568
        %v696 = vpack.c.bf16 %v570, %v570
        %v697 = vpack.c.bf16 %v575, %v575
        %v698 = vpack.c.bf16 %v577, %v577
        %v699 = vpack.c.bf16 %v286, %v286
        %v700 = vpack.c.bf16 %v287, %v287
        %v701 = vpack.c.bf16 %v585, %v585
        %v702 = vpack.c.bf16 %v587, %v587
        %v703 = vpack.c.bf16 %v592, %v592
        %v704 = vpack.c.bf16 %v594, %v594
        %v737 = vunpack.c.l.b16 %v597
        %v738 = vunpack.c.l.b16 %v598
        %v739 = vunpack.c.l.b16 %v599
        %v740 = vunpack.c.l.b16 %v600
        %v741 = vunpack.c.l.b16 %v601
        %v742 = vunpack.c.l.b16 %v602
        %v743 = vunpack.c.l.b16 %v603
        %v744 = vunpack.c.l.b16 %v604
        %v745 = vunpack.c.l.b16 %v605
        %v746 = vunpack.c.l.b16 %v606
        %v747 = vunpack.c.l.b16 %v607
        %v748 = vunpack.c.l.b16 %v608
        %v749 = vunpack.c.l.b16 %v609
        %v750 = vunpack.c.l.b16 %v610
        %v751 = vunpack.c.l.b16 %v611
        %v752 = vunpack.c.l.b16 %v612
        %v753 = vunpack.c.l.b16 %v613
        %v754 = vunpack.c.l.b16 %v614
        %v755 = vunpack.c.l.b16 %v615
        %v756 = vunpack.c.l.b16 %v616
        %v757 = vunpack.c.l.b16 %v617
        %v758 = vunpack.c.l.b16 %v618
        %v759 = vunpack.c.l.b16 %v619
        %v760 = vunpack.c.l.b16 %v620
        %v761 = vunpack.c.l.b16 %v621
        %v762 = vunpack.c.l.b16 %v622
        %v763 = vunpack.c.l.b16 %v623
        %v764 = vunpack.c.l.b16 %v624
        %v765 = vunpack.c.l.b16 %v625
        %v766 = vunpack.c.l.b16 %v626
        %v767 = vunpack.c.l.b16 %v627
        %v768 = vunpack.c.l.b16 %v628
        %v769 = vpack.c.b16 %v738, %v737
        %v770 = vpack.c.b16 %v740, %v739
        %v771 = vpack.c.b16 %v742, %v741
        %v772 = vpack.c.b16 %v744, %v743
        %v773 = vpack.c.b16 %v746, %v745
        %v774 = vpack.c.b16 %v748, %v747
        %v775 = vpack.c.b16 %v750, %v749
        %v776 = vpack.c.b16 %v752, %v751
        %v777 = vpack.c.b16 %v754, %v753
        %v778 = vpack.c.b16 %v756, %v755
        %v779 = vpack.c.b16 %v758, %v757
        %v780 = vpack.c.b16 %v760, %v759
        %v781 = vpack.c.b16 %v762, %v761
        %v782 = vpack.c.b16 %v764, %v763
        %v783 = vpack.c.b16 %v766, %v765
        %v784 = vpack.c.b16 %v768, %v767
        %v833 = vunpack.c.l.b16 %v629
        %v834 = vunpack.c.l.b16 %v630
        %v835 = vunpack.c.l.b16 %v631
        %v836 = vunpack.c.l.b16 %v632
        %v837 = vunpack.c.l.b16 %v633
        %v838 = vunpack.c.l.b16 %v634
        %v839 = vunpack.c.l.b16 %v635
        %v840 = vunpack.c.l.b16 %v636
        %v841 = vunpack.c.l.b16 %v637
        %v842 = vunpack.c.l.b16 %v638
        %v843 = vunpack.c.l.b16 %v639
        %v844 = vunpack.c.l.b16 %v640
        %v845 = vunpack.c.l.b16 %v641
        %v846 = vunpack.c.l.b16 %v642
        %v847 = vunpack.c.l.b16 %v643
        %v848 = vunpack.c.l.b16 %v644
        %v849 = vunpack.c.l.b16 %v645
        %v850 = vunpack.c.l.b16 %v646
        %v851 = vunpack.c.l.b16 %v647
        %v852 = vunpack.c.l.b16 %v648
        %v853 = vunpack.c.l.b16 %v649
        %v854 = vunpack.c.l.b16 %v650
        %v855 = vunpack.c.l.b16 %v651
        %v856 = vunpack.c.l.b16 %v652
        %v857 = vunpack.c.l.b16 %v653
        %v858 = vunpack.c.l.b16 %v654
        %v859 = vunpack.c.l.b16 %v655
        %v860 = vunpack.c.l.b16 %v656
        %v861 = vunpack.c.l.b16 %v657
        %v862 = vunpack.c.l.b16 %v658
        %v863 = vunpack.c.l.b16 %v659
        %v864 = vunpack.c.l.b16 %v660
        %v865 = vpack.c.b16 %v834, %v833
        %v866 = vpack.c.b16 %v836, %v835
        %v867 = vpack.c.b16 %v838, %v837
        %v868 = vpack.c.b16 %v840, %v839
        %v869 = vpack.c.b16 %v842, %v841
        %v870 = vpack.c.b16 %v844, %v843
        %v871 = vpack.c.b16 %v846, %v845
        %v872 = vpack.c.b16 %v848, %v847
        %v873 = vpack.c.b16 %v850, %v849
        %v874 = vpack.c.b16 %v852, %v851
        %v875 = vpack.c.b16 %v854, %v853
        %v876 = vpack.c.b16 %v856, %v855
        %v877 = vpack.c.b16 %v858, %v857
        %v878 = vpack.c.b16 %v860, %v859
        %v879 = vpack.c.b16 %v862, %v861
        %v880 = vpack.c.b16 %v864, %v863
        %v929 = vunpack.c.l.b16 %v661
        %v930 = vunpack.c.l.b16 %v662
        %v931 = vunpack.c.l.b16 %v663
        %v932 = vunpack.c.l.b16 %v664
        %v933 = vunpack.c.l.b16 %v665
        %v934 = vunpack.c.l.b16 %v666
        %v935 = vunpack.c.l.b16 %v667
        %v936 = vunpack.c.l.b16 %v668
        %v937 = vunpack.c.l.b16 %v669
        %v938 = vunpack.c.l.b16 %v670
        %v939 = vunpack.c.l.b16 %v671
        %v940 = vunpack.c.l.b16 %v672
        %v941 = vunpack.c.l.b16 %v673
        %v942 = vunpack.c.l.b16 %v674
        %v943 = vunpack.c.l.b16 %v675
        %v944 = vunpack.c.l.b16 %v676
        %v945 = vunpack.c.l.b16 %v677
        %v946 = vunpack.c.l.b16 %v678
        %v947 = vunpack.c.l.b16 %v679
        %v948 = vunpack.c.l.b16 %v680
        %v949 = vunpack.c.l.b16 %v681
        %v950 = vunpack.c.l.b16 %v682
        %v951 = vunpack.c.l.b16 %v683
        %v952 = vunpack.c.l.b16 %v684
        %v953 = vunpack.c.l.b16 %v685
        %v954 = vunpack.c.l.b16 %v686
        %v955 = vunpack.c.l.b16 %v687
        %v956 = vunpack.c.l.b16 %v688
        %v957 = vunpack.c.l.b16 %v689
        %v958 = vunpack.c.l.b16 %v690
        %v959 = vunpack.c.l.b16 %v691
        %v960 = vunpack.c.l.b16 %v692
        %v961 = vpack.c.b16 %v930, %v929
        %v962 = vpack.c.b16 %v932, %v931
        %v963 = vpack.c.b16 %v934, %v933
        %v964 = vpack.c.b16 %v936, %v935
        %v965 = vpack.c.b16 %v938, %v937
        %v966 = vpack.c.b16 %v940, %v939
        %v967 = vpack.c.b16 %v942, %v941
        %v968 = vpack.c.b16 %v944, %v943
        %v969 = vpack.c.b16 %v946, %v945
        %v970 = vpack.c.b16 %v948, %v947
        %v971 = vpack.c.b16 %v950, %v949
        %v972 = vpack.c.b16 %v952, %v951
        %v973 = vpack.c.b16 %v954, %v953
        %v974 = vpack.c.b16 %v956, %v955
        %v975 = vpack.c.b16 %v958, %v957
        %v976 = vpack.c.b16 %v960, %v959
        %v995 = vunpack.c.l.b16 %v693
        %v996 = vunpack.c.l.b16 %v694
        %v997 = vpack.c.b16 %v996, %v995
        %v1001 = vunpack.c.l.b16 %v695
        %v1002 = vunpack.c.l.b16 %v696
        %v1003 = vpack.c.b16 %v1002, %v1001
        %v1007 = vunpack.c.l.b16 %v697
        %v1008 = vunpack.c.l.b16 %v698
        %v1009 = vpack.c.b16 %v1008, %v1007
        %v1013 = vunpack.c.l.b16 %v699
        %v1014 = vunpack.c.l.b16 %v700
        %v1015 = vpack.c.b16 %v1014, %v1013
        %v1019 = vunpack.c.l.b16 %v701
        %v1020 = vunpack.c.l.b16 %v702
        %v1021 = vpack.c.b16 %v1020, %v1019
        %v1025 = vunpack.c.l.b16 %v703
        %v1026 = vunpack.c.l.b16 %v704
        %v1027 = vpack.c.b16 %v1026, %v1025
        %v1029 = vld [vmem:[%s1] sm:$0xf]
        %v1030 = vld [vmem:[%s1 + $0x4] sm:$0xf]
        %v1031 = vld [vmem:[%s1 + $0x8] sm:$0xf]
        %v1032 = vld [vmem:[%s1 + $0xc] sm:$0xf]
        %v1033 = vld [vmem:[%s1 + $0x10] sm:$0xf]
        %v1034 = vld [vmem:[%s1 + $0x14] sm:$0xf]
        %v1035 = vld [vmem:[%s1 + $0x18] sm:$0xf]
        %v1036 = vld [vmem:[%s1 + $0x1c] sm:$0xf]
        %v1037 = vld [vmem:[%s1 + $0x20] sm:$0xf]
        %v1038 = vld [vmem:[%s1 + $0x24] sm:$0xf]
        %v1039 = vld [vmem:[%s1 + $0x28] sm:$0xf]
        %v1040 = vld [vmem:[%s1 + $0x2c] sm:$0xf]
        %v1041 = vld [vmem:[%s1 + $0x30] sm:$0xf]
        %v1042 = vld [vmem:[%s1 + $0x34] sm:$0xf]
        %v1043 = vld [vmem:[%s1 + $0x38] sm:$0xf]
        %v1044 = vld [vmem:[%s1 + $0x3c] sm:$0xf]
        %v1045 = vld [vmem:[%s1 + $0x40] sm:$0xf]
        %v1046 = vld [vmem:[%s1 + $0x44] sm:$0xf]
        %v1047 = vld [vmem:[%s1 + $0x48] sm:$0xf]
        %v1048 = vld [vmem:[%s1 + $0x4c] sm:$0xf]
        %v1049 = vld [vmem:[%s1 + $0x50] sm:$0xf]
        %v1050 = vld [vmem:[%s1 + $0x54] sm:$0xf]
        %v1051 = vld [vmem:[%s1 + $0x58] sm:$0xf]
        %v1052 = vld [vmem:[%s1 + $0x5c] sm:$0xf]
        %v1053 = vld [vmem:[%s1 + $0x60] sm:$0xf]
        %v1054 = vld [vmem:[%s1 + $0x64] sm:$0xf]
        %v1055 = vld [vmem:[%s1 + $0x68] sm:$0xf]
        %v1056 = vld [vmem:[%s1 + $0x6c] sm:$0xf]
        %v1057 = vld [vmem:[%s1 + $0x70] sm:$0xf]
        %v1058 = vld [vmem:[%s1 + $0x74] sm:$0xf]
        %v1059 = vld [vmem:[%s1 + $0x78] sm:$0xf]
        %v1060 = vld [vmem:[%s1 + $0x7c] sm:$0xf]
        %v1061 = vld [vmem:[%s1 + $0x80] sm:$0xf]
        %v1062 = vld [vmem:[%s1 + $0x84] sm:$0xf]
        %v1063 = vld [vmem:[%s1 + $0x88] sm:$0xf]
        %v1064 = vld [vmem:[%s1 + $0x8c] sm:$0xf]
        %v1065 = vld [vmem:[%s1 + $0x90] sm:$0xf]
        %v1066 = vld [vmem:[%s1 + $0x94] sm:$0xf]
        %v1067 = vld [vmem:[%s1 + $0x98] sm:$0xf]
        %v1068 = vld [vmem:[%s1 + $0x9c] sm:$0xf]
        %v1069 = vld [vmem:[%s1 + $0xa0] sm:$0xf]
        %v1070 = vld [vmem:[%s1 + $0xa4] sm:$0xf]
        %v1071 = vld [vmem:[%s1 + $0xa8] sm:$0xf]
        %v1072 = vld [vmem:[%s1 + $0xac] sm:$0xf]
        %v1073 = vld [vmem:[%s1 + $0xb0] sm:$0xf]
        %v1074 = vld [vmem:[%s1 + $0xb4] sm:$0xf]
        %v1075 = vld [vmem:[%s1 + $0xb8] sm:$0xf]
        %v1076 = vld [vmem:[%s1 + $0xbc] sm:$0xf]
        %v1077 = vld [vmem:[%s1 + $0xc0] sm:$0xf]
        %v1078 = vld [vmem:[%s1 + $0xc4] sm:$0xf]
        %v1079 = vld [vmem:[%s1 + $0xc8] sm:$0xf]
        %v1080 = vld [vmem:[%s1 + $0xcc] sm:$0xf]
        %v1081 = vld [vmem:[%s1 + $0xd0] sm:$0xf]
        %v1082 = vld [vmem:[%s1 + $0xd4] sm:$0xf]
        %v1083 = vld [vmem:[%s1 + $0xd8] sm:$0xf]
        %v1084 = vld [vmem:[%s1 + $0xdc] sm:$0xf]
        %v1085 = vld [vmem:[%s1 + $0xe0] sm:$0xf]
        %v1086 = vld [vmem:[%s1 + $0xe4] sm:$0xf]
        %v1087 = vld [vmem:[%s1 + $0xe8] sm:$0xf]
        %v1088 = vld [vmem:[%s1 + $0xec] sm:$0xf]
        %v1089 = vld [vmem:[%s1 + $0xf0] sm:$0xf]
        %v1090 = vld [vmem:[%s1 + $0xf4] sm:$0xf]
        %v1091 = vld [vmem:[%s1 + $0xf8] sm:$0xf]
        %v1092 = vld [vmem:[%s1 + $0xfc] sm:$0xf]
        %v1093 = vld [vmem:[%s1 + $0x100] sm:$0xf]
        %v1094 = vld [vmem:[%s1 + $0x104] sm:$0xf]
        %v1095 = vld [vmem:[%s1 + $0x108] sm:$0xf]
        %v1096 = vld [vmem:[%s1 + $0x10c] sm:$0xf]
        %v1097 = vld [vmem:[%s1 + $0x110] sm:$0xf]
        %v1098 = vld [vmem:[%s1 + $0x114] sm:$0xf]
        %v1099 = vld [vmem:[%s1 + $0x118] sm:$0xf]
        %v1100 = vld [vmem:[%s1 + $0x11c] sm:$0xf]
        %v1101 = vld [vmem:[%s1 + $0x120] sm:$0xf]
        %v1102 = vld [vmem:[%s1 + $0x124] sm:$0xf]
        %v1103 = vld [vmem:[%s1 + $0x128] sm:$0xf]
        %v1104 = vld [vmem:[%s1 + $0x12c] sm:$0xf]
        %v1105 = vld [vmem:[%s1 + $0x130] sm:$0xf]
        %v1106 = vld [vmem:[%s1 + $0x134] sm:$0xf]
        %v1107 = vld [vmem:[%s1 + $0x138] sm:$0xf]
        %v1108 = vld [vmem:[%s1 + $0x13c] sm:$0xf]
        %v1109 = vld [vmem:[%s1 + $0x140] sm:$0xf]
        %v1110 = vld [vmem:[%s1 + $0x144] sm:$0xf]
        %v1111 = vld [vmem:[%s1 + $0x148] sm:$0xf]
        %v1112 = vld [vmem:[%s1 + $0x14c] sm:$0xf]
        %v1113 = vld [vmem:[%s1 + $0x150] sm:$0xf]
        %v1114 = vld [vmem:[%s1 + $0x154] sm:$0xf]
        %v1115 = vld [vmem:[%s1 + $0x158] sm:$0xf]
        %v1116 = vld [vmem:[%s1 + $0x15c] sm:$0xf]
        %v1117 = vld [vmem:[%s1 + $0x160] sm:$0xf]
        %v1118 = vld [vmem:[%s1 + $0x164] sm:$0xf]
        %v1119 = vld [vmem:[%s1 + $0x168] sm:$0xf]
        %v1120 = vld [vmem:[%s1 + $0x16c] sm:$0xf]
        %v1121 = vld [vmem:[%s1 + $0x170] sm:$0xf]
        %v1122 = vld [vmem:[%s1 + $0x174] sm:$0xf]
        %v1123 = vld [vmem:[%s1 + $0x178] sm:$0xf]
        %v1124 = vld [vmem:[%s1 + $0x17c] sm:$0xf]
        %v1125 = vld [vmem:[%s1 + $0x180] sm:$0xf]
        %v1126 = vld [vmem:[%s1 + $0x184] sm:$0xf]
        %v1127 = vld [vmem:[%s1 + $0x188] sm:$0xf]
        %v1128 = vld [vmem:[%s1 + $0x18c] sm:$0xf]
        %v1129 = vld [vmem:[%s1 + $0x190] sm:$0xf]
        %v1130 = vld [vmem:[%s1 + $0x194] sm:$0xf]
        %v1131 = vld [vmem:[%s1 + $0x198] sm:$0xf]
        %v1132 = vld [vmem:[%s1 + $0x19c] sm:$0xf]
        %v1133 = vld [vmem:[%s1 + $0x1a0] sm:$0xf]
        %v1134 = vld [vmem:[%s1 + $0x1a4] sm:$0xf]
        %v1135 = vld [vmem:[%s1 + $0x1a8] sm:$0xf]
        %v1136 = vld [vmem:[%s1 + $0x1ac] sm:$0xf]
        %v1137 = vld [vmem:[%s1 + $0x1b0] sm:$0xf]
        %v1138 = vld [vmem:[%s1 + $0x1b4] sm:$0xf]
        %v1139 = vld [vmem:[%s1 + $0x1b8] sm:$0xf]
        %v1140 = vld [vmem:[%s1 + $0x1bc] sm:$0xf]
        %v1141 = vld [vmem:[%s1 + $0x1c0] sm:$0xf]
        %v1142 = vld [vmem:[%s1 + $0x1c4] sm:$0xf]
        %v1143 = vld [vmem:[%s1 + $0x1c8] sm:$0xf]
        %v1144 = vld [vmem:[%s1 + $0x1cc] sm:$0xf]
        %v1145 = vld [vmem:[%s1 + $0x1d0] sm:$0xf]
        %v1146 = vld [vmem:[%s1 + $0x1d4] sm:$0xf]
        %v1147 = vld [vmem:[%s1 + $0x1d8] sm:$0xf]
        %v1148 = vld [vmem:[%s1 + $0x1dc] sm:$0xf]
        %v1149 = vld [vmem:[%s1 + $0x1e0] sm:$0xf]
        %v1150 = vld [vmem:[%s1 + $0x1e4] sm:$0xf]
        %v1151 = vld [vmem:[%s1 + $0x1e8] sm:$0xf]
        %v1152 = vld [vmem:[%s1 + $0x1ec] sm:$0xf]
        %v1153 = vld [vmem:[%s1 + $0x1f0] sm:$0xf]
        %v1154 = vld [vmem:[%s1 + $0x1f4] sm:$0xf]
        %v1155 = vld [vmem:[%s1 + $0x1f8] sm:$0xf]
        %v1156 = vld [vmem:[%s1 + $0x1fc] sm:$0xf]
        %v1157 = vld [vmem:[%s1 + $0x200] sm:$0xf]
        %v1158 = vld [vmem:[%s1 + $0x204] sm:$0xf]
        %v1159 = vld [vmem:[%s1 + $0x208] sm:$0xf]
        %v1160 = vld [vmem:[%s1 + $0x20c] sm:$0xf]
        %v1161 = vld [vmem:[%s1 + $0x210] sm:$0xf]
        %v1162 = vld [vmem:[%s1 + $0x214] sm:$0xf]
        %v1163 = vld [vmem:[%s1 + $0x218] sm:$0xf]
        %v1164 = vld [vmem:[%s1 + $0x21c] sm:$0xf]
        %v1165 = vld [vmem:[%s1 + $0x220] sm:$0xf]
        %v1166 = vld [vmem:[%s1 + $0x224] sm:$0xf]
        %v1167 = vld [vmem:[%s1 + $0x228] sm:$0xf]
        %v1168 = vld [vmem:[%s1 + $0x22c] sm:$0xf]
        %v1169 = vld [vmem:[%s1 + $0x230] sm:$0xf]
        %v1170 = vld [vmem:[%s1 + $0x234] sm:$0xf]
        %v1171 = vld [vmem:[%s1 + $0x238] sm:$0xf]
        %v1172 = vld [vmem:[%s1 + $0x23c] sm:$0xf]
        %v1173 = vld [vmem:[%s3] sm:$0x1]
        %v1174 = vperm.slane %v1173, 0
        %v1319 = vunpack.c.l.b16 %v1029
        %v1320 = vunpack.c.l.b16 %v1030
        %v1321 = vunpack.c.l.b16 %v1031
        %v1322 = vunpack.c.l.b16 %v1032
        %v1323 = vunpack.c.l.b16 %v1033
        %v1324 = vunpack.c.l.b16 %v1034
        %v1325 = vunpack.c.l.b16 %v1035
        %v1326 = vunpack.c.l.b16 %v1036
        %v1327 = vunpack.c.l.b16 %v1037
        %v1328 = vunpack.c.l.b16 %v1038
        %v1329 = vunpack.c.l.b16 %v1039
        %v1330 = vunpack.c.l.b16 %v1040
        %v1331 = vunpack.c.l.b16 %v1041
        %v1332 = vunpack.c.l.b16 %v1042
        %v1333 = vunpack.c.l.b16 %v1043
        %v1334 = vunpack.c.l.b16 %v1044
        %v1335 = vunpack.c.l.b16 %v1045
        %v1336 = vunpack.c.l.b16 %v1046
        %v1337 = vunpack.c.l.b16 %v1047
        %v1338 = vunpack.c.l.b16 %v1048
        %v1339 = vunpack.c.l.b16 %v1049
        %v1340 = vunpack.c.l.b16 %v1050
        %v1341 = vunpack.c.l.b16 %v1051
        %v1342 = vunpack.c.l.b16 %v1052
        %v1343 = vunpack.c.l.b16 %v1053
        %v1344 = vunpack.c.l.b16 %v1054
        %v1345 = vunpack.c.l.b16 %v1055
        %v1346 = vunpack.c.l.b16 %v1056
        %v1347 = vunpack.c.l.b16 %v1057
        %v1348 = vunpack.c.l.b16 %v1058
        %v1349 = vunpack.c.l.b16 %v1059
        %v1350 = vunpack.c.l.b16 %v1060
        %v1351 = vunpack.c.l.b16 %v1061
        %v1352 = vunpack.c.l.b16 %v1062
        %v1353 = vunpack.c.l.b16 %v1063
        %v1354 = vunpack.c.l.b16 %v1064
        %v1355 = vunpack.c.l.b16 %v1065
        %v1356 = vunpack.c.l.b16 %v1066
        %v1357 = vunpack.c.l.b16 %v1067
        %v1358 = vunpack.c.l.b16 %v1068
        %v1359 = vunpack.c.l.b16 %v1069
        %v1360 = vunpack.c.l.b16 %v1070
        %v1361 = vunpack.c.l.b16 %v1071
        %v1362 = vunpack.c.l.b16 %v1072
        %v1363 = vunpack.c.l.b16 %v1073
        %v1364 = vunpack.c.l.b16 %v1074
        %v1365 = vunpack.c.l.b16 %v1075
        %v1366 = vunpack.c.l.b16 %v1076
        %v1367 = vunpack.c.l.b16 %v1077
        %v1368 = vunpack.c.l.b16 %v1078
        %v1369 = vunpack.c.l.b16 %v1079
        %v1370 = vunpack.c.l.b16 %v1080
        %v1371 = vunpack.c.l.b16 %v1081
        %v1372 = vunpack.c.l.b16 %v1082
        %v1373 = vunpack.c.l.b16 %v1083
        %v1374 = vunpack.c.l.b16 %v1084
        %v1375 = vunpack.c.l.b16 %v1085
        %v1376 = vunpack.c.l.b16 %v1086
        %v1377 = vunpack.c.l.b16 %v1087
        %v1378 = vunpack.c.l.b16 %v1088
        %v1379 = vunpack.c.l.b16 %v1089
        %v1380 = vunpack.c.l.b16 %v1090
        %v1381 = vunpack.c.l.b16 %v1091
        %v1382 = vunpack.c.l.b16 %v1092
        %v1383 = vunpack.c.l.b16 %v1093
        %v1384 = vunpack.c.l.b16 %v1094
        %v1385 = vunpack.c.l.b16 %v1095
        %v1386 = vunpack.c.l.b16 %v1096
        %v1387 = vunpack.c.l.b16 %v1097
        %v1388 = vunpack.c.l.b16 %v1098
        %v1389 = vunpack.c.l.b16 %v1099
        %v1390 = vunpack.c.l.b16 %v1100
        %v1391 = vunpack.c.l.b16 %v1101
        %v1392 = vunpack.c.l.b16 %v1102
        %v1393 = vunpack.c.l.b16 %v1103
        %v1394 = vunpack.c.l.b16 %v1104
        %v1395 = vunpack.c.l.b16 %v1105
        %v1396 = vunpack.c.l.b16 %v1106
        %v1397 = vunpack.c.l.b16 %v1107
        %v1398 = vunpack.c.l.b16 %v1108
        %v1399 = vunpack.c.l.b16 %v1109
        %v1400 = vunpack.c.l.b16 %v1110
        %v1401 = vunpack.c.l.b16 %v1111
        %v1402 = vunpack.c.l.b16 %v1112
        %v1403 = vunpack.c.l.b16 %v1113
        %v1404 = vunpack.c.l.b16 %v1114
        %v1405 = vunpack.c.l.b16 %v1115
        %v1406 = vunpack.c.l.b16 %v1116
        %v1407 = vunpack.c.l.b16 %v1117
        %v1408 = vunpack.c.l.b16 %v1118
        %v1409 = vunpack.c.l.b16 %v1119
        %v1410 = vunpack.c.l.b16 %v1120
        %v1411 = vunpack.c.l.b16 %v1121
        %v1412 = vunpack.c.l.b16 %v1122
        %v1413 = vunpack.c.l.b16 %v1123
        %v1414 = vunpack.c.l.b16 %v1124
        %v1415 = vunpack.c.l.b16 %v1125
        %v1416 = vunpack.c.l.b16 %v1126
        %v1417 = vunpack.c.l.b16 %v1127
        %v1418 = vunpack.c.l.b16 %v1128
        %v1419 = vunpack.c.l.b16 %v1129
        %v1420 = vunpack.c.l.b16 %v1130
        %v1421 = vunpack.c.l.b16 %v1131
        %v1422 = vunpack.c.l.b16 %v1132
        %v1423 = vunpack.c.l.b16 %v1133
        %v1424 = vunpack.c.l.b16 %v1134
        %v1425 = vunpack.c.l.b16 %v1135
        %v1426 = vunpack.c.l.b16 %v1136
        %v1427 = vunpack.c.l.b16 %v1137
        %v1428 = vunpack.c.l.b16 %v1138
        %v1429 = vunpack.c.l.b16 %v1139
        %v1430 = vunpack.c.l.b16 %v1140
        %v1431 = vunpack.c.l.b16 %v1141
        %v1432 = vunpack.c.l.b16 %v1142
        %v1433 = vunpack.c.l.b16 %v1143
        %v1434 = vunpack.c.l.b16 %v1144
        %v1435 = vunpack.c.l.b16 %v1145
        %v1436 = vunpack.c.l.b16 %v1146
        %v1437 = vunpack.c.l.b16 %v1147
        %v1438 = vunpack.c.l.b16 %v1148
        %v1439 = vunpack.c.l.b16 %v1149
        %v1440 = vunpack.c.l.b16 %v1150
        %v1441 = vunpack.c.l.b16 %v1151
        %v1442 = vunpack.c.l.b16 %v1152
        %v1443 = vunpack.c.l.b16 %v1153
        %v1444 = vunpack.c.l.b16 %v1154
        %v1445 = vunpack.c.l.b16 %v1155
        %v1446 = vunpack.c.l.b16 %v1156
        %v1447 = vunpack.c.l.b16 %v1157
        %v1448 = vunpack.c.l.b16 %v1158
        %v1449 = vunpack.c.l.b16 %v1159
        %v1450 = vunpack.c.l.b16 %v1160
        %v1451 = vunpack.c.l.b16 %v1161
        %v1452 = vunpack.c.l.b16 %v1162
        %v1453 = vunpack.c.l.b16 %v1163
        %v1454 = vunpack.c.l.b16 %v1164
        %v1455 = vunpack.c.l.b16 %v1165
        %v1456 = vunpack.c.l.b16 %v1166
        %v1457 = vunpack.c.l.b16 %v1167
        %v1458 = vunpack.c.l.b16 %v1168
        %v1459 = vunpack.c.l.b16 %v1169
        %v1460 = vunpack.c.l.b16 %v1170
        %v1461 = vunpack.c.l.b16 %v1171
        %v1462 = vunpack.c.l.b16 %v1172
        %v1463 = vpack.c.b16 %v1320, %v1319
        %v1464 = vpack.c.b16 %v1322, %v1321
        %v1465 = vpack.c.b16 %v1324, %v1323
        %v1466 = vpack.c.b16 %v1326, %v1325
        %v1467 = vpack.c.b16 %v1328, %v1327
        %v1468 = vpack.c.b16 %v1330, %v1329
        %v1469 = vpack.c.b16 %v1332, %v1331
        %v1470 = vpack.c.b16 %v1334, %v1333
        %v1471 = vpack.c.b16 %v1336, %v1335
        %v1472 = vpack.c.b16 %v1338, %v1337
        %v1473 = vpack.c.b16 %v1340, %v1339
        %v1474 = vpack.c.b16 %v1342, %v1341
        %v1475 = vpack.c.b16 %v1344, %v1343
        %v1476 = vpack.c.b16 %v1346, %v1345
        %v1477 = vpack.c.b16 %v1348, %v1347
        %v1478 = vpack.c.b16 %v1350, %v1349
        %v1479 = vpack.c.b16 %v1352, %v1351
        %v1480 = vpack.c.b16 %v1354, %v1353
        %v1481 = vpack.c.b16 %v1356, %v1355
        %v1482 = vpack.c.b16 %v1358, %v1357
        %v1483 = vpack.c.b16 %v1360, %v1359
        %v1484 = vpack.c.b16 %v1362, %v1361
        %v1485 = vpack.c.b16 %v1364, %v1363
        %v1486 = vpack.c.b16 %v1366, %v1365
        %v1487 = vpack.c.b16 %v1368, %v1367
        %v1488 = vpack.c.b16 %v1370, %v1369
        %v1489 = vpack.c.b16 %v1372, %v1371
        %v1490 = vpack.c.b16 %v1374, %v1373
        %v1491 = vpack.c.b16 %v1376, %v1375
        %v1492 = vpack.c.b16 %v1378, %v1377
        %v1493 = vpack.c.b16 %v1380, %v1379
        %v1494 = vpack.c.b16 %v1382, %v1381
        %v1495 = vpack.c.b16 %v1384, %v1383
        %v1496 = vpack.c.b16 %v1386, %v1385
        %v1497 = vpack.c.b16 %v1388, %v1387
        %v1498 = vpack.c.b16 %v1390, %v1389
        %v1499 = vpack.c.b16 %v1392, %v1391
        %v1500 = vpack.c.b16 %v1394, %v1393
        %v1501 = vpack.c.b16 %v1396, %v1395
        %v1502 = vpack.c.b16 %v1398, %v1397
        %v1503 = vpack.c.b16 %v1400, %v1399
        %v1504 = vpack.c.b16 %v1402, %v1401
        %v1505 = vpack.c.b16 %v1404, %v1403
        %v1506 = vpack.c.b16 %v1406, %v1405
        %v1507 = vpack.c.b16 %v1408, %v1407
        %v1508 = vpack.c.b16 %v1410, %v1409
        %v1509 = vpack.c.b16 %v1412, %v1411
        %v1510 = vpack.c.b16 %v1414, %v1413
        %v1511 = vpack.c.b16 %v1416, %v1415
        %v1512 = vpack.c.b16 %v1418, %v1417
        %v1513 = vpack.c.b16 %v1420, %v1419
        %v1514 = vpack.c.b16 %v1422, %v1421
        %v1515 = vpack.c.b16 %v1424, %v1423
        %v1516 = vpack.c.b16 %v1426, %v1425
        %v1517 = vpack.c.b16 %v1428, %v1427
        %v1518 = vpack.c.b16 %v1430, %v1429
        %v1519 = vpack.c.b16 %v1432, %v1431
        %v1520 = vpack.c.b16 %v1434, %v1433
        %v1521 = vpack.c.b16 %v1436, %v1435
        %v1522 = vpack.c.b16 %v1438, %v1437
        %v1523 = vpack.c.b16 %v1440, %v1439
        %v1524 = vpack.c.b16 %v1442, %v1441
        %v1525 = vpack.c.b16 %v1444, %v1443
        %v1526 = vpack.c.b16 %v1446, %v1445
        %v1527 = vpack.c.b16 %v1448, %v1447
        %v1528 = vpack.c.b16 %v1450, %v1449
        %v1529 = vpack.c.b16 %v1452, %v1451
        %v1530 = vpack.c.b16 %v1454, %v1453
        %v1531 = vpack.c.b16 %v1456, %v1455
        %v1532 = vpack.c.b16 %v1458, %v1457
        %v1533 = vpack.c.b16 %v1460, %v1459
        %v1534 = vpack.c.b16 %v1462, %v1461
        %1607 = vmatpush.bf16.msra.mxu0 %v1470
        %1608 = vmatpush.bf16.msra.mxu0 %v1469
        %1609 = vmatpush.bf16.msra.mxu0 %v1468
        %1610 = vmatpush.bf16.msra.mxu0 %v1467
        %1611 = vmatpush.bf16.msra.mxu0 %v1466
        %1612 = vmatpush.bf16.msra.mxu0 %v1465
        %1613 = vmatpush.bf16.msra.mxu0 %v1464
        %1614 = vmatpush.bf16.msra.mxu0 %v1463
        %1615 = vmatmul.bf16.gmra.mxu0 %v769
        %v1616 = vpop.f32.mrf.mxu0
        %v1617 = vadd.f32 %v1174, %v1616
        %v1618 = vpop.f32.mrf.mxu0
        %v1619 = vadd.f32 %v1174, %v1618
        %1620 = vmatmul.bf16.gmra.mxu0 %v770
        %v1621 = vpop.f32.mrf.mxu0
        %v1622 = vadd.f32 %v1174, %v1621
        %v1623 = vpop.f32.mrf.mxu0
        %v1624 = vadd.f32 %v1174, %v1623
        %1625 = vmatmul.bf16.gmra.mxu0 %v771
        %v1626 = vpop.f32.mrf.mxu0
        %v1627 = vadd.f32 %v1174, %v1626
        %v1628 = vpop.f32.mrf.mxu0
        %v1629 = vadd.f32 %v1174, %v1628
        %1630 = vmatmul.bf16.gmra.mxu0 %v772
        %v1631 = vpop.f32.mrf.mxu0
        %v1632 = vadd.f32 %v1174, %v1631
        %v1633 = vpop.f32.mrf.mxu0
        %v1634 = vadd.f32 %v1174, %v1633
        %1635 = vmatmul.bf16.gmra.mxu0 %v773
        %v1636 = vpop.f32.mrf.mxu0
        %v1637 = vadd.f32 %v1174, %v1636
        %v1638 = vpop.f32.mrf.mxu0
        %v1639 = vadd.f32 %v1174, %v1638
        %1640 = vmatmul.bf16.gmra.mxu0 %v774
        %v1641 = vpop.f32.mrf.mxu0
        %v1642 = vadd.f32 %v1174, %v1641
        %v1643 = vpop.f32.mrf.mxu0
        %v1644 = vadd.f32 %v1174, %v1643
        %1645 = vmatmul.bf16.gmra.mxu0 %v775
        %v1646 = vpop.f32.mrf.mxu0
        %v1647 = vadd.f32 %v1174, %v1646
        %v1648 = vpop.f32.mrf.mxu0
        %v1649 = vadd.f32 %v1174, %v1648
        %1650 = vmatmul.bf16.gmra.mxu0 %v776
        %v1651 = vpop.f32.mrf.mxu0
        %v1652 = vadd.f32 %v1174, %v1651
        %v1653 = vpop.f32.mrf.mxu0
        %v1654 = vadd.f32 %v1174, %v1653
        %1655 = vmatmul.bf16.gmra.mxu0 %v777
        %v1656 = vpop.f32.mrf.mxu0
        %v1657 = vadd.f32 %v1174, %v1656
        %v1658 = vpop.f32.mrf.mxu0
        %v1659 = vadd.f32 %v1174, %v1658
        %1660 = vmatmul.bf16.gmra.mxu0 %v778
        %v1661 = vpop.f32.mrf.mxu0
        %v1662 = vadd.f32 %v1174, %v1661
        %v1663 = vpop.f32.mrf.mxu0
        %v1664 = vadd.f32 %v1174, %v1663
        %1665 = vmatmul.bf16.gmra.mxu0 %v779
        %v1666 = vpop.f32.mrf.mxu0
        %v1667 = vadd.f32 %v1174, %v1666
        %v1668 = vpop.f32.mrf.mxu0
        %v1669 = vadd.f32 %v1174, %v1668
        %1670 = vmatmul.bf16.gmra.mxu0 %v780
        %v1671 = vpop.f32.mrf.mxu0
        %v1672 = vadd.f32 %v1174, %v1671
        %v1673 = vpop.f32.mrf.mxu0
        %v1674 = vadd.f32 %v1174, %v1673
        %1675 = vmatmul.bf16.gmra.mxu0 %v781
        %v1676 = vpop.f32.mrf.mxu0
        %v1677 = vadd.f32 %v1174, %v1676
        %v1678 = vpop.f32.mrf.mxu0
        %v1679 = vadd.f32 %v1174, %v1678
        %1680 = vmatmul.bf16.gmra.mxu0 %v782
        %v1681 = vpop.f32.mrf.mxu0
        %v1682 = vadd.f32 %v1174, %v1681
        %v1683 = vpop.f32.mrf.mxu0
        %v1684 = vadd.f32 %v1174, %v1683
        %1685 = vmatmul.bf16.gmra.mxu0 %v783
        %v1686 = vpop.f32.mrf.mxu0
        %v1687 = vadd.f32 %v1174, %v1686
        %v1688 = vpop.f32.mrf.mxu0
        %v1689 = vadd.f32 %v1174, %v1688
        %1690 = vmatmul.bf16.gmra.mxu0 %v784
        %v1691 = vpop.f32.mrf.mxu0
        %v1692 = vadd.f32 %v1174, %v1691
        %v1693 = vpop.f32.mrf.mxu0
        %v1694 = vadd.f32 %v1174, %v1693
        %1695 = vdwg.mxu0
        %1696 = vmatpush.bf16.msra.mxu0 %v1478
        %1697 = vmatpush.bf16.msra.mxu0 %v1477
        %1698 = vmatpush.bf16.msra.mxu0 %v1476
        %1699 = vmatpush.bf16.msra.mxu0 %v1475
        %1700 = vmatpush.bf16.msra.mxu0 %v1474
        %1701 = vmatpush.bf16.msra.mxu0 %v1473
        %1702 = vmatpush.bf16.msra.mxu0 %v1472
        %1703 = vmatpush.bf16.msra.mxu0 %v1471
        %1704 = vmatmul.bf16.gmra.mxu0 %v865
        %v1705 = vpop.f32.mrf.mxu0
        %v1706 = vadd.f32 %v1617, %v1705
        %v1707 = vpop.f32.mrf.mxu0
        %v1708 = vadd.f32 %v1619, %v1707
        %1709 = vmatmul.bf16.gmra.mxu0 %v866
        %v1710 = vpop.f32.mrf.mxu0
        %v1711 = vadd.f32 %v1622, %v1710
        %v1712 = vpop.f32.mrf.mxu0
        %v1713 = vadd.f32 %v1624, %v1712
        %1714 = vmatmul.bf16.gmra.mxu0 %v867
        %v1715 = vpop.f32.mrf.mxu0
        %v1716 = vadd.f32 %v1627, %v1715
        %v1717 = vpop.f32.mrf.mxu0
        %v1718 = vadd.f32 %v1629, %v1717
        %1719 = vmatmul.bf16.gmra.mxu0 %v868
        %v1720 = vpop.f32.mrf.mxu0
        %v1721 = vadd.f32 %v1632, %v1720
        %v1722 = vpop.f32.mrf.mxu0
        %v1723 = vadd.f32 %v1634, %v1722
        %1724 = vmatmul.bf16.gmra.mxu0 %v869
        %v1725 = vpop.f32.mrf.mxu0
        %v1726 = vadd.f32 %v1637, %v1725
        %v1727 = vpop.f32.mrf.mxu0
        %v1728 = vadd.f32 %v1639, %v1727
        %1729 = vmatmul.bf16.gmra.mxu0 %v870
        %v1730 = vpop.f32.mrf.mxu0
        %v1731 = vadd.f32 %v1642, %v1730
        %v1732 = vpop.f32.mrf.mxu0
        %v1733 = vadd.f32 %v1644, %v1732
        %1734 = vmatmul.bf16.gmra.mxu0 %v871
        %v1735 = vpop.f32.mrf.mxu0
        %v1736 = vadd.f32 %v1647, %v1735
        %v1737 = vpop.f32.mrf.mxu0
        %v1738 = vadd.f32 %v1649, %v1737
        %1739 = vmatmul.bf16.gmra.mxu0 %v872
        %v1740 = vpop.f32.mrf.mxu0
        %v1741 = vadd.f32 %v1652, %v1740
        %v1742 = vpop.f32.mrf.mxu0
        %v1743 = vadd.f32 %v1654, %v1742
        %1744 = vmatmul.bf16.gmra.mxu0 %v873
        %v1745 = vpop.f32.mrf.mxu0
        %v1746 = vadd.f32 %v1657, %v1745
        %v1747 = vpop.f32.mrf.mxu0
        %v1748 = vadd.f32 %v1659, %v1747
        %1749 = vmatmul.bf16.gmra.mxu0 %v874
        %v1750 = vpop.f32.mrf.mxu0
        %v1751 = vadd.f32 %v1662, %v1750
        %v1752 = vpop.f32.mrf.mxu0
        %v1753 = vadd.f32 %v1664, %v1752
        %1754 = vmatmul.bf16.gmra.mxu0 %v875
        %v1755 = vpop.f32.mrf.mxu0
        %v1756 = vadd.f32 %v1667, %v1755
        %v1757 = vpop.f32.mrf.mxu0
        %v1758 = vadd.f32 %v1669, %v1757
        %1759 = vmatmul.bf16.gmra.mxu0 %v876
        %v1760 = vpop.f32.mrf.mxu0
        %v1761 = vadd.f32 %v1672, %v1760
        %v1762 = vpop.f32.mrf.mxu0
        %v1763 = vadd.f32 %v1674, %v1762
        %1764 = vmatmul.bf16.gmra.mxu0 %v877
        %v1765 = vpop.f32.mrf.mxu0
        %v1766 = vadd.f32 %v1677, %v1765
        %v1767 = vpop.f32.mrf.mxu0
        %v1768 = vadd.f32 %v1679, %v1767
        %1769 = vmatmul.bf16.gmra.mxu0 %v878
        %v1770 = vpop.f32.mrf.mxu0
        %v1771 = vadd.f32 %v1682, %v1770
        %v1772 = vpop.f32.mrf.mxu0
        %v1773 = vadd.f32 %v1684, %v1772
        %1774 = vmatmul.bf16.gmra.mxu0 %v879
        %v1775 = vpop.f32.mrf.mxu0
        %v1776 = vadd.f32 %v1687, %v1775
        %v1777 = vpop.f32.mrf.mxu0
        %v1778 = vadd.f32 %v1689, %v1777
        %1779 = vmatmul.bf16.gmra.mxu0 %v880
        %v1780 = vpop.f32.mrf.mxu0
        %v1781 = vadd.f32 %v1692, %v1780
        %v1782 = vpop.f32.mrf.mxu0
        %v1783 = vadd.f32 %v1694, %v1782
        %1784 = vdwg.mxu0
        %1785 = vmatpush.bf16.msra.mxu0 %v1486
        %1786 = vmatpush.bf16.msra.mxu0 %v1485
        %1787 = vmatpush.bf16.msra.mxu0 %v1484
        %1788 = vmatpush.bf16.msra.mxu0 %v1483
        %1789 = vmatpush.bf16.msra.mxu0 %v1482
        %1790 = vmatpush.bf16.msra.mxu0 %v1481
        %1791 = vmatpush.bf16.msra.mxu0 %v1480
        %1792 = vmatpush.bf16.msra.mxu0 %v1479
        %1793 = vmatmul.bf16.gmra.mxu0 %v961
        %v1794 = vpop.f32.mrf.mxu0
        %v1795 = vadd.f32 %v1706, %v1794
        %v1796 = vpop.f32.mrf.mxu0
        %v1797 = vadd.f32 %v1708, %v1796
        %1798 = vmatmul.bf16.gmra.mxu0 %v962
        %v1799 = vpop.f32.mrf.mxu0
        %v1800 = vadd.f32 %v1711, %v1799
        %v1801 = vpop.f32.mrf.mxu0
        %v1802 = vadd.f32 %v1713, %v1801
        %1803 = vmatmul.bf16.gmra.mxu0 %v963
        %v1804 = vpop.f32.mrf.mxu0
        %v1805 = vadd.f32 %v1716, %v1804
        %v1806 = vpop.f32.mrf.mxu0
        %v1807 = vadd.f32 %v1718, %v1806
        %1808 = vmatmul.bf16.gmra.mxu0 %v964
        %v1809 = vpop.f32.mrf.mxu0
        %v1810 = vadd.f32 %v1721, %v1809
        %v1811 = vpop.f32.mrf.mxu0
        %v1812 = vadd.f32 %v1723, %v1811
        %1813 = vmatmul.bf16.gmra.mxu0 %v965
        %v1814 = vpop.f32.mrf.mxu0
        %v1815 = vadd.f32 %v1726, %v1814
        %v1816 = vpop.f32.mrf.mxu0
        %v1817 = vadd.f32 %v1728, %v1816
        %1818 = vmatmul.bf16.gmra.mxu0 %v966
        %v1819 = vpop.f32.mrf.mxu0
        %v1820 = vadd.f32 %v1731, %v1819
        %v1821 = vpop.f32.mrf.mxu0
        %v1822 = vadd.f32 %v1733, %v1821
        %1823 = vmatmul.bf16.gmra.mxu0 %v967
        %v1824 = vpop.f32.mrf.mxu0
        %v1825 = vadd.f32 %v1736, %v1824
        %v1826 = vpop.f32.mrf.mxu0
        %v1827 = vadd.f32 %v1738, %v1826
        %1828 = vmatmul.bf16.gmra.mxu0 %v968
        %v1829 = vpop.f32.mrf.mxu0
        %v1830 = vadd.f32 %v1741, %v1829
        %v1831 = vpop.f32.mrf.mxu0
        %v1832 = vadd.f32 %v1743, %v1831
        %1833 = vmatmul.bf16.gmra.mxu0 %v969
        %v1834 = vpop.f32.mrf.mxu0
        %v1835 = vadd.f32 %v1746, %v1834
        %v1836 = vpop.f32.mrf.mxu0
        %v1837 = vadd.f32 %v1748, %v1836
        %1838 = vmatmul.bf16.gmra.mxu0 %v970
        %v1839 = vpop.f32.mrf.mxu0
        %v1840 = vadd.f32 %v1751, %v1839
        %v1841 = vpop.f32.mrf.mxu0
        %v1842 = vadd.f32 %v1753, %v1841
        %1843 = vmatmul.bf16.gmra.mxu0 %v971
        %v1844 = vpop.f32.mrf.mxu0
        %v1845 = vadd.f32 %v1756, %v1844
        %v1846 = vpop.f32.mrf.mxu0
        %v1847 = vadd.f32 %v1758, %v1846
        %1848 = vmatmul.bf16.gmra.mxu0 %v972
        %v1849 = vpop.f32.mrf.mxu0
        %v1850 = vadd.f32 %v1761, %v1849
        %v1851 = vpop.f32.mrf.mxu0
        %v1852 = vadd.f32 %v1763, %v1851
        %1853 = vmatmul.bf16.gmra.mxu0 %v973
        %v1854 = vpop.f32.mrf.mxu0
        %v1855 = vadd.f32 %v1766, %v1854
        %v1856 = vpop.f32.mrf.mxu0
        %v1857 = vadd.f32 %v1768, %v1856
        %1858 = vmatmul.bf16.gmra.mxu0 %v974
        %v1859 = vpop.f32.mrf.mxu0
        %v1860 = vadd.f32 %v1771, %v1859
        %v1861 = vpop.f32.mrf.mxu0
        %v1862 = vadd.f32 %v1773, %v1861
        %1863 = vmatmul.bf16.gmra.mxu0 %v975
        %v1864 = vpop.f32.mrf.mxu0
        %v1865 = vadd.f32 %v1776, %v1864
        %v1866 = vpop.f32.mrf.mxu0
        %v1867 = vadd.f32 %v1778, %v1866
        %1868 = vmatmul.bf16.gmra.mxu0 %v976
        %v1869 = vpop.f32.mrf.mxu0
        %v1870 = vadd.f32 %v1781, %v1869
        %v1871 = vpop.f32.mrf.mxu0
        %v1872 = vadd.f32 %v1783, %v1871
        %1873 = vdwg.mxu0
        %1874 = vmatpush.bf16.msra.mxu0 %v1494
        %1875 = vmatpush.bf16.msra.mxu0 %v1493
        %1876 = vmatpush.bf16.msra.mxu0 %v1492
        %1877 = vmatpush.bf16.msra.mxu0 %v1491
        %1878 = vmatpush.bf16.msra.mxu0 %v1490
        %1879 = vmatpush.bf16.msra.mxu0 %v1489
        %1880 = vmatpush.bf16.msra.mxu0 %v1488
        %1881 = vmatpush.bf16.msra.mxu0 %v1487
        %1882 = vmatmul.bf16.gmra.mxu0 %v770
        %v1883 = vpop.f32.mrf.mxu0
        %v1884 = vadd.f32 %v1795, %v1883
        %v1885 = vpop.f32.mrf.mxu0
        %v1886 = vadd.f32 %v1797, %v1885
        %1887 = vmatmul.bf16.gmra.mxu0 %v771
        %v1888 = vpop.f32.mrf.mxu0
        %v1889 = vadd.f32 %v1800, %v1888
        %v1890 = vpop.f32.mrf.mxu0
        %v1891 = vadd.f32 %v1802, %v1890
        %1892 = vmatmul.bf16.gmra.mxu0 %v772
        %v1893 = vpop.f32.mrf.mxu0
        %v1894 = vadd.f32 %v1805, %v1893
        %v1895 = vpop.f32.mrf.mxu0
        %v1896 = vadd.f32 %v1807, %v1895
        %1897 = vmatmul.bf16.gmra.mxu0 %v773
        %v1898 = vpop.f32.mrf.mxu0
        %v1899 = vadd.f32 %v1810, %v1898
        %v1900 = vpop.f32.mrf.mxu0
        %v1901 = vadd.f32 %v1812, %v1900
        %1902 = vmatmul.bf16.gmra.mxu0 %v774
        %v1903 = vpop.f32.mrf.mxu0
        %v1904 = vadd.f32 %v1815, %v1903
        %v1905 = vpop.f32.mrf.mxu0
        %v1906 = vadd.f32 %v1817, %v1905
        %1907 = vmatmul.bf16.gmra.mxu0 %v775
        %v1908 = vpop.f32.mrf.mxu0
        %v1909 = vadd.f32 %v1820, %v1908
        %v1910 = vpop.f32.mrf.mxu0
        %v1911 = vadd.f32 %v1822, %v1910
        %1912 = vmatmul.bf16.gmra.mxu0 %v776
        %v1913 = vpop.f32.mrf.mxu0
        %v1914 = vadd.f32 %v1825, %v1913
        %v1915 = vpop.f32.mrf.mxu0
        %v1916 = vadd.f32 %v1827, %v1915
        %1917 = vmatmul.bf16.gmra.mxu0 %v777
        %v1918 = vpop.f32.mrf.mxu0
        %v1919 = vadd.f32 %v1830, %v1918
        %v1920 = vpop.f32.mrf.mxu0
        %v1921 = vadd.f32 %v1832, %v1920
        %1922 = vmatmul.bf16.gmra.mxu0 %v778
        %v1923 = vpop.f32.mrf.mxu0
        %v1924 = vadd.f32 %v1835, %v1923
        %v1925 = vpop.f32.mrf.mxu0
        %v1926 = vadd.f32 %v1837, %v1925
        %1927 = vmatmul.bf16.gmra.mxu0 %v779
        %v1928 = vpop.f32.mrf.mxu0
        %v1929 = vadd.f32 %v1840, %v1928
        %v1930 = vpop.f32.mrf.mxu0
        %v1931 = vadd.f32 %v1842, %v1930
        %1932 = vmatmul.bf16.gmra.mxu0 %v780
        %v1933 = vpop.f32.mrf.mxu0
        %v1934 = vadd.f32 %v1845, %v1933
        %v1935 = vpop.f32.mrf.mxu0
        %v1936 = vadd.f32 %v1847, %v1935
        %1937 = vmatmul.bf16.gmra.mxu0 %v781
        %v1938 = vpop.f32.mrf.mxu0
        %v1939 = vadd.f32 %v1850, %v1938
        %v1940 = vpop.f32.mrf.mxu0
        %v1941 = vadd.f32 %v1852, %v1940
        %1942 = vmatmul.bf16.gmra.mxu0 %v782
        %v1943 = vpop.f32.mrf.mxu0
        %v1944 = vadd.f32 %v1855, %v1943
        %v1945 = vpop.f32.mrf.mxu0
        %v1946 = vadd.f32 %v1857, %v1945
        %1947 = vmatmul.bf16.gmra.mxu0 %v783
        %v1948 = vpop.f32.mrf.mxu0
        %v1949 = vadd.f32 %v1860, %v1948
        %v1950 = vpop.f32.mrf.mxu0
        %v1951 = vadd.f32 %v1862, %v1950
        %1952 = vmatmul.bf16.gmra.mxu0 %v784
        %v1953 = vpop.f32.mrf.mxu0
        %v1954 = vadd.f32 %v1865, %v1953
        %v1955 = vpop.f32.mrf.mxu0
        %v1956 = vadd.f32 %v1867, %v1955
        %1957 = vmatmul.bf16.gmra.mxu0 %v997
        %v1958 = vpop.f32.mrf.mxu0
        %v1959 = vadd.f32 %v1870, %v1958
        %v1960 = vpop.f32.mrf.mxu0
        %v1961 = vadd.f32 %v1872, %v1960
        %1962 = vdwg.mxu0
        %1963 = vmatpush.bf16.msra.mxu0 %v1502
        %1964 = vmatpush.bf16.msra.mxu0 %v1501
        %1965 = vmatpush.bf16.msra.mxu0 %v1500
        %1966 = vmatpush.bf16.msra.mxu0 %v1499
        %1967 = vmatpush.bf16.msra.mxu0 %v1498
        %1968 = vmatpush.bf16.msra.mxu0 %v1497
        %1969 = vmatpush.bf16.msra.mxu0 %v1496
        %1970 = vmatpush.bf16.msra.mxu0 %v1495
        %1971 = vmatmul.bf16.gmra.mxu0 %v866
        %v1972 = vpop.f32.mrf.mxu0
        %v1973 = vadd.f32 %v1884, %v1972
        %v1974 = vpop.f32.mrf.mxu0
        %v1975 = vadd.f32 %v1886, %v1974
        %1976 = vmatmul.bf16.gmra.mxu0 %v867
        %v1977 = vpop.f32.mrf.mxu0
        %v1978 = vadd.f32 %v1889, %v1977
        %v1979 = vpop.f32.mrf.mxu0
        %v1980 = vadd.f32 %v1891, %v1979
        %1981 = vmatmul.bf16.gmra.mxu0 %v868
        %v1982 = vpop.f32.mrf.mxu0
        %v1983 = vadd.f32 %v1894, %v1982
        %v1984 = vpop.f32.mrf.mxu0
        %v1985 = vadd.f32 %v1896, %v1984
        %1986 = vmatmul.bf16.gmra.mxu0 %v869
        %v1987 = vpop.f32.mrf.mxu0
        %v1988 = vadd.f32 %v1899, %v1987
        %v1989 = vpop.f32.mrf.mxu0
        %v1990 = vadd.f32 %v1901, %v1989
        %1991 = vmatmul.bf16.gmra.mxu0 %v870
        %v1992 = vpop.f32.mrf.mxu0
        %v1993 = vadd.f32 %v1904, %v1992
        %v1994 = vpop.f32.mrf.mxu0
        %v1995 = vadd.f32 %v1906, %v1994
        %1996 = vmatmul.bf16.gmra.mxu0 %v871
        %v1997 = vpop.f32.mrf.mxu0
        %v1998 = vadd.f32 %v1909, %v1997
        %v1999 = vpop.f32.mrf.mxu0
        %v2000 = vadd.f32 %v1911, %v1999
        %2001 = vmatmul.bf16.gmra.mxu0 %v872
        %v2002 = vpop.f32.mrf.mxu0
        %v2003 = vadd.f32 %v1914, %v2002
        %v2004 = vpop.f32.mrf.mxu0
        %v2005 = vadd.f32 %v1916, %v2004
        %2006 = vmatmul.bf16.gmra.mxu0 %v873
        %v2007 = vpop.f32.mrf.mxu0
        %v2008 = vadd.f32 %v1919, %v2007
        %v2009 = vpop.f32.mrf.mxu0
        %v2010 = vadd.f32 %v1921, %v2009
        %2011 = vmatmul.bf16.gmra.mxu0 %v874
        %v2012 = vpop.f32.mrf.mxu0
        %v2013 = vadd.f32 %v1924, %v2012
        %v2014 = vpop.f32.mrf.mxu0
        %v2015 = vadd.f32 %v1926, %v2014
        %2016 = vmatmul.bf16.gmra.mxu0 %v875
        %v2017 = vpop.f32.mrf.mxu0
        %v2018 = vadd.f32 %v1929, %v2017
        %v2019 = vpop.f32.mrf.mxu0
        %v2020 = vadd.f32 %v1931, %v2019
        %2021 = vmatmul.bf16.gmra.mxu0 %v876
        %v2022 = vpop.f32.mrf.mxu0
        %v2023 = vadd.f32 %v1934, %v2022
        %v2024 = vpop.f32.mrf.mxu0
        %v2025 = vadd.f32 %v1936, %v2024
        %2026 = vmatmul.bf16.gmra.mxu0 %v877
        %v2027 = vpop.f32.mrf.mxu0
        %v2028 = vadd.f32 %v1939, %v2027
        %v2029 = vpop.f32.mrf.mxu0
        %v2030 = vadd.f32 %v1941, %v2029
        %2031 = vmatmul.bf16.gmra.mxu0 %v878
        %v2032 = vpop.f32.mrf.mxu0
        %v2033 = vadd.f32 %v1944, %v2032
        %v2034 = vpop.f32.mrf.mxu0
        %v2035 = vadd.f32 %v1946, %v2034
        %2036 = vmatmul.bf16.gmra.mxu0 %v879
        %v2037 = vpop.f32.mrf.mxu0
        %v2038 = vadd.f32 %v1949, %v2037
        %v2039 = vpop.f32.mrf.mxu0
        %v2040 = vadd.f32 %v1951, %v2039
        %2041 = vmatmul.bf16.gmra.mxu0 %v880
        %v2042 = vpop.f32.mrf.mxu0
        %v2043 = vadd.f32 %v1954, %v2042
        %v2044 = vpop.f32.mrf.mxu0
        %v2045 = vadd.f32 %v1956, %v2044
        %2046 = vmatmul.bf16.gmra.mxu0 %v1003
        %v2047 = vpop.f32.mrf.mxu0
        %v2048 = vadd.f32 %v1959, %v2047
        %v2049 = vpop.f32.mrf.mxu0
        %v2050 = vadd.f32 %v1961, %v2049
        %2051 = vdwg.mxu0
        %2052 = vmatpush.bf16.msra.mxu0 %v1510
        %2053 = vmatpush.bf16.msra.mxu0 %v1509
        %2054 = vmatpush.bf16.msra.mxu0 %v1508
        %2055 = vmatpush.bf16.msra.mxu0 %v1507
        %2056 = vmatpush.bf16.msra.mxu0 %v1506
        %2057 = vmatpush.bf16.msra.mxu0 %v1505
        %2058 = vmatpush.bf16.msra.mxu0 %v1504
        %2059 = vmatpush.bf16.msra.mxu0 %v1503
        %2060 = vmatmul.bf16.gmra.mxu0 %v962
        %v2061 = vpop.f32.mrf.mxu0
        %v2062 = vadd.f32 %v1973, %v2061
        %v2063 = vpop.f32.mrf.mxu0
        %v2064 = vadd.f32 %v1975, %v2063
        %2065 = vmatmul.bf16.gmra.mxu0 %v963
        %v2066 = vpop.f32.mrf.mxu0
        %v2067 = vadd.f32 %v1978, %v2066
        %v2068 = vpop.f32.mrf.mxu0
        %v2069 = vadd.f32 %v1980, %v2068
        %2070 = vmatmul.bf16.gmra.mxu0 %v964
        %v2071 = vpop.f32.mrf.mxu0
        %v2072 = vadd.f32 %v1983, %v2071
        %v2073 = vpop.f32.mrf.mxu0
        %v2074 = vadd.f32 %v1985, %v2073
        %2075 = vmatmul.bf16.gmra.mxu0 %v965
        %v2076 = vpop.f32.mrf.mxu0
        %v2077 = vadd.f32 %v1988, %v2076
        %v2078 = vpop.f32.mrf.mxu0
        %v2079 = vadd.f32 %v1990, %v2078
        %2080 = vmatmul.bf16.gmra.mxu0 %v966
        %v2081 = vpop.f32.mrf.mxu0
        %v2082 = vadd.f32 %v1993, %v2081
        %v2083 = vpop.f32.mrf.mxu0
        %v2084 = vadd.f32 %v1995, %v2083
        %2085 = vmatmul.bf16.gmra.mxu0 %v967
        %v2086 = vpop.f32.mrf.mxu0
        %v2087 = vadd.f32 %v1998, %v2086
        %v2088 = vpop.f32.mrf.mxu0
        %v2089 = vadd.f32 %v2000, %v2088
        %2090 = vmatmul.bf16.gmra.mxu0 %v968
        %v2091 = vpop.f32.mrf.mxu0
        %v2092 = vadd.f32 %v2003, %v2091
        %v2093 = vpop.f32.mrf.mxu0
        %v2094 = vadd.f32 %v2005, %v2093
        %2095 = vmatmul.bf16.gmra.mxu0 %v969
        %v2096 = vpop.f32.mrf.mxu0
        %v2097 = vadd.f32 %v2008, %v2096
        %v2098 = vpop.f32.mrf.mxu0
        %v2099 = vadd.f32 %v2010, %v2098
        %2100 = vmatmul.bf16.gmra.mxu0 %v970
        %v2101 = vpop.f32.mrf.mxu0
        %v2102 = vadd.f32 %v2013, %v2101
        %v2103 = vpop.f32.mrf.mxu0
        %v2104 = vadd.f32 %v2015, %v2103
        %2105 = vmatmul.bf16.gmra.mxu0 %v971
        %v2106 = vpop.f32.mrf.mxu0
        %v2107 = vadd.f32 %v2018, %v2106
        %v2108 = vpop.f32.mrf.mxu0
        %v2109 = vadd.f32 %v2020, %v2108
        %2110 = vmatmul.bf16.gmra.mxu0 %v972
        %v2111 = vpop.f32.mrf.mxu0
        %v2112 = vadd.f32 %v2023, %v2111
        %v2113 = vpop.f32.mrf.mxu0
        %v2114 = vadd.f32 %v2025, %v2113
        %2115 = vmatmul.bf16.gmra.mxu0 %v973
        %v2116 = vpop.f32.mrf.mxu0
        %v2117 = vadd.f32 %v2028, %v2116
        %v2118 = vpop.f32.mrf.mxu0
        %v2119 = vadd.f32 %v2030, %v2118
        %2120 = vmatmul.bf16.gmra.mxu0 %v974
        %v2121 = vpop.f32.mrf.mxu0
        %v2122 = vadd.f32 %v2033, %v2121
        %v2123 = vpop.f32.mrf.mxu0
        %v2124 = vadd.f32 %v2035, %v2123
        %2125 = vmatmul.bf16.gmra.mxu0 %v975
        %v2126 = vpop.f32.mrf.mxu0
        %v2127 = vadd.f32 %v2038, %v2126
        %v2128 = vpop.f32.mrf.mxu0
        %v2129 = vadd.f32 %v2040, %v2128
        %2130 = vmatmul.bf16.gmra.mxu0 %v976
        %v2131 = vpop.f32.mrf.mxu0
        %v2132 = vadd.f32 %v2043, %v2131
        %v2133 = vpop.f32.mrf.mxu0
        %v2134 = vadd.f32 %v2045, %v2133
        %2135 = vmatmul.bf16.gmra.mxu0 %v1009
        %v2136 = vpop.f32.mrf.mxu0
        %v2137 = vadd.f32 %v2048, %v2136
        %v2138 = vpop.f32.mrf.mxu0
        %v2139 = vadd.f32 %v2050, %v2138
        %2140 = vdwg.mxu0
        %2141 = vmatpush.bf16.msra.mxu0 %v1518
        %2142 = vmatpush.bf16.msra.mxu0 %v1517
        %2143 = vmatpush.bf16.msra.mxu0 %v1516
        %2144 = vmatpush.bf16.msra.mxu0 %v1515
        %2145 = vmatpush.bf16.msra.mxu0 %v1514
        %2146 = vmatpush.bf16.msra.mxu0 %v1513
        %2147 = vmatpush.bf16.msra.mxu0 %v1512
        %2148 = vmatpush.bf16.msra.mxu0 %v1511
        %2149 = vmatmul.bf16.gmra.mxu0 %v771
        %v2150 = vpop.f32.mrf.mxu0
        %v2151 = vadd.f32 %v2062, %v2150
        %v2152 = vpop.f32.mrf.mxu0
        %v2153 = vadd.f32 %v2064, %v2152
        %2154 = vmatmul.bf16.gmra.mxu0 %v772
        %v2155 = vpop.f32.mrf.mxu0
        %v2156 = vadd.f32 %v2067, %v2155
        %v2157 = vpop.f32.mrf.mxu0
        %v2158 = vadd.f32 %v2069, %v2157
        %2159 = vmatmul.bf16.gmra.mxu0 %v773
        %v2160 = vpop.f32.mrf.mxu0
        %v2161 = vadd.f32 %v2072, %v2160
        %v2162 = vpop.f32.mrf.mxu0
        %v2163 = vadd.f32 %v2074, %v2162
        %2164 = vmatmul.bf16.gmra.mxu0 %v774
        %v2165 = vpop.f32.mrf.mxu0
        %v2166 = vadd.f32 %v2077, %v2165
        %v2167 = vpop.f32.mrf.mxu0
        %v2168 = vadd.f32 %v2079, %v2167
        %2169 = vmatmul.bf16.gmra.mxu0 %v775
        %v2170 = vpop.f32.mrf.mxu0
        %v2171 = vadd.f32 %v2082, %v2170
        %v2172 = vpop.f32.mrf.mxu0
        %v2173 = vadd.f32 %v2084, %v2172
        %2174 = vmatmul.bf16.gmra.mxu0 %v776
        %v2175 = vpop.f32.mrf.mxu0
        %v2176 = vadd.f32 %v2087, %v2175
        %v2177 = vpop.f32.mrf.mxu0
        %v2178 = vadd.f32 %v2089, %v2177
        %2179 = vmatmul.bf16.gmra.mxu0 %v777
        %v2180 = vpop.f32.mrf.mxu0
        %v2181 = vadd.f32 %v2092, %v2180
        %v2182 = vpop.f32.mrf.mxu0
        %v2183 = vadd.f32 %v2094, %v2182
        %2184 = vmatmul.bf16.gmra.mxu0 %v778
        %v2185 = vpop.f32.mrf.mxu0
        %v2186 = vadd.f32 %v2097, %v2185
        %v2187 = vpop.f32.mrf.mxu0
        %v2188 = vadd.f32 %v2099, %v2187
        %2189 = vmatmul.bf16.gmra.mxu0 %v779
        %v2190 = vpop.f32.mrf.mxu0
        %v2191 = vadd.f32 %v2102, %v2190
        %v2192 = vpop.f32.mrf.mxu0
        %v2193 = vadd.f32 %v2104, %v2192
        %2194 = vmatmul.bf16.gmra.mxu0 %v780
        %v2195 = vpop.f32.mrf.mxu0
        %v2196 = vadd.f32 %v2107, %v2195
        %v2197 = vpop.f32.mrf.mxu0
        %v2198 = vadd.f32 %v2109, %v2197
        %2199 = vmatmul.bf16.gmra.mxu0 %v781
        %v2200 = vpop.f32.mrf.mxu0
        %v2201 = vadd.f32 %v2112, %v2200
        %v2202 = vpop.f32.mrf.mxu0
        %v2203 = vadd.f32 %v2114, %v2202
        %2204 = vmatmul.bf16.gmra.mxu0 %v782
        %v2205 = vpop.f32.mrf.mxu0
        %v2206 = vadd.f32 %v2117, %v2205
        %v2207 = vpop.f32.mrf.mxu0
        %v2208 = vadd.f32 %v2119, %v2207
        %2209 = vmatmul.bf16.gmra.mxu0 %v783
        %v2210 = vpop.f32.mrf.mxu0
        %v2211 = vadd.f32 %v2122, %v2210
        %v2212 = vpop.f32.mrf.mxu0
        %v2213 = vadd.f32 %v2124, %v2212
        %2214 = vmatmul.bf16.gmra.mxu0 %v784
        %v2215 = vpop.f32.mrf.mxu0
        %v2216 = vadd.f32 %v2127, %v2215
        %v2217 = vpop.f32.mrf.mxu0
        %v2218 = vadd.f32 %v2129, %v2217
        %2219 = vmatmul.bf16.gmra.mxu0 %v997
        %v2220 = vpop.f32.mrf.mxu0
        %v2221 = vadd.f32 %v2132, %v2220
        %v2222 = vpop.f32.mrf.mxu0
        %v2223 = vadd.f32 %v2134, %v2222
        %2224 = vmatmul.bf16.gmra.mxu0 %v1015
        %v2225 = vpop.f32.mrf.mxu0
        %v2226 = vadd.f32 %v2137, %v2225
        %v2227 = vpop.f32.mrf.mxu0
        %v2228 = vadd.f32 %v2139, %v2227
        %2229 = vdwg.mxu0
        %2230 = vmatpush.bf16.msra.mxu0 %v1526
        %2231 = vmatpush.bf16.msra.mxu0 %v1525
        %2232 = vmatpush.bf16.msra.mxu0 %v1524
        %2233 = vmatpush.bf16.msra.mxu0 %v1523
        %2234 = vmatpush.bf16.msra.mxu0 %v1522
        %2235 = vmatpush.bf16.msra.mxu0 %v1521
        %2236 = vmatpush.bf16.msra.mxu0 %v1520
        %2237 = vmatpush.bf16.msra.mxu0 %v1519
        %2238 = vmatmul.bf16.gmra.mxu0 %v867
        %v2239 = vpop.f32.mrf.mxu0
        %v2240 = vadd.f32 %v2151, %v2239
        %v2241 = vpop.f32.mrf.mxu0
        %v2242 = vadd.f32 %v2153, %v2241
        %2243 = vmatmul.bf16.gmra.mxu0 %v868
        %v2244 = vpop.f32.mrf.mxu0
        %v2245 = vadd.f32 %v2156, %v2244
        %v2246 = vpop.f32.mrf.mxu0
        %v2247 = vadd.f32 %v2158, %v2246
        %2248 = vmatmul.bf16.gmra.mxu0 %v869
        %v2249 = vpop.f32.mrf.mxu0
        %v2250 = vadd.f32 %v2161, %v2249
        %v2251 = vpop.f32.mrf.mxu0
        %v2252 = vadd.f32 %v2163, %v2251
        %2253 = vmatmul.bf16.gmra.mxu0 %v870
        %v2254 = vpop.f32.mrf.mxu0
        %v2255 = vadd.f32 %v2166, %v2254
        %v2256 = vpop.f32.mrf.mxu0
        %v2257 = vadd.f32 %v2168, %v2256
        %2258 = vmatmul.bf16.gmra.mxu0 %v871
        %v2259 = vpop.f32.mrf.mxu0
        %v2260 = vadd.f32 %v2171, %v2259
        %v2261 = vpop.f32.mrf.mxu0
        %v2262 = vadd.f32 %v2173, %v2261
        %2263 = vmatmul.bf16.gmra.mxu0 %v872
        %v2264 = vpop.f32.mrf.mxu0
        %v2265 = vadd.f32 %v2176, %v2264
        %v2266 = vpop.f32.mrf.mxu0
        %v2267 = vadd.f32 %v2178, %v2266
        %2268 = vmatmul.bf16.gmra.mxu0 %v873
        %v2269 = vpop.f32.mrf.mxu0
        %v2270 = vadd.f32 %v2181, %v2269
        %v2271 = vpop.f32.mrf.mxu0
        %v2272 = vadd.f32 %v2183, %v2271
        %2273 = vmatmul.bf16.gmra.mxu0 %v874
        %v2274 = vpop.f32.mrf.mxu0
        %v2275 = vadd.f32 %v2186, %v2274
        %v2276 = vpop.f32.mrf.mxu0
        %v2277 = vadd.f32 %v2188, %v2276
        %2278 = vmatmul.bf16.gmra.mxu0 %v875
        %v2279 = vpop.f32.mrf.mxu0
        %v2280 = vadd.f32 %v2191, %v2279
        %v2281 = vpop.f32.mrf.mxu0
        %v2282 = vadd.f32 %v2193, %v2281
        %2283 = vmatmul.bf16.gmra.mxu0 %v876
        %v2284 = vpop.f32.mrf.mxu0
        %v2285 = vadd.f32 %v2196, %v2284
        %v2286 = vpop.f32.mrf.mxu0
        %v2287 = vadd.f32 %v2198, %v2286
        %2288 = vmatmul.bf16.gmra.mxu0 %v877
        %v2289 = vpop.f32.mrf.mxu0
        %v2290 = vadd.f32 %v2201, %v2289
        %v2291 = vpop.f32.mrf.mxu0
        %v2292 = vadd.f32 %v2203, %v2291
        %2293 = vmatmul.bf16.gmra.mxu0 %v878
        %v2294 = vpop.f32.mrf.mxu0
        %v2295 = vadd.f32 %v2206, %v2294
        %v2296 = vpop.f32.mrf.mxu0
        %v2297 = vadd.f32 %v2208, %v2296
        %2298 = vmatmul.bf16.gmra.mxu0 %v879
        %v2299 = vpop.f32.mrf.mxu0
        %v2300 = vadd.f32 %v2211, %v2299
        %v2301 = vpop.f32.mrf.mxu0
        %v2302 = vadd.f32 %v2213, %v2301
        %2303 = vmatmul.bf16.gmra.mxu0 %v880
        %v2304 = vpop.f32.mrf.mxu0
        %v2305 = vadd.f32 %v2216, %v2304
        %v2306 = vpop.f32.mrf.mxu0
        %v2307 = vadd.f32 %v2218, %v2306
        %2308 = vmatmul.bf16.gmra.mxu0 %v1003
        %v2309 = vpop.f32.mrf.mxu0
        %v2310 = vadd.f32 %v2221, %v2309
        %v2311 = vpop.f32.mrf.mxu0
        %v2312 = vadd.f32 %v2223, %v2311
        %2313 = vmatmul.bf16.gmra.mxu0 %v1021
        %v2314 = vpop.f32.mrf.mxu0
        %v2315 = vadd.f32 %v2226, %v2314
        %v2316 = vpop.f32.mrf.mxu0
        %v2317 = vadd.f32 %v2228, %v2316
        %2318 = vdwg.mxu0
        %2319 = vmatpush.bf16.msra.mxu0 %v1534
        %2320 = vmatpush.bf16.msra.mxu0 %v1533
        %2321 = vmatpush.bf16.msra.mxu0 %v1532
        %2322 = vmatpush.bf16.msra.mxu0 %v1531
        %2323 = vmatpush.bf16.msra.mxu0 %v1530
        %2324 = vmatpush.bf16.msra.mxu0 %v1529
        %2325 = vmatpush.bf16.msra.mxu0 %v1528
        %2326 = vmatpush.bf16.msra.mxu0 %v1527
        %2327 = vmatmul.bf16.gmra.mxu0 %v963
        %v2328 = vpop.f32.mrf.mxu0
        %v2329 = vadd.f32 %v2240, %v2328
        %v2330 = vpop.f32.mrf.mxu0
        %v2331 = vadd.f32 %v2242, %v2330
        %2332 = vmatmul.bf16.gmra.mxu0 %v964
        %v2333 = vpop.f32.mrf.mxu0
        %v2334 = vadd.f32 %v2245, %v2333
        %v2335 = vpop.f32.mrf.mxu0
        %v2336 = vadd.f32 %v2247, %v2335
        %2337 = vmatmul.bf16.gmra.mxu0 %v965
        %v2338 = vpop.f32.mrf.mxu0
        %v2339 = vadd.f32 %v2250, %v2338
        %v2340 = vpop.f32.mrf.mxu0
        %v2341 = vadd.f32 %v2252, %v2340
        %2342 = vmatmul.bf16.gmra.mxu0 %v966
        %v2343 = vpop.f32.mrf.mxu0
        %v2344 = vadd.f32 %v2255, %v2343
        %v2345 = vpop.f32.mrf.mxu0
        %v2346 = vadd.f32 %v2257, %v2345
        %2347 = vmatmul.bf16.gmra.mxu0 %v967
        %v2348 = vpop.f32.mrf.mxu0
        %v2349 = vadd.f32 %v2260, %v2348
        %v2350 = vpop.f32.mrf.mxu0
        %v2351 = vadd.f32 %v2262, %v2350
        %2352 = vmatmul.bf16.gmra.mxu0 %v968
        %v2353 = vpop.f32.mrf.mxu0
        %v2354 = vadd.f32 %v2265, %v2353
        %v2355 = vpop.f32.mrf.mxu0
        %v2356 = vadd.f32 %v2267, %v2355
        %2357 = vmatmul.bf16.gmra.mxu0 %v969
        %v2358 = vpop.f32.mrf.mxu0
        %v2359 = vadd.f32 %v2270, %v2358
        %v2360 = vpop.f32.mrf.mxu0
        %v2361 = vadd.f32 %v2272, %v2360
        %2362 = vmatmul.bf16.gmra.mxu0 %v970
        %v2363 = vpop.f32.mrf.mxu0
        %v2364 = vadd.f32 %v2275, %v2363
        %v2365 = vpop.f32.mrf.mxu0
        %v2366 = vadd.f32 %v2277, %v2365
        %2367 = vmatmul.bf16.gmra.mxu0 %v971
        %v2368 = vpop.f32.mrf.mxu0
        %v2369 = vadd.f32 %v2280, %v2368
        %v2370 = vpop.f32.mrf.mxu0
        %v2371 = vadd.f32 %v2282, %v2370
        %2372 = vmatmul.bf16.gmra.mxu0 %v972
        %v2373 = vpop.f32.mrf.mxu0
        %v2374 = vadd.f32 %v2285, %v2373
        %v2375 = vpop.f32.mrf.mxu0
        %v2376 = vadd.f32 %v2287, %v2375
        %2377 = vmatmul.bf16.gmra.mxu0 %v973
        %v2378 = vpop.f32.mrf.mxu0
        %v2379 = vadd.f32 %v2290, %v2378
        %v2380 = vpop.f32.mrf.mxu0
        %v2381 = vadd.f32 %v2292, %v2380
        %2382 = vmatmul.bf16.gmra.mxu0 %v974
        %v2383 = vpop.f32.mrf.mxu0
        %v2384 = vadd.f32 %v2295, %v2383
        %v2385 = vpop.f32.mrf.mxu0
        %v2386 = vadd.f32 %v2297, %v2385
        %2387 = vmatmul.bf16.gmra.mxu0 %v975
        %v2388 = vpop.f32.mrf.mxu0
        %v2389 = vadd.f32 %v2300, %v2388
        %v2390 = vpop.f32.mrf.mxu0
        %v2391 = vadd.f32 %v2302, %v2390
        %2392 = vmatmul.bf16.gmra.mxu0 %v976
        %v2393 = vpop.f32.mrf.mxu0
        %v2394 = vadd.f32 %v2305, %v2393
        %v2395 = vpop.f32.mrf.mxu0
        %v2396 = vadd.f32 %v2307, %v2395
        %2397 = vmatmul.bf16.gmra.mxu0 %v1009
        %v2398 = vpop.f32.mrf.mxu0
        %v2399 = vadd.f32 %v2310, %v2398
        %v2400 = vpop.f32.mrf.mxu0
        %v2401 = vadd.f32 %v2312, %v2400
        %2402 = vmatmul.bf16.gmra.mxu0 %v1027
        %v2403 = vpop.f32.mrf.mxu0
        %v2404 = vadd.f32 %v2315, %v2403
        %v2405 = vpop.f32.mrf.mxu0
        %v2406 = vadd.f32 %v2317, %v2405
        %2407 = vdwg.mxu0
        %v2408 = vmax.f32 %v2329, 0.0
        %v2409 = vmax.f32 %v2331, 0.0
        %v2410 = vmax.f32 %v2334, 0.0
        %v2411 = vmax.f32 %v2336, 0.0
        %v2412 = vmax.f32 %v2339, 0.0
        %v2413 = vmax.f32 %v2341, 0.0
        %v2414 = vmax.f32 %v2344, 0.0
        %v2415 = vmax.f32 %v2346, 0.0
        %v2416 = vmax.f32 %v2349, 0.0
        %v2417 = vmax.f32 %v2351, 0.0
        %v2418 = vmax.f32 %v2354, 0.0
        %v2419 = vmax.f32 %v2356, 0.0
        %v2420 = vmax.f32 %v2359, 0.0
        %v2421 = vmax.f32 %v2361, 0.0
        %v2422 = vmax.f32 %v2364, 0.0
        %v2423 = vmax.f32 %v2366, 0.0
        %v2424 = vmax.f32 %v2369, 0.0
        %v2425 = vmax.f32 %v2371, 0.0
        %v2426 = vmax.f32 %v2374, 0.0
        %v2427 = vmax.f32 %v2376, 0.0
        %v2428 = vmax.f32 %v2379, 0.0
        %v2429 = vmax.f32 %v2381, 0.0
        %v2430 = vmax.f32 %v2384, 0.0
        %v2431 = vmax.f32 %v2386, 0.0
        %v2432 = vmax.f32 %v2389, 0.0
        %v2433 = vmax.f32 %v2391, 0.0
        %v2434 = vmax.f32 %v2394, 0.0
        %v2435 = vmax.f32 %v2396, 0.0
        %v2436 = vmax.f32 %v2399, 0.0
        %v2437 = vmax.f32 %v2401, 0.0
        %v2438 = vmax.f32 %v2404, 0.0
        %v2439 = vmax.f32 %v2406, 0.0
        %2440 = vst [vmem:[#allocation2] sm:$0xf] 0
        %2441 = vst [vmem:[#allocation2 + $0x4] sm:$0xf] 0
        %2442 = vst [vmem:[#allocation2 + $0x8] sm:$0x1] 0
        %s2443 = scalar_lea.vmem [#allocation2], 204
        %2444 = vst [vmem:[%s2443] sm:$0xf] 0
        %2445 = vst [vmem:[%s2443 + $0x4] sm:$0xf] 0
        %2446 = vst [vmem:[%s2443 + $0x8] sm:$0x1] 0
        %vm2447 = vcmask 1040384
        %vm2448 = vsmask.f32 256
        %vm2449 = vmand %vm2447, %vm2448
        %v2450 = vld [vmem:[#allocation2] sm:$0x1]
        %v2451 = vsel %vm2449, 0, %v2450
        %2452 = vst [vmem:[#allocation2] sm:$0x1] %v2451
        %v2453 = vld [vmem:[#allocation2 + $0xc] sm:$0x1]
        %v2454 = vsel %vm2449, 0, %v2453
        %2455 = vst [vmem:[#allocation2 + $0xc] sm:$0x1] %v2454
        %v2456 = vld [vmem:[#allocation2 + $0x18] sm:$0x1]
        %v2457 = vsel %vm2449, 0, %v2456
        %2458 = vst [vmem:[#allocation2 + $0x18] sm:$0x1] %v2457
        %v2459 = vld [vmem:[#allocation2 + $0x24] sm:$0x1]
        %v2460 = vsel %vm2449, 0, %v2459
        %2461 = vst [vmem:[#allocation2 + $0x24] sm:$0x1] %v2460
        %v2462 = vld [vmem:[#allocation2 + $0x30] sm:$0x1]
        %v2463 = vsel %vm2449, 0, %v2462
        %2464 = vst [vmem:[#allocation2 + $0x30] sm:$0x1] %v2463
        %v2465 = vld [vmem:[#allocation2 + $0x3c] sm:$0x1]
        %v2466 = vsel %vm2449, 0, %v2465
        %2467 = vst [vmem:[#allocation2 + $0x3c] sm:$0x1] %v2466
        %v2468 = vld [vmem:[#allocation2 + $0x48] sm:$0x1]
        %v2469 = vsel %vm2449, 0, %v2468
        %2470 = vst [vmem:[#allocation2 + $0x48] sm:$0x1] %v2469
        %v2471 = vld [vmem:[#allocation2 + $0x54] sm:$0x1]
        %v2472 = vsel %vm2449, 0, %v2471
        %2473 = vst [vmem:[#allocation2 + $0x54] sm:$0x1] %v2472
        %v2474 = vld [vmem:[#allocation2 + $0x60] sm:$0x1]
        %v2475 = vsel %vm2449, 0, %v2474
        %2476 = vst [vmem:[#allocation2 + $0x60] sm:$0x1] %v2475
        %v2477 = vld [vmem:[#allocation2 + $0x6c] sm:$0x1]
        %v2478 = vsel %vm2449, 0, %v2477
        %2479 = vst [vmem:[#allocation2 + $0x6c] sm:$0x1] %v2478
        %v2480 = vld [vmem:[#allocation2 + $0x78] sm:$0x1]
        %v2481 = vsel %vm2449, 0, %v2480
        %2482 = vst [vmem:[#allocation2 + $0x78] sm:$0x1] %v2481
        %v2483 = vld [vmem:[#allocation2 + $0x84] sm:$0x1]
        %v2484 = vsel %vm2449, 0, %v2483
        %2485 = vst [vmem:[#allocation2 + $0x84] sm:$0x1] %v2484
        %v2486 = vld [vmem:[#allocation2 + $0x90] sm:$0x1]
        %v2487 = vsel %vm2449, 0, %v2486
        %2488 = vst [vmem:[#allocation2 + $0x90] sm:$0x1] %v2487
        %v2489 = vld [vmem:[#allocation2 + $0x9c] sm:$0x1]
        %v2490 = vsel %vm2449, 0, %v2489
        %2491 = vst [vmem:[#allocation2 + $0x9c] sm:$0x1] %v2490
        %v2492 = vld [vmem:[#allocation2 + $0xa8] sm:$0x1]
        %v2493 = vsel %vm2449, 0, %v2492
        %2494 = vst [vmem:[#allocation2 + $0xa8] sm:$0x1] %v2493
        %v2495 = vld [vmem:[#allocation2 + $0xb4] sm:$0x1]
        %v2496 = vsel %vm2449, 0, %v2495
        %2497 = vst [vmem:[#allocation2 + $0xb4] sm:$0x1] %v2496
        %v2498 = vld [vmem:[#allocation2 + $0xc0] sm:$0x1]
        %v2499 = vsel %vm2449, 0, %v2498
        %2500 = vst [vmem:[#allocation2 + $0xc0] sm:$0x1] %v2499
        %v2501 = vld [vmem:[#allocation2 + $0xcc] sm:$0x1]
        %v2502 = vsel %vm2449, 0, %v2501
        %2503 = vst [vmem:[#allocation2 + $0xcc] sm:$0x1] %v2502
        %vm2504 = vsmask.f32 7938
        %vm2505 = vmand %vm2447, %vm2504
        %v2506 = vld [vmem:[#allocation2 + $0x8] sm:$0x1]
        %v2507 = vsel %vm2505, 0, %v2506
        %2508 = vst [vmem:[#allocation2 + $0x8] sm:$0x1] %v2507
        %v2509 = vld [vmem:[#allocation2 + $0x14] sm:$0x1]
        %v2510 = vsel %vm2505, 0, %v2509
        %2511 = vst [vmem:[#allocation2 + $0x14] sm:$0x1] %v2510
        %v2512 = vld [vmem:[#allocation2 + $0x20] sm:$0x1]
        %v2513 = vsel %vm2505, 0, %v2512
        %2514 = vst [vmem:[#allocation2 + $0x20] sm:$0x1] %v2513
        %v2515 = vld [vmem:[#allocation2 + $0x2c] sm:$0x1]
        %v2516 = vsel %vm2505, 0, %v2515
        %2517 = vst [vmem:[#allocation2 + $0x2c] sm:$0x1] %v2516
        %v2518 = vld [vmem:[#allocation2 + $0x38] sm:$0x1]
        %v2519 = vsel %vm2505, 0, %v2518
        %2520 = vst [vmem:[#allocation2 + $0x38] sm:$0x1] %v2519
        %v2521 = vld [vmem:[#allocation2 + $0x44] sm:$0x1]
        %v2522 = vsel %vm2505, 0, %v2521
        %2523 = vst [vmem:[#allocation2 + $0x44] sm:$0x1] %v2522
        %v2524 = vld [vmem:[#allocation2 + $0x50] sm:$0x1]
        %v2525 = vsel %vm2505, 0, %v2524
        %2526 = vst [vmem:[#allocation2 + $0x50] sm:$0x1] %v2525
        %v2527 = vld [vmem:[#allocation2 + $0x5c] sm:$0x1]
        %v2528 = vsel %vm2505, 0, %v2527
        %2529 = vst [vmem:[#allocation2 + $0x5c] sm:$0x1] %v2528
        %v2530 = vld [vmem:[#allocation2 + $0x68] sm:$0x1]
        %v2531 = vsel %vm2505, 0, %v2530
        %2532 = vst [vmem:[#allocation2 + $0x68] sm:$0x1] %v2531
        %v2533 = vld [vmem:[#allocation2 + $0x74] sm:$0x1]
        %v2534 = vsel %vm2505, 0, %v2533
        %2535 = vst [vmem:[#allocation2 + $0x74] sm:$0x1] %v2534
        %v2536 = vld [vmem:[#allocation2 + $0x80] sm:$0x1]
        %v2537 = vsel %vm2505, 0, %v2536
        %2538 = vst [vmem:[#allocation2 + $0x80] sm:$0x1] %v2537
        %v2539 = vld [vmem:[#allocation2 + $0x8c] sm:$0x1]
        %v2540 = vsel %vm2505, 0, %v2539
        %2541 = vst [vmem:[#allocation2 + $0x8c] sm:$0x1] %v2540
        %v2542 = vld [vmem:[#allocation2 + $0x98] sm:$0x1]
        %v2543 = vsel %vm2505, 0, %v2542
        %2544 = vst [vmem:[#allocation2 + $0x98] sm:$0x1] %v2543
        %v2545 = vld [vmem:[#allocation2 + $0xa4] sm:$0x1]
        %v2546 = vsel %vm2505, 0, %v2545
        %2547 = vst [vmem:[#allocation2 + $0xa4] sm:$0x1] %v2546
        %v2548 = vld [vmem:[#allocation2 + $0xb0] sm:$0x1]
        %v2549 = vsel %vm2505, 0, %v2548
        %2550 = vst [vmem:[#allocation2 + $0xb0] sm:$0x1] %v2549
        %v2551 = vld [vmem:[#allocation2 + $0xbc] sm:$0x1]
        %v2552 = vsel %vm2505, 0, %v2551
        %2553 = vst [vmem:[#allocation2 + $0xbc] sm:$0x1] %v2552
        %v2554 = vld [vmem:[#allocation2 + $0xc8] sm:$0x1]
        %v2555 = vsel %vm2505, 0, %v2554
        %2556 = vst [vmem:[#allocation2 + $0xc8] sm:$0x1] %v2555
        %v2557 = vld [vmem:[#allocation2 + $0xd4] sm:$0x1]
        %v2558 = vsel %vm2505, 0, %v2557
        %2559 = vst [vmem:[#allocation2 + $0xd4] sm:$0x1] %v2558
        %v2560 = vpack.c.bf16 %v2408, %v2408
        %v2561 = vpack.c.bf16 %v2409, %v2409
        %v2562 = vpack.c.bf16 %v2410, %v2410
        %v2563 = vpack.c.bf16 %v2411, %v2411
        %v2564 = vpack.c.bf16 %v2412, %v2412
        %v2565 = vpack.c.bf16 %v2413, %v2413
        %v2566 = vpack.c.bf16 %v2414, %v2414
        %v2567 = vpack.c.bf16 %v2415, %v2415
        %v2568 = vpack.c.bf16 %v2416, %v2416
        %v2569 = vpack.c.bf16 %v2417, %v2417
        %v2570 = vpack.c.bf16 %v2418, %v2418
        %v2571 = vpack.c.bf16 %v2419, %v2419
        %v2572 = vpack.c.bf16 %v2420, %v2420
        %v2573 = vpack.c.bf16 %v2421, %v2421
        %v2574 = vpack.c.bf16 %v2422, %v2422
        %v2575 = vpack.c.bf16 %v2423, %v2423
        %v2576 = vpack.c.bf16 %v2424, %v2424
        %v2577 = vpack.c.bf16 %v2425, %v2425
        %v2578 = vpack.c.bf16 %v2426, %v2426
        %v2579 = vpack.c.bf16 %v2427, %v2427
        %v2580 = vpack.c.bf16 %v2428, %v2428
        %v2581 = vpack.c.bf16 %v2429, %v2429
        %v2582 = vpack.c.bf16 %v2430, %v2430
        %v2583 = vpack.c.bf16 %v2431, %v2431
        %v2584 = vpack.c.bf16 %v2432, %v2432
        %v2585 = vpack.c.bf16 %v2433, %v2433
        %v2586 = vpack.c.bf16 %v2434, %v2434
        %v2587 = vpack.c.bf16 %v2435, %v2435
        %v2588 = vpack.c.bf16 %v2436, %v2436
        %v2589 = vpack.c.bf16 %v2437, %v2437
        %v2590 = vpack.c.bf16 %v2438, %v2438
        %v2591 = vpack.c.bf16 %v2439, %v2439
        %vm2592 = vsmask.f32 4368
        %vm2593 = vmor %vm2448, %vm2592
        %v2595 = vshrl.u32 %v2560, 16
        %v2597 = vrot.slane %v2595, 7
        %v2598 = vshll.u32 %v2560, 16
        %v2600 = vor.u32 %v2597, %v2598
        %v2601 = vrot.slane %v2597, 4
        %v2603 = vshrl.u32 %v2561, 16
        %v2605 = vrot.slane %v2603, 7
        %v2606 = vshll.u32 %v2561, 16
        %v2608 = vor.u32 %v2605, %v2606
        %v2609 = vsel %vm2593, %v2601, %v2608
        %v2610 = vrot.slane %v2605, 4
        %v2612 = vshrl.u32 %v2562, 16
        %v2614 = vrot.slane %v2612, 7
        %v2615 = vshll.u32 %v2562, 16
        %v2617 = vor.u32 %v2614, %v2615
        %v2618 = vrot.slane %v2614, 4
        %v2620 = vshrl.u32 %v2563, 16
        %v2622 = vrot.slane %v2620, 7
        %v2623 = vshll.u32 %v2563, 16
        %v2625 = vor.u32 %v2622, %v2623
        %v2626 = vsel %vm2593, %v2618, %v2625
        %v2627 = vrot.slane %v2622, 4
        %v2629 = vshrl.u32 %v2564, 16
        %v2631 = vrot.slane %v2629, 7
        %v2632 = vshll.u32 %v2564, 16
        %v2634 = vor.u32 %v2631, %v2632
        %v2635 = vrot.slane %v2631, 4
        %v2637 = vshrl.u32 %v2565, 16
        %v2639 = vrot.slane %v2637, 7
        %v2640 = vshll.u32 %v2565, 16
        %v2642 = vor.u32 %v2639, %v2640
        %v2643 = vsel %vm2593, %v2635, %v2642
        %v2644 = vrot.slane %v2639, 4
        %v2646 = vshrl.u32 %v2566, 16
        %v2648 = vrot.slane %v2646, 7
        %v2649 = vshll.u32 %v2566, 16
        %v2651 = vor.u32 %v2648, %v2649
        %v2652 = vrot.slane %v2648, 4
        %v2654 = vshrl.u32 %v2567, 16
        %v2656 = vrot.slane %v2654, 7
        %v2657 = vshll.u32 %v2567, 16
        %v2659 = vor.u32 %v2656, %v2657
        %v2660 = vsel %vm2593, %v2652, %v2659
        %v2661 = vrot.slane %v2656, 4
        %v2663 = vshrl.u32 %v2568, 16
        %v2665 = vrot.slane %v2663, 7
        %v2666 = vshll.u32 %v2568, 16
        %v2668 = vor.u32 %v2665, %v2666
        %v2669 = vrot.slane %v2665, 4
        %v2671 = vshrl.u32 %v2569, 16
        %v2673 = vrot.slane %v2671, 7
        %v2674 = vshll.u32 %v2569, 16
        %v2676 = vor.u32 %v2673, %v2674
        %v2677 = vsel %vm2593, %v2669, %v2676
        %v2678 = vrot.slane %v2673, 4
        %v2680 = vshrl.u32 %v2570, 16
        %v2682 = vrot.slane %v2680, 7
        %v2683 = vshll.u32 %v2570, 16
        %v2685 = vor.u32 %v2682, %v2683
        %v2686 = vrot.slane %v2682, 4
        %v2688 = vshrl.u32 %v2571, 16
        %v2690 = vrot.slane %v2688, 7
        %v2691 = vshll.u32 %v2571, 16
        %v2693 = vor.u32 %v2690, %v2691
        %v2694 = vsel %vm2593, %v2686, %v2693
        %v2695 = vrot.slane %v2690, 4
        %v2697 = vshrl.u32 %v2572, 16
        %v2699 = vrot.slane %v2697, 7
        %v2700 = vshll.u32 %v2572, 16
        %v2702 = vor.u32 %v2699, %v2700
        %v2703 = vrot.slane %v2699, 4
        %v2705 = vshrl.u32 %v2573, 16
        %v2707 = vrot.slane %v2705, 7
        %v2708 = vshll.u32 %v2573, 16
        %v2710 = vor.u32 %v2707, %v2708
        %v2711 = vsel %vm2593, %v2703, %v2710
        %v2712 = vrot.slane %v2707, 4
        %v2714 = vshrl.u32 %v2574, 16
        %v2716 = vrot.slane %v2714, 7
        %v2717 = vshll.u32 %v2574, 16
        %v2719 = vor.u32 %v2716, %v2717
        %v2720 = vrot.slane %v2716, 4
        %v2722 = vshrl.u32 %v2575, 16
        %v2724 = vrot.slane %v2722, 7
        %v2725 = vshll.u32 %v2575, 16
        %v2727 = vor.u32 %v2724, %v2725
        %v2728 = vsel %vm2593, %v2720, %v2727
        %v2729 = vrot.slane %v2724, 4
        %v2731 = vshrl.u32 %v2576, 16
        %v2733 = vrot.slane %v2731, 7
        %v2734 = vshll.u32 %v2576, 16
        %v2736 = vor.u32 %v2733, %v2734
        %v2737 = vrot.slane %v2733, 4
        %v2739 = vshrl.u32 %v2577, 16
        %v2741 = vrot.slane %v2739, 7
        %v2742 = vshll.u32 %v2577, 16
        %v2744 = vor.u32 %v2741, %v2742
        %v2745 = vsel %vm2593, %v2737, %v2744
        %v2746 = vrot.slane %v2741, 4
        %v2748 = vshrl.u32 %v2578, 16
        %v2750 = vrot.slane %v2748, 7
        %v2751 = vshll.u32 %v2578, 16
        %v2753 = vor.u32 %v2750, %v2751
        %v2754 = vrot.slane %v2750, 4
        %v2756 = vshrl.u32 %v2579, 16
        %v2758 = vrot.slane %v2756, 7
        %v2759 = vshll.u32 %v2579, 16
        %v2761 = vor.u32 %v2758, %v2759
        %v2762 = vsel %vm2593, %v2754, %v2761
        %v2763 = vrot.slane %v2758, 4
        %v2765 = vshrl.u32 %v2580, 16
        %v2767 = vrot.slane %v2765, 7
        %v2768 = vshll.u32 %v2580, 16
        %v2770 = vor.u32 %v2767, %v2768
        %v2771 = vrot.slane %v2767, 4
        %v2773 = vshrl.u32 %v2581, 16
        %v2775 = vrot.slane %v2773, 7
        %v2776 = vshll.u32 %v2581, 16
        %v2778 = vor.u32 %v2775, %v2776
        %v2779 = vsel %vm2593, %v2771, %v2778
        %v2780 = vrot.slane %v2775, 4
        %v2782 = vshrl.u32 %v2582, 16
        %v2784 = vrot.slane %v2782, 7
        %v2785 = vshll.u32 %v2582, 16
        %v2787 = vor.u32 %v2784, %v2785
        %v2788 = vrot.slane %v2784, 4
        %v2790 = vshrl.u32 %v2583, 16
        %v2792 = vrot.slane %v2790, 7
        %v2793 = vshll.u32 %v2583, 16
        %v2795 = vor.u32 %v2792, %v2793
        %v2796 = vsel %vm2593, %v2788, %v2795
        %v2797 = vrot.slane %v2792, 4
        %v2799 = vshrl.u32 %v2584, 16
        %v2801 = vrot.slane %v2799, 7
        %v2802 = vshll.u32 %v2584, 16
        %v2804 = vor.u32 %v2801, %v2802
        %v2805 = vrot.slane %v2801, 4
        %v2807 = vshrl.u32 %v2585, 16
        %v2809 = vrot.slane %v2807, 7
        %v2810 = vshll.u32 %v2585, 16
        %v2812 = vor.u32 %v2809, %v2810
        %v2813 = vsel %vm2593, %v2805, %v2812
        %v2814 = vrot.slane %v2809, 4
        %v2816 = vshrl.u32 %v2586, 16
        %v2818 = vrot.slane %v2816, 7
        %v2819 = vshll.u32 %v2586, 16
        %v2821 = vor.u32 %v2818, %v2819
        %v2822 = vrot.slane %v2818, 4
        %v2824 = vshrl.u32 %v2587, 16
        %v2826 = vrot.slane %v2824, 7
        %v2827 = vshll.u32 %v2587, 16
        %v2829 = vor.u32 %v2826, %v2827
        %v2830 = vsel %vm2593, %v2822, %v2829
        %v2831 = vrot.slane %v2826, 4
        %v2833 = vshrl.u32 %v2588, 16
        %v2835 = vrot.slane %v2833, 7
        %v2836 = vshll.u32 %v2588, 16
        %v2838 = vor.u32 %v2835, %v2836
        %v2839 = vrot.slane %v2835, 4
        %v2841 = vshrl.u32 %v2589, 16
        %v2843 = vrot.slane %v2841, 7
        %v2844 = vshll.u32 %v2589, 16
        %v2846 = vor.u32 %v2843, %v2844
        %v2847 = vsel %vm2593, %v2839, %v2846
        %v2848 = vrot.slane %v2843, 4
        %v2850 = vshrl.u32 %v2590, 16
        %v2852 = vrot.slane %v2850, 7
        %v2853 = vshll.u32 %v2590, 16
        %v2855 = vor.u32 %v2852, %v2853
        %v2856 = vrot.slane %v2852, 4
        %v2858 = vshrl.u32 %v2591, 16
        %v2860 = vrot.slane %v2858, 7
        %v2861 = vshll.u32 %v2591, 16
        %v2863 = vor.u32 %v2860, %v2861
        %v2864 = vsel %vm2593, %v2856, %v2863
        %v2865 = vrot.slane %v2860, 4
        %s2914 = scalar_lea.vmem [#allocation2], 12
        %vm2915 = vcmask 1043456
        %vm2916 = vmand %vm2915, %vm2504
        %v2917 = vld [vmem:[%s2914] sm:$0xf]
        %v2918 = vsel %vm2916, %v2600, %v2917
        %2919 = vst [vmem:[%s2914] sm:$0xf] %v2918
        %2920 = vst [vmem:[%s2914 + $0x4] sm:$0xf] %v2609
        %v2921 = vld [vmem:[%s2914 + $0x8] sm:$0x1]
        %v2922 = vsel %vm2449, %v2610, %v2921
        %2923 = vst [vmem:[%s2914 + $0x8] sm:$0x1] %v2922
        %v2924 = vld [vmem:[%s2914 + $0xc] sm:$0xf]
        %v2925 = vsel %vm2916, %v2617, %v2924
        %2926 = vst [vmem:[%s2914 + $0xc] sm:$0xf] %v2925
        %2927 = vst [vmem:[%s2914 + $0x10] sm:$0xf] %v2626
        %v2928 = vld [vmem:[%s2914 + $0x14] sm:$0x1]
        %v2929 = vsel %vm2449, %v2627, %v2928
        %2930 = vst [vmem:[%s2914 + $0x14] sm:$0x1] %v2929
        %v2931 = vld [vmem:[%s2914 + $0x18] sm:$0xf]
        %v2932 = vsel %vm2916, %v2634, %v2931
        %2933 = vst [vmem:[%s2914 + $0x18] sm:$0xf] %v2932
        %2934 = vst [vmem:[%s2914 + $0x1c] sm:$0xf] %v2643
        %v2935 = vld [vmem:[%s2914 + $0x20] sm:$0x1]
        %v2936 = vsel %vm2449, %v2644, %v2935
        %2937 = vst [vmem:[%s2914 + $0x20] sm:$0x1] %v2936
        %v2938 = vld [vmem:[%s2914 + $0x24] sm:$0xf]
        %v2939 = vsel %vm2916, %v2651, %v2938
        %2940 = vst [vmem:[%s2914 + $0x24] sm:$0xf] %v2939
        %2941 = vst [vmem:[%s2914 + $0x28] sm:$0xf] %v2660
        %v2942 = vld [vmem:[%s2914 + $0x2c] sm:$0x1]
        %v2943 = vsel %vm2449, %v2661, %v2942
        %2944 = vst [vmem:[%s2914 + $0x2c] sm:$0x1] %v2943
        %v2945 = vld [vmem:[%s2914 + $0x30] sm:$0xf]
        %v2946 = vsel %vm2916, %v2668, %v2945
        %2947 = vst [vmem:[%s2914 + $0x30] sm:$0xf] %v2946
        %2948 = vst [vmem:[%s2914 + $0x34] sm:$0xf] %v2677
        %v2949 = vld [vmem:[%s2914 + $0x38] sm:$0x1]
        %v2950 = vsel %vm2449, %v2678, %v2949
        %2951 = vst [vmem:[%s2914 + $0x38] sm:$0x1] %v2950
        %v2952 = vld [vmem:[%s2914 + $0x3c] sm:$0xf]
        %v2953 = vsel %vm2916, %v2685, %v2952
        %2954 = vst [vmem:[%s2914 + $0x3c] sm:$0xf] %v2953
        %2955 = vst [vmem:[%s2914 + $0x40] sm:$0xf] %v2694
        %v2956 = vld [vmem:[%s2914 + $0x44] sm:$0x1]
        %v2957 = vsel %vm2449, %v2695, %v2956
        %2958 = vst [vmem:[%s2914 + $0x44] sm:$0x1] %v2957
        %v2959 = vld [vmem:[%s2914 + $0x48] sm:$0xf]
        %v2960 = vsel %vm2916, %v2702, %v2959
        %2961 = vst [vmem:[%s2914 + $0x48] sm:$0xf] %v2960
        %2962 = vst [vmem:[%s2914 + $0x4c] sm:$0xf] %v2711
        %v2963 = vld [vmem:[%s2914 + $0x50] sm:$0x1]
        %v2964 = vsel %vm2449, %v2712, %v2963
        %2965 = vst [vmem:[%s2914 + $0x50] sm:$0x1] %v2964
        %v2966 = vld [vmem:[%s2914 + $0x54] sm:$0xf]
        %v2967 = vsel %vm2916, %v2719, %v2966
        %2968 = vst [vmem:[%s2914 + $0x54] sm:$0xf] %v2967
        %2969 = vst [vmem:[%s2914 + $0x58] sm:$0xf] %v2728
        %v2970 = vld [vmem:[%s2914 + $0x5c] sm:$0x1]
        %v2971 = vsel %vm2449, %v2729, %v2970
        %2972 = vst [vmem:[%s2914 + $0x5c] sm:$0x1] %v2971
        %v2973 = vld [vmem:[%s2914 + $0x60] sm:$0xf]
        %v2974 = vsel %vm2916, %v2736, %v2973
        %2975 = vst [vmem:[%s2914 + $0x60] sm:$0xf] %v2974
        %2976 = vst [vmem:[%s2914 + $0x64] sm:$0xf] %v2745
        %v2977 = vld [vmem:[%s2914 + $0x68] sm:$0x1]
        %v2978 = vsel %vm2449, %v2746, %v2977
        %2979 = vst [vmem:[%s2914 + $0x68] sm:$0x1] %v2978
        %v2980 = vld [vmem:[%s2914 + $0x6c] sm:$0xf]
        %v2981 = vsel %vm2916, %v2753, %v2980
        %2982 = vst [vmem:[%s2914 + $0x6c] sm:$0xf] %v2981
        %2983 = vst [vmem:[%s2914 + $0x70] sm:$0xf] %v2762
        %v2984 = vld [vmem:[%s2914 + $0x74] sm:$0x1]
        %v2985 = vsel %vm2449, %v2763, %v2984
        %2986 = vst [vmem:[%s2914 + $0x74] sm:$0x1] %v2985
        %v2987 = vld [vmem:[%s2914 + $0x78] sm:$0xf]
        %v2988 = vsel %vm2916, %v2770, %v2987
        %2989 = vst [vmem:[%s2914 + $0x78] sm:$0xf] %v2988
        %2990 = vst [vmem:[%s2914 + $0x7c] sm:$0xf] %v2779
        %v2991 = vld [vmem:[%s2914 + $0x80] sm:$0x1]
        %v2992 = vsel %vm2449, %v2780, %v2991
        %2993 = vst [vmem:[%s2914 + $0x80] sm:$0x1] %v2992
        %v2994 = vld [vmem:[%s2914 + $0x84] sm:$0xf]
        %v2995 = vsel %vm2916, %v2787, %v2994
        %2996 = vst [vmem:[%s2914 + $0x84] sm:$0xf] %v2995
        %2997 = vst [vmem:[%s2914 + $0x88] sm:$0xf] %v2796
        %v2998 = vld [vmem:[%s2914 + $0x8c] sm:$0x1]
        %v2999 = vsel %vm2449, %v2797, %v2998
        %3000 = vst [vmem:[%s2914 + $0x8c] sm:$0x1] %v2999
        %v3001 = vld [vmem:[%s2914 + $0x90] sm:$0xf]
        %v3002 = vsel %vm2916, %v2804, %v3001
        %3003 = vst [vmem:[%s2914 + $0x90] sm:$0xf] %v3002
        %3004 = vst [vmem:[%s2914 + $0x94] sm:$0xf] %v2813
        %v3005 = vld [vmem:[%s2914 + $0x98] sm:$0x1]
        %v3006 = vsel %vm2449, %v2814, %v3005
        %3007 = vst [vmem:[%s2914 + $0x98] sm:$0x1] %v3006
        %v3008 = vld [vmem:[%s2914 + $0x9c] sm:$0xf]
        %v3009 = vsel %vm2916, %v2821, %v3008
        %3010 = vst [vmem:[%s2914 + $0x9c] sm:$0xf] %v3009
        %3011 = vst [vmem:[%s2914 + $0xa0] sm:$0xf] %v2830
        %v3012 = vld [vmem:[%s2914 + $0xa4] sm:$0x1]
        %v3013 = vsel %vm2449, %v2831, %v3012
        %3014 = vst [vmem:[%s2914 + $0xa4] sm:$0x1] %v3013
        %v3015 = vld [vmem:[%s2914 + $0xa8] sm:$0xf]
        %v3016 = vsel %vm2916, %v2838, %v3015
        %3017 = vst [vmem:[%s2914 + $0xa8] sm:$0xf] %v3016
        %3018 = vst [vmem:[%s2914 + $0xac] sm:$0xf] %v2847
        %v3019 = vld [vmem:[%s2914 + $0xb0] sm:$0x1]
        %v3020 = vsel %vm2449, %v2848, %v3019
        %3021 = vst [vmem:[%s2914 + $0xb0] sm:$0x1] %v3020
        %v3022 = vld [vmem:[%s2914 + $0xb4] sm:$0xf]
        %v3023 = vsel %vm2916, %v2855, %v3022
        %3024 = vst [vmem:[%s2914 + $0xb4] sm:$0xf] %v3023
        %3025 = vst [vmem:[%s2914 + $0xb8] sm:$0xf] %v2864
        %v3026 = vld [vmem:[%s2914 + $0xbc] sm:$0x1]
        %v3027 = vsel %vm2449, %v2865, %v3026
        %3028 = vst [vmem:[%s2914 + $0xbc] sm:$0x1] %v3027
        %v3029 = vld [vmem:[#allocation2] sm:$0xf]
        %v3030 = vld [vmem:[#allocation2 + $0x4] sm:$0xf]
        %v3031 = vld [vmem:[#allocation2 + $0x8] sm:$0x1]
        %v3032 = vld [vmem:[#allocation2 + $0xc] sm:$0xf]
        %v3033 = vld [vmem:[#allocation2 + $0x10] sm:$0xf]
        %v3034 = vld [vmem:[#allocation2 + $0x14] sm:$0x1]
        %v3035 = vld [vmem:[#allocation2 + $0x18] sm:$0xf]
        %v3036 = vld [vmem:[#allocation2 + $0x1c] sm:$0xf]
        %v3037 = vld [vmem:[#allocation2 + $0x20] sm:$0x1]
        %v3038 = vld [vmem:[#allocation2 + $0x24] sm:$0xf]
        %v3039 = vld [vmem:[#allocation2 + $0x28] sm:$0xf]
        %v3040 = vld [vmem:[#allocation2 + $0x2c] sm:$0x1]
        %v3041 = vld [vmem:[#allocation2 + $0x30] sm:$0xf]
        %v3042 = vld [vmem:[#allocation2 + $0x34] sm:$0xf]
        %v3043 = vld [vmem:[#allocation2 + $0x38] sm:$0x1]
        %v3044 = vld [vmem:[#allocation2 + $0x3c] sm:$0xf]
        %v3045 = vld [vmem:[#allocation2 + $0x40] sm:$0xf]
        %v3046 = vld [vmem:[#allocation2 + $0x44] sm:$0x1]
        %v3047 = vld [vmem:[#allocation2 + $0x48] sm:$0xf]
        %v3048 = vld [vmem:[#allocation2 + $0x4c] sm:$0xf]
        %v3049 = vld [vmem:[#allocation2 + $0x50] sm:$0x1]
        %v3050 = vld [vmem:[#allocation2 + $0x54] sm:$0xf]
        %v3051 = vld [vmem:[#allocation2 + $0x58] sm:$0xf]
        %v3052 = vld [vmem:[#allocation2 + $0x5c] sm:$0x1]
        %v3053 = vld [vmem:[#allocation2 + $0x60] sm:$0xf]
        %v3054 = vld [vmem:[#allocation2 + $0x64] sm:$0xf]
        %v3055 = vld [vmem:[#allocation2 + $0x68] sm:$0x1]
        %v3056 = vld [vmem:[#allocation2 + $0x6c] sm:$0xf]
        %v3057 = vld [vmem:[#allocation2 + $0x70] sm:$0xf]
        %v3058 = vld [vmem:[#allocation2 + $0x74] sm:$0x1]
        %v3059 = vld [vmem:[#allocation2 + $0x78] sm:$0xf]
        %v3060 = vld [vmem:[#allocation2 + $0x7c] sm:$0xf]
        %v3061 = vld [vmem:[#allocation2 + $0x80] sm:$0x1]
        %v3062 = vld [vmem:[#allocation2 + $0x84] sm:$0xf]
        %v3063 = vld [vmem:[#allocation2 + $0x88] sm:$0xf]
        %v3064 = vld [vmem:[#allocation2 + $0x8c] sm:$0x1]
        %v3065 = vld [vmem:[#allocation2 + $0x90] sm:$0xf]
        %v3066 = vld [vmem:[#allocation2 + $0x94] sm:$0xf]
        %v3067 = vld [vmem:[#allocation2 + $0x98] sm:$0x1]
        %v3068 = vld [vmem:[#allocation2 + $0x9c] sm:$0xf]
        %v3069 = vld [vmem:[#allocation2 + $0xa0] sm:$0xf]
        %v3070 = vld [vmem:[#allocation2 + $0xa4] sm:$0x1]
        %v3071 = vld [vmem:[#allocation2 + $0xa8] sm:$0xf]
        %v3072 = vld [vmem:[#allocation2 + $0xac] sm:$0xf]
        %v3073 = vld [vmem:[#allocation2 + $0xb0] sm:$0x1]
        %v3074 = vld [vmem:[#allocation2 + $0xb4] sm:$0xf]
        %v3075 = vld [vmem:[#allocation2 + $0xb8] sm:$0xf]
        %v3076 = vld [vmem:[#allocation2 + $0xbc] sm:$0x1]
        %v3077 = vld [vmem:[#allocation2 + $0xc0] sm:$0xf]
        %v3078 = vld [vmem:[#allocation2 + $0xc4] sm:$0xf]
        %v3079 = vld [vmem:[#allocation2 + $0xc8] sm:$0x1]
        %v3080 = vld [vmem:[#allocation2 + $0xcc] sm:$0xf]
        %v3081 = vld [vmem:[#allocation2 + $0xd0] sm:$0xf]
        %v3082 = vld [vmem:[#allocation2 + $0xd4] sm:$0x1]
        %vm3083 = vsmask.f32 3328
        %vm3084 = vsmask.f32 7440
        %vm3085 = vmor %vm3083, %vm3084
        %v3087 = vshrl.u32 %v3029, 16
        %v3089 = vrot.slane %v3087, 4
        %v3090 = vshll.u32 %v3029, 16
        %v3092 = vrot.slane %v3090, 5
        %v3093 = vor.u32 %v3089, %v3092
        %v3094 = vrot.slane %v3093, 4
        %v3096 = vshll.u32 %v3030, 16
        %v3098 = vrot.slane %v3096, 5
        %v3099 = vsel %vm3085, %v3094, %v3098
        %v3100 = vshrl.u32 %v3030, 16
        %v3102 = vrot.slane %v3100, 4
        %v3103 = vor.u32 %v3102, %v3098
        %v3104 = vrot.slane %v3103, 4
        %v3106 = vshll.u32 %v3031, 16
        %v3108 = vrot.slane %v3106, 5
        %v3109 = vsel %vm3085, %v3104, %v3108
        %v3111 = vshrl.u32 %v3032, 16
        %v3113 = vrot.slane %v3111, 4
        %v3114 = vshll.u32 %v3032, 16
        %v3116 = vrot.slane %v3114, 5
        %v3117 = vor.u32 %v3113, %v3116
        %v3118 = vrot.slane %v3117, 4
        %v3120 = vshll.u32 %v3033, 16
        %v3122 = vrot.slane %v3120, 5
        %v3123 = vsel %vm3085, %v3118, %v3122
        %v3124 = vshrl.u32 %v3033, 16
        %v3126 = vrot.slane %v3124, 4
        %v3127 = vor.u32 %v3126, %v3122
        %v3128 = vrot.slane %v3127, 4
        %v3130 = vshll.u32 %v3034, 16
        %v3132 = vrot.slane %v3130, 5
        %v3133 = vsel %vm3085, %v3128, %v3132
        %v3135 = vshrl.u32 %v3035, 16
        %v3137 = vrot.slane %v3135, 4
        %v3138 = vshll.u32 %v3035, 16
        %v3140 = vrot.slane %v3138, 5
        %v3141 = vor.u32 %v3137, %v3140
        %v3142 = vrot.slane %v3141, 4
        %v3144 = vshll.u32 %v3036, 16
        %v3146 = vrot.slane %v3144, 5
        %v3147 = vsel %vm3085, %v3142, %v3146
        %v3148 = vshrl.u32 %v3036, 16
        %v3150 = vrot.slane %v3148, 4
        %v3151 = vor.u32 %v3150, %v3146
        %v3152 = vrot.slane %v3151, 4
        %v3154 = vshll.u32 %v3037, 16
        %v3156 = vrot.slane %v3154, 5
        %v3157 = vsel %vm3085, %v3152, %v3156
        %v3159 = vshrl.u32 %v3038, 16
        %v3161 = vrot.slane %v3159, 4
        %v3162 = vshll.u32 %v3038, 16
        %v3164 = vrot.slane %v3162, 5
        %v3165 = vor.u32 %v3161, %v3164
        %v3166 = vrot.slane %v3165, 4
        %v3168 = vshll.u32 %v3039, 16
        %v3170 = vrot.slane %v3168, 5
        %v3171 = vsel %vm3085, %v3166, %v3170
        %v3172 = vshrl.u32 %v3039, 16
        %v3174 = vrot.slane %v3172, 4
        %v3175 = vor.u32 %v3174, %v3170
        %v3176 = vrot.slane %v3175, 4
        %v3178 = vshll.u32 %v3040, 16
        %v3180 = vrot.slane %v3178, 5
        %v3181 = vsel %vm3085, %v3176, %v3180
        %v3183 = vshrl.u32 %v3041, 16
        %v3185 = vrot.slane %v3183, 4
        %v3186 = vshll.u32 %v3041, 16
        %v3188 = vrot.slane %v3186, 5
        %v3189 = vor.u32 %v3185, %v3188
        %v3190 = vrot.slane %v3189, 4
        %v3192 = vshll.u32 %v3042, 16
        %v3194 = vrot.slane %v3192, 5
        %v3195 = vsel %vm3085, %v3190, %v3194
        %v3196 = vshrl.u32 %v3042, 16
        %v3198 = vrot.slane %v3196, 4
        %v3199 = vor.u32 %v3198, %v3194
        %v3200 = vrot.slane %v3199, 4
        %v3202 = vshll.u32 %v3043, 16
        %v3204 = vrot.slane %v3202, 5
        %v3205 = vsel %vm3085, %v3200, %v3204
        %v3207 = vshrl.u32 %v3044, 16
        %v3209 = vrot.slane %v3207, 4
        %v3210 = vshll.u32 %v3044, 16
        %v3212 = vrot.slane %v3210, 5
        %v3213 = vor.u32 %v3209, %v3212
        %v3214 = vrot.slane %v3213, 4
        %v3216 = vshll.u32 %v3045, 16
        %v3218 = vrot.slane %v3216, 5
        %v3219 = vsel %vm3085, %v3214, %v3218
        %v3220 = vshrl.u32 %v3045, 16
        %v3222 = vrot.slane %v3220, 4
        %v3223 = vor.u32 %v3222, %v3218
        %v3224 = vrot.slane %v3223, 4
        %v3226 = vshll.u32 %v3046, 16
        %v3228 = vrot.slane %v3226, 5
        %v3229 = vsel %vm3085, %v3224, %v3228
        %v3231 = vshrl.u32 %v3047, 16
        %v3233 = vrot.slane %v3231, 4
        %v3234 = vshll.u32 %v3047, 16
        %v3236 = vrot.slane %v3234, 5
        %v3237 = vor.u32 %v3233, %v3236
        %v3238 = vrot.slane %v3237, 4
        %v3240 = vshll.u32 %v3048, 16
        %v3242 = vrot.slane %v3240, 5
        %v3243 = vsel %vm3085, %v3238, %v3242
        %v3244 = vshrl.u32 %v3048, 16
        %v3246 = vrot.slane %v3244, 4
        %v3247 = vor.u32 %v3246, %v3242
        %v3248 = vrot.slane %v3247, 4
        %v3250 = vshll.u32 %v3049, 16
        %v3252 = vrot.slane %v3250, 5
        %v3253 = vsel %vm3085, %v3248, %v3252
        %v3255 = vshrl.u32 %v3050, 16
        %v3257 = vrot.slane %v3255, 4
        %v3258 = vshll.u32 %v3050, 16
        %v3260 = vrot.slane %v3258, 5
        %v3261 = vor.u32 %v3257, %v3260
        %v3262 = vrot.slane %v3261, 4
        %v3264 = vshll.u32 %v3051, 16
        %v3266 = vrot.slane %v3264, 5
        %v3267 = vsel %vm3085, %v3262, %v3266
        %v3268 = vshrl.u32 %v3051, 16
        %v3270 = vrot.slane %v3268, 4
        %v3271 = vor.u32 %v3270, %v3266
        %v3272 = vrot.slane %v3271, 4
        %v3274 = vshll.u32 %v3052, 16
        %v3276 = vrot.slane %v3274, 5
        %v3277 = vsel %vm3085, %v3272, %v3276
        %v3279 = vshrl.u32 %v3053, 16
        %v3281 = vrot.slane %v3279, 4
        %v3282 = vshll.u32 %v3053, 16
        %v3284 = vrot.slane %v3282, 5
        %v3285 = vor.u32 %v3281, %v3284
        %v3286 = vrot.slane %v3285, 4
        %v3288 = vshll.u32 %v3054, 16
        %v3290 = vrot.slane %v3288, 5
        %v3291 = vsel %vm3085, %v3286, %v3290
        %v3292 = vshrl.u32 %v3054, 16
        %v3294 = vrot.slane %v3292, 4
        %v3295 = vor.u32 %v3294, %v3290
        %v3296 = vrot.slane %v3295, 4
        %v3298 = vshll.u32 %v3055, 16
        %v3300 = vrot.slane %v3298, 5
        %v3301 = vsel %vm3085, %v3296, %v3300
        %v3303 = vshrl.u32 %v3056, 16
        %v3305 = vrot.slane %v3303, 4
        %v3306 = vshll.u32 %v3056, 16
        %v3308 = vrot.slane %v3306, 5
        %v3309 = vor.u32 %v3305, %v3308
        %v3310 = vrot.slane %v3309, 4
        %v3312 = vshll.u32 %v3057, 16
        %v3314 = vrot.slane %v3312, 5
        %v3315 = vsel %vm3085, %v3310, %v3314
        %v3316 = vshrl.u32 %v3057, 16
        %v3318 = vrot.slane %v3316, 4
        %v3319 = vor.u32 %v3318, %v3314
        %v3320 = vrot.slane %v3319, 4
        %v3322 = vshll.u32 %v3058, 16
        %v3324 = vrot.slane %v3322, 5
        %v3325 = vsel %vm3085, %v3320, %v3324
        %v3327 = vshrl.u32 %v3059, 16
        %v3329 = vrot.slane %v3327, 4
        %v3330 = vshll.u32 %v3059, 16
        %v3332 = vrot.slane %v3330, 5
        %v3333 = vor.u32 %v3329, %v3332
        %v3334 = vrot.slane %v3333, 4
        %v3336 = vshll.u32 %v3060, 16
        %v3338 = vrot.slane %v3336, 5
        %v3339 = vsel %vm3085, %v3334, %v3338
        %v3340 = vshrl.u32 %v3060, 16
        %v3342 = vrot.slane %v3340, 4
        %v3343 = vor.u32 %v3342, %v3338
        %v3344 = vrot.slane %v3343, 4
        %v3346 = vshll.u32 %v3061, 16
        %v3348 = vrot.slane %v3346, 5
        %v3349 = vsel %vm3085, %v3344, %v3348
        %v3351 = vshrl.u32 %v3062, 16
        %v3353 = vrot.slane %v3351, 4
        %v3354 = vshll.u32 %v3062, 16
        %v3356 = vrot.slane %v3354, 5
        %v3357 = vor.u32 %v3353, %v3356
        %v3358 = vrot.slane %v3357, 4
        %v3360 = vshll.u32 %v3063, 16
        %v3362 = vrot.slane %v3360, 5
        %v3363 = vsel %vm3085, %v3358, %v3362
        %v3364 = vshrl.u32 %v3063, 16
        %v3366 = vrot.slane %v3364, 4
        %v3367 = vor.u32 %v3366, %v3362
        %v3368 = vrot.slane %v3367, 4
        %v3370 = vshll.u32 %v3064, 16
        %v3372 = vrot.slane %v3370, 5
        %v3373 = vsel %vm3085, %v3368, %v3372
        %v3375 = vshrl.u32 %v3065, 16
        %v3377 = vrot.slane %v3375, 4
        %v3378 = vshll.u32 %v3065, 16
        %v3380 = vrot.slane %v3378, 5
        %v3381 = vor.u32 %v3377, %v3380
        %v3382 = vrot.slane %v3381, 4
        %v3384 = vshll.u32 %v3066, 16
        %v3386 = vrot.slane %v3384, 5
        %v3387 = vsel %vm3085, %v3382, %v3386
        %v3388 = vshrl.u32 %v3066, 16
        %v3390 = vrot.slane %v3388, 4
        %v3391 = vor.u32 %v3390, %v3386
        %v3392 = vrot.slane %v3391, 4
        %v3394 = vshll.u32 %v3067, 16
        %v3396 = vrot.slane %v3394, 5
        %v3397 = vsel %vm3085, %v3392, %v3396
        %v3399 = vshrl.u32 %v3068, 16
        %v3401 = vrot.slane %v3399, 4
        %v3402 = vshll.u32 %v3068, 16
        %v3404 = vrot.slane %v3402, 5
        %v3405 = vor.u32 %v3401, %v3404
        %v3406 = vrot.slane %v3405, 4
        %v3408 = vshll.u32 %v3069, 16
        %v3410 = vrot.slane %v3408, 5
        %v3411 = vsel %vm3085, %v3406, %v3410
        %v3412 = vshrl.u32 %v3069, 16
        %v3414 = vrot.slane %v3412, 4
        %v3415 = vor.u32 %v3414, %v3410
        %v3416 = vrot.slane %v3415, 4
        %v3418 = vshll.u32 %v3070, 16
        %v3420 = vrot.slane %v3418, 5
        %v3421 = vsel %vm3085, %v3416, %v3420
        %v3423 = vshrl.u32 %v3071, 16
        %v3425 = vrot.slane %v3423, 4
        %v3426 = vshll.u32 %v3071, 16
        %v3428 = vrot.slane %v3426, 5
        %v3429 = vor.u32 %v3425, %v3428
        %v3430 = vrot.slane %v3429, 4
        %v3432 = vshll.u32 %v3072, 16
        %v3434 = vrot.slane %v3432, 5
        %v3435 = vsel %vm3085, %v3430, %v3434
        %v3436 = vshrl.u32 %v3072, 16
        %v3438 = vrot.slane %v3436, 4
        %v3439 = vor.u32 %v3438, %v3434
        %v3440 = vrot.slane %v3439, 4
        %v3442 = vshll.u32 %v3073, 16
        %v3444 = vrot.slane %v3442, 5
        %v3445 = vsel %vm3085, %v3440, %v3444
        %v3447 = vshrl.u32 %v3074, 16
        %v3449 = vrot.slane %v3447, 4
        %v3450 = vshll.u32 %v3074, 16
        %v3452 = vrot.slane %v3450, 5
        %v3453 = vor.u32 %v3449, %v3452
        %v3454 = vrot.slane %v3453, 4
        %v3456 = vshll.u32 %v3075, 16
        %v3458 = vrot.slane %v3456, 5
        %v3459 = vsel %vm3085, %v3454, %v3458
        %v3460 = vshrl.u32 %v3075, 16
        %v3462 = vrot.slane %v3460, 4
        %v3463 = vor.u32 %v3462, %v3458
        %v3464 = vrot.slane %v3463, 4
        %v3466 = vshll.u32 %v3076, 16
        %v3468 = vrot.slane %v3466, 5
        %v3469 = vsel %vm3085, %v3464, %v3468
        %vm3518 = vcmask 1042432
        %vm3519 = vcmask 1046532
        %vm3520 = vmor %vm3518, %vm3519
        %v3521 = vrot.slane %v3029, 5
        %v3522 = vrot.slane %v3521, 4
        %v3523 = vrot.slane %v3030, 5
        %v3524 = vsel %vm3520, %v3522, %v3523
        %v3525 = vrot.slane %v3523, 4
        %v3526 = vrot.slane %v3031, 5
        %v3527 = vsel %vm3520, %v3525, %v3526
        %v3528 = vrot.slane %v3032, 5
        %v3529 = vrot.slane %v3528, 4
        %v3530 = vrot.slane %v3033, 5
        %v3531 = vsel %vm3520, %v3529, %v3530
        %v3532 = vrot.slane %v3530, 4
        %v3533 = vrot.slane %v3034, 5
        %v3534 = vsel %vm3520, %v3532, %v3533
        %v3535 = vrot.slane %v3035, 5
        %v3536 = vrot.slane %v3535, 4
        %v3537 = vrot.slane %v3036, 5
        %v3538 = vsel %vm3520, %v3536, %v3537
        %v3539 = vrot.slane %v3537, 4
        %v3540 = vrot.slane %v3037, 5
        %v3541 = vsel %vm3520, %v3539, %v3540
        %v3542 = vrot.slane %v3038, 5
        %v3543 = vrot.slane %v3542, 4
        %v3544 = vrot.slane %v3039, 5
        %v3545 = vsel %vm3520, %v3543, %v3544
        %v3546 = vrot.slane %v3544, 4
        %v3547 = vrot.slane %v3040, 5
        %v3548 = vsel %vm3520, %v3546, %v3547
        %v3549 = vrot.slane %v3041, 5
        %v3550 = vrot.slane %v3549, 4
        %v3551 = vrot.slane %v3042, 5
        %v3552 = vsel %vm3520, %v3550, %v3551
        %v3553 = vrot.slane %v3551, 4
        %v3554 = vrot.slane %v3043, 5
        %v3555 = vsel %vm3520, %v3553, %v3554
        %v3556 = vrot.slane %v3044, 5
        %v3557 = vrot.slane %v3556, 4
        %v3558 = vrot.slane %v3045, 5
        %v3559 = vsel %vm3520, %v3557, %v3558
        %v3560 = vrot.slane %v3558, 4
        %v3561 = vrot.slane %v3046, 5
        %v3562 = vsel %vm3520, %v3560, %v3561
        %v3563 = vrot.slane %v3047, 5
        %v3564 = vrot.slane %v3563, 4
        %v3565 = vrot.slane %v3048, 5
        %v3566 = vsel %vm3520, %v3564, %v3565
        %v3567 = vrot.slane %v3565, 4
        %v3568 = vrot.slane %v3049, 5
        %v3569 = vsel %vm3520, %v3567, %v3568
        %v3570 = vrot.slane %v3050, 5
        %v3571 = vrot.slane %v3570, 4
        %v3572 = vrot.slane %v3051, 5
        %v3573 = vsel %vm3520, %v3571, %v3572
        %v3574 = vrot.slane %v3572, 4
        %v3575 = vrot.slane %v3052, 5
        %v3576 = vsel %vm3520, %v3574, %v3575
        %v3577 = vrot.slane %v3053, 5
        %v3578 = vrot.slane %v3577, 4
        %v3579 = vrot.slane %v3054, 5
        %v3580 = vsel %vm3520, %v3578, %v3579
        %v3581 = vrot.slane %v3579, 4
        %v3582 = vrot.slane %v3055, 5
        %v3583 = vsel %vm3520, %v3581, %v3582
        %v3584 = vrot.slane %v3056, 5
        %v3585 = vrot.slane %v3584, 4
        %v3586 = vrot.slane %v3057, 5
        %v3587 = vsel %vm3520, %v3585, %v3586
        %v3588 = vrot.slane %v3586, 4
        %v3589 = vrot.slane %v3058, 5
        %v3590 = vsel %vm3520, %v3588, %v3589
        %v3591 = vrot.slane %v3059, 5
        %v3592 = vrot.slane %v3591, 4
        %v3593 = vrot.slane %v3060, 5
        %v3594 = vsel %vm3520, %v3592, %v3593
        %v3595 = vrot.slane %v3593, 4
        %v3596 = vrot.slane %v3061, 5
        %v3597 = vsel %vm3520, %v3595, %v3596
        %v3598 = vrot.slane %v3062, 5
        %v3599 = vrot.slane %v3598, 4
        %v3600 = vrot.slane %v3063, 5
        %v3601 = vsel %vm3520, %v3599, %v3600
        %v3602 = vrot.slane %v3600, 4
        %v3603 = vrot.slane %v3064, 5
        %v3604 = vsel %vm3520, %v3602, %v3603
        %v3605 = vrot.slane %v3065, 5
        %v3606 = vrot.slane %v3605, 4
        %v3607 = vrot.slane %v3066, 5
        %v3608 = vsel %vm3520, %v3606, %v3607
        %v3609 = vrot.slane %v3607, 4
        %v3610 = vrot.slane %v3067, 5
        %v3611 = vsel %vm3520, %v3609, %v3610
        %v3612 = vrot.slane %v3068, 5
        %v3613 = vrot.slane %v3612, 4
        %v3614 = vrot.slane %v3069, 5
        %v3615 = vsel %vm3520, %v3613, %v3614
        %v3616 = vrot.slane %v3614, 4
        %v3617 = vrot.slane %v3070, 5
        %v3618 = vsel %vm3520, %v3616, %v3617
        %v3619 = vrot.slane %v3071, 5
        %v3620 = vrot.slane %v3619, 4
        %v3621 = vrot.slane %v3072, 5
        %v3622 = vsel %vm3520, %v3620, %v3621
        %v3623 = vrot.slane %v3621, 4
        %v3624 = vrot.slane %v3073, 5
        %v3625 = vsel %vm3520, %v3623, %v3624
        %v3626 = vrot.slane %v3074, 5
        %v3627 = vrot.slane %v3626, 4
        %v3628 = vrot.slane %v3075, 5
        %v3629 = vsel %vm3520, %v3627, %v3628
        %v3630 = vrot.slane %v3628, 4
        %v3631 = vrot.slane %v3076, 5
        %v3632 = vsel %vm3520, %v3630, %v3631
        %v3634 = vshrl.u32 %v3077, 16
        %v3636 = vrot.slane %v3634, 4
        %v3637 = vshll.u32 %v3077, 16
        %v3639 = vrot.slane %v3637, 5
        %v3640 = vor.u32 %v3636, %v3639
        %v3641 = vrot.slane %v3640, 4
        %v3643 = vshll.u32 %v3078, 16
        %v3645 = vrot.slane %v3643, 5
        %v3646 = vsel %vm3085, %v3641, %v3645
        %v3647 = vshrl.u32 %v3078, 16
        %v3649 = vrot.slane %v3647, 4
        %v3650 = vor.u32 %v3649, %v3645
        %v3651 = vrot.slane %v3650, 4
        %v3653 = vshll.u32 %v3079, 16
        %v3655 = vrot.slane %v3653, 5
        %v3656 = vsel %vm3085, %v3651, %v3655
        %v3660 = vrot.slane %v3077, 5
        %v3661 = vrot.slane %v3660, 4
        %v3662 = vrot.slane %v3078, 5
        %v3663 = vsel %vm3520, %v3661, %v3662
        %v3664 = vrot.slane %v3662, 4
        %v3665 = vrot.slane %v3079, 5
        %v3666 = vsel %vm3520, %v3664, %v3665
        %v3668 = vshrl.u32 %v3080, 16
        %v3670 = vrot.slane %v3668, 4
        %v3671 = vshll.u32 %v3080, 16
        %v3673 = vrot.slane %v3671, 5
        %v3674 = vor.u32 %v3670, %v3673
        %v3675 = vrot.slane %v3674, 4
        %v3677 = vshll.u32 %v3081, 16
        %v3679 = vrot.slane %v3677, 5
        %v3680 = vsel %vm3085, %v3675, %v3679
        %v3681 = vshrl.u32 %v3081, 16
        %v3683 = vrot.slane %v3681, 4
        %v3684 = vor.u32 %v3683, %v3679
        %v3685 = vrot.slane %v3684, 4
        %v3687 = vshll.u32 %v3082, 16
        %v3689 = vrot.slane %v3687, 5
        %v3690 = vsel %vm3085, %v3685, %v3689
        %v3694 = vrot.slane %v3080, 5
        %v3695 = vrot.slane %v3694, 4
        %v3696 = vrot.slane %v3081, 5
        %v3697 = vsel %vm3520, %v3695, %v3696
        %v3698 = vrot.slane %v3696, 4
        %v3699 = vrot.slane %v3082, 5
        %v3700 = vsel %vm3520, %v3698, %v3699
        %v3701 = vunpack.c.l.b16 %v3029
        %v3702 = vunpack.c.l.b16 %v3030
        %v3703 = vunpack.c.l.b16 %v3032
        %v3704 = vunpack.c.l.b16 %v3033
        %v3705 = vunpack.c.l.b16 %v3035
        %v3706 = vunpack.c.l.b16 %v3036
        %v3707 = vunpack.c.l.b16 %v3038
        %v3708 = vunpack.c.l.b16 %v3039
        %v3709 = vunpack.c.l.b16 %v3041
        %v3710 = vunpack.c.l.b16 %v3042
        %v3711 = vunpack.c.l.b16 %v3044
        %v3712 = vunpack.c.l.b16 %v3045
        %v3713 = vunpack.c.l.b16 %v3047
        %v3714 = vunpack.c.l.b16 %v3048
        %v3715 = vunpack.c.l.b16 %v3050
        %v3716 = vunpack.c.l.b16 %v3051
        %v3717 = vunpack.c.l.b16 %v3053
        %v3718 = vunpack.c.l.b16 %v3054
        %v3719 = vunpack.c.l.b16 %v3056
        %v3720 = vunpack.c.l.b16 %v3057
        %v3721 = vunpack.c.l.b16 %v3059
        %v3722 = vunpack.c.l.b16 %v3060
        %v3723 = vunpack.c.l.b16 %v3062
        %v3724 = vunpack.c.l.b16 %v3063
        %v3725 = vunpack.c.l.b16 %v3065
        %v3726 = vunpack.c.l.b16 %v3066
        %v3727 = vunpack.c.l.b16 %v3068
        %v3728 = vunpack.c.l.b16 %v3069
        %v3729 = vunpack.c.l.b16 %v3071
        %v3730 = vunpack.c.l.b16 %v3072
        %v3731 = vunpack.c.l.b16 %v3074
        %v3732 = vunpack.c.l.b16 %v3075
        %v3733 = vpack.c.b16 %v3702, %v3701
        %v3734 = vpack.c.b16 %v3704, %v3703
        %v3735 = vpack.c.b16 %v3706, %v3705
        %v3736 = vpack.c.b16 %v3708, %v3707
        %v3737 = vpack.c.b16 %v3710, %v3709
        %v3738 = vpack.c.b16 %v3712, %v3711
        %v3739 = vpack.c.b16 %v3714, %v3713
        %v3740 = vpack.c.b16 %v3716, %v3715
        %v3741 = vpack.c.b16 %v3718, %v3717
        %v3742 = vpack.c.b16 %v3720, %v3719
        %v3743 = vpack.c.b16 %v3722, %v3721
        %v3744 = vpack.c.b16 %v3724, %v3723
        %v3745 = vpack.c.b16 %v3726, %v3725
        %v3746 = vpack.c.b16 %v3728, %v3727
        %v3747 = vpack.c.b16 %v3730, %v3729
        %v3748 = vpack.c.b16 %v3732, %v3731
        %v3765 = vunpack.c.l.b16 %v3099
        %v3766 = vunpack.c.l.b16 %v3109
        %v3767 = vunpack.c.l.b16 %v3123
        %v3768 = vunpack.c.l.b16 %v3133
        %v3769 = vunpack.c.l.b16 %v3147
        %v3770 = vunpack.c.l.b16 %v3157
        %v3771 = vunpack.c.l.b16 %v3171
        %v3772 = vunpack.c.l.b16 %v3181
        %v3773 = vunpack.c.l.b16 %v3195
        %v3774 = vunpack.c.l.b16 %v3205
        %v3775 = vunpack.c.l.b16 %v3219
        %v3776 = vunpack.c.l.b16 %v3229
        %v3777 = vunpack.c.l.b16 %v3243
        %v3778 = vunpack.c.l.b16 %v3253
        %v3779 = vunpack.c.l.b16 %v3267
        %v3780 = vunpack.c.l.b16 %v3277
        %v3781 = vunpack.c.l.b16 %v3291
        %v3782 = vunpack.c.l.b16 %v3301
        %v3783 = vunpack.c.l.b16 %v3315
        %v3784 = vunpack.c.l.b16 %v3325
        %v3785 = vunpack.c.l.b16 %v3339
        %v3786 = vunpack.c.l.b16 %v3349
        %v3787 = vunpack.c.l.b16 %v3363
        %v3788 = vunpack.c.l.b16 %v3373
        %v3789 = vunpack.c.l.b16 %v3387
        %v3790 = vunpack.c.l.b16 %v3397
        %v3791 = vunpack.c.l.b16 %v3411
        %v3792 = vunpack.c.l.b16 %v3421
        %v3793 = vunpack.c.l.b16 %v3435
        %v3794 = vunpack.c.l.b16 %v3445
        %v3795 = vunpack.c.l.b16 %v3459
        %v3796 = vunpack.c.l.b16 %v3469
        %v3797 = vpack.c.b16 %v3766, %v3765
        %v3798 = vpack.c.b16 %v3768, %v3767
        %v3799 = vpack.c.b16 %v3770, %v3769
        %v3800 = vpack.c.b16 %v3772, %v3771
        %v3801 = vpack.c.b16 %v3774, %v3773
        %v3802 = vpack.c.b16 %v3776, %v3775
        %v3803 = vpack.c.b16 %v3778, %v3777
        %v3804 = vpack.c.b16 %v3780, %v3779
        %v3805 = vpack.c.b16 %v3782, %v3781
        %v3806 = vpack.c.b16 %v3784, %v3783
        %v3807 = vpack.c.b16 %v3786, %v3785
        %v3808 = vpack.c.b16 %v3788, %v3787
        %v3809 = vpack.c.b16 %v3790, %v3789
        %v3810 = vpack.c.b16 %v3792, %v3791
        %v3811 = vpack.c.b16 %v3794, %v3793
        %v3812 = vpack.c.b16 %v3796, %v3795
        %v3829 = vunpack.c.l.b16 %v3524
        %v3830 = vunpack.c.l.b16 %v3527
        %v3831 = vunpack.c.l.b16 %v3531
        %v3832 = vunpack.c.l.b16 %v3534
        %v3833 = vunpack.c.l.b16 %v3538
        %v3834 = vunpack.c.l.b16 %v3541
        %v3835 = vunpack.c.l.b16 %v3545
        %v3836 = vunpack.c.l.b16 %v3548
        %v3837 = vunpack.c.l.b16 %v3552
        %v3838 = vunpack.c.l.b16 %v3555
        %v3839 = vunpack.c.l.b16 %v3559
        %v3840 = vunpack.c.l.b16 %v3562
        %v3841 = vunpack.c.l.b16 %v3566
        %v3842 = vunpack.c.l.b16 %v3569
        %v3843 = vunpack.c.l.b16 %v3573
        %v3844 = vunpack.c.l.b16 %v3576
        %v3845 = vunpack.c.l.b16 %v3580
        %v3846 = vunpack.c.l.b16 %v3583
        %v3847 = vunpack.c.l.b16 %v3587
        %v3848 = vunpack.c.l.b16 %v3590
        %v3849 = vunpack.c.l.b16 %v3594
        %v3850 = vunpack.c.l.b16 %v3597
        %v3851 = vunpack.c.l.b16 %v3601
        %v3852 = vunpack.c.l.b16 %v3604
        %v3853 = vunpack.c.l.b16 %v3608
        %v3854 = vunpack.c.l.b16 %v3611
        %v3855 = vunpack.c.l.b16 %v3615
        %v3856 = vunpack.c.l.b16 %v3618
        %v3857 = vunpack.c.l.b16 %v3622
        %v3858 = vunpack.c.l.b16 %v3625
        %v3859 = vunpack.c.l.b16 %v3629
        %v3860 = vunpack.c.l.b16 %v3632
        %v3861 = vpack.c.b16 %v3830, %v3829
        %v3862 = vpack.c.b16 %v3832, %v3831
        %v3863 = vpack.c.b16 %v3834, %v3833
        %v3864 = vpack.c.b16 %v3836, %v3835
        %v3865 = vpack.c.b16 %v3838, %v3837
        %v3866 = vpack.c.b16 %v3840, %v3839
        %v3867 = vpack.c.b16 %v3842, %v3841
        %v3868 = vpack.c.b16 %v3844, %v3843
        %v3869 = vpack.c.b16 %v3846, %v3845
        %v3870 = vpack.c.b16 %v3848, %v3847
        %v3871 = vpack.c.b16 %v3850, %v3849
        %v3872 = vpack.c.b16 %v3852, %v3851
        %v3873 = vpack.c.b16 %v3854, %v3853
        %v3874 = vpack.c.b16 %v3856, %v3855
        %v3875 = vpack.c.b16 %v3858, %v3857
        %v3876 = vpack.c.b16 %v3860, %v3859
        %v3893 = vunpack.c.l.b16 %v3077
        %v3894 = vunpack.c.l.b16 %v3078
        %v3895 = vpack.c.b16 %v3894, %v3893
        %v3897 = vunpack.c.l.b16 %v3646
        %v3898 = vunpack.c.l.b16 %v3656
        %v3899 = vpack.c.b16 %v3898, %v3897
        %v3901 = vunpack.c.l.b16 %v3663
        %v3902 = vunpack.c.l.b16 %v3666
        %v3903 = vpack.c.b16 %v3902, %v3901
        %v3905 = vunpack.c.l.b16 %v3080
        %v3906 = vunpack.c.l.b16 %v3081
        %v3907 = vpack.c.b16 %v3906, %v3905
        %v3909 = vunpack.c.l.b16 %v3680
        %v3910 = vunpack.c.l.b16 %v3690
        %v3911 = vpack.c.b16 %v3910, %v3909
        %v3913 = vunpack.c.l.b16 %v3697
        %v3914 = vunpack.c.l.b16 %v3700
        %v3915 = vpack.c.b16 %v3914, %v3913
        %v3917 = vld [vmem:[%s2] sm:$0xf]
        %v3918 = vld [vmem:[%s2 + $0x4] sm:$0xf]
        %v3919 = vld [vmem:[%s2 + $0x8] sm:$0xf]
        %v3920 = vld [vmem:[%s2 + $0xc] sm:$0xf]
        %v3921 = vld [vmem:[%s2 + $0x10] sm:$0xf]
        %v3922 = vld [vmem:[%s2 + $0x14] sm:$0xf]
        %v3923 = vld [vmem:[%s2 + $0x18] sm:$0xf]
        %v3924 = vld [vmem:[%s2 + $0x1c] sm:$0xf]
        %v3925 = vld [vmem:[%s2 + $0x20] sm:$0xf]
        %v3926 = vld [vmem:[%s2 + $0x24] sm:$0xf]
        %v3927 = vld [vmem:[%s2 + $0x28] sm:$0xf]
        %v3928 = vld [vmem:[%s2 + $0x2c] sm:$0xf]
        %v3929 = vld [vmem:[%s2 + $0x30] sm:$0xf]
        %v3930 = vld [vmem:[%s2 + $0x34] sm:$0xf]
        %v3931 = vld [vmem:[%s2 + $0x38] sm:$0xf]
        %v3932 = vld [vmem:[%s2 + $0x3c] sm:$0xf]
        %v3933 = vld [vmem:[%s2 + $0x40] sm:$0xf]
        %v3934 = vld [vmem:[%s2 + $0x44] sm:$0xf]
        %v3935 = vld [vmem:[%s2 + $0x48] sm:$0xf]
        %v3936 = vld [vmem:[%s2 + $0x4c] sm:$0xf]
        %v3937 = vld [vmem:[%s2 + $0x50] sm:$0xf]
        %v3938 = vld [vmem:[%s2 + $0x54] sm:$0xf]
        %v3939 = vld [vmem:[%s2 + $0x58] sm:$0xf]
        %v3940 = vld [vmem:[%s2 + $0x5c] sm:$0xf]
        %v3941 = vld [vmem:[%s2 + $0x60] sm:$0xf]
        %v3942 = vld [vmem:[%s2 + $0x64] sm:$0xf]
        %v3943 = vld [vmem:[%s2 + $0x68] sm:$0xf]
        %v3944 = vld [vmem:[%s2 + $0x6c] sm:$0xf]
        %v3945 = vld [vmem:[%s2 + $0x70] sm:$0xf]
        %v3946 = vld [vmem:[%s2 + $0x74] sm:$0xf]
        %v3947 = vld [vmem:[%s2 + $0x78] sm:$0xf]
        %v3948 = vld [vmem:[%s2 + $0x7c] sm:$0xf]
        %v3949 = vld [vmem:[%s2 + $0x80] sm:$0xf]
        %v3950 = vld [vmem:[%s2 + $0x84] sm:$0xf]
        %v3951 = vld [vmem:[%s2 + $0x88] sm:$0xf]
        %v3952 = vld [vmem:[%s2 + $0x8c] sm:$0xf]
        %v3953 = vld [vmem:[%s2 + $0x90] sm:$0xf]
        %v3954 = vld [vmem:[%s2 + $0x94] sm:$0xf]
        %v3955 = vld [vmem:[%s2 + $0x98] sm:$0xf]
        %v3956 = vld [vmem:[%s2 + $0x9c] sm:$0xf]
        %v3957 = vld [vmem:[%s2 + $0xa0] sm:$0xf]
        %v3958 = vld [vmem:[%s2 + $0xa4] sm:$0xf]
        %v3959 = vld [vmem:[%s2 + $0xa8] sm:$0xf]
        %v3960 = vld [vmem:[%s2 + $0xac] sm:$0xf]
        %v3961 = vld [vmem:[%s2 + $0xb0] sm:$0xf]
        %v3962 = vld [vmem:[%s2 + $0xb4] sm:$0xf]
        %v3963 = vld [vmem:[%s2 + $0xb8] sm:$0xf]
        %v3964 = vld [vmem:[%s2 + $0xbc] sm:$0xf]
        %v3965 = vld [vmem:[%s2 + $0xc0] sm:$0xf]
        %v3966 = vld [vmem:[%s2 + $0xc4] sm:$0xf]
        %v3967 = vld [vmem:[%s2 + $0xc8] sm:$0xf]
        %v3968 = vld [vmem:[%s2 + $0xcc] sm:$0xf]
        %v3969 = vld [vmem:[%s2 + $0xd0] sm:$0xf]
        %v3970 = vld [vmem:[%s2 + $0xd4] sm:$0xf]
        %v3971 = vld [vmem:[%s2 + $0xd8] sm:$0xf]
        %v3972 = vld [vmem:[%s2 + $0xdc] sm:$0xf]
        %v3973 = vld [vmem:[%s2 + $0xe0] sm:$0xf]
        %v3974 = vld [vmem:[%s2 + $0xe4] sm:$0xf]
        %v3975 = vld [vmem:[%s2 + $0xe8] sm:$0xf]
        %v3976 = vld [vmem:[%s2 + $0xec] sm:$0xf]
        %v3977 = vld [vmem:[%s2 + $0xf0] sm:$0xf]
        %v3978 = vld [vmem:[%s2 + $0xf4] sm:$0xf]
        %v3979 = vld [vmem:[%s2 + $0xf8] sm:$0xf]
        %v3980 = vld [vmem:[%s2 + $0xfc] sm:$0xf]
        %v3981 = vld [vmem:[%s2 + $0x100] sm:$0xf]
        %v3982 = vld [vmem:[%s2 + $0x104] sm:$0xf]
        %v3983 = vld [vmem:[%s2 + $0x108] sm:$0xf]
        %v3984 = vld [vmem:[%s2 + $0x10c] sm:$0xf]
        %v3985 = vld [vmem:[%s2 + $0x110] sm:$0xf]
        %v3986 = vld [vmem:[%s2 + $0x114] sm:$0xf]
        %v3987 = vld [vmem:[%s2 + $0x118] sm:$0xf]
        %v3988 = vld [vmem:[%s2 + $0x11c] sm:$0xf]
        %v3989 = vld [vmem:[%s2 + $0x120] sm:$0xf]
        %v3990 = vld [vmem:[%s2 + $0x124] sm:$0xf]
        %v3991 = vld [vmem:[%s2 + $0x128] sm:$0xf]
        %v3992 = vld [vmem:[%s2 + $0x12c] sm:$0xf]
        %v3993 = vld [vmem:[%s2 + $0x130] sm:$0xf]
        %v3994 = vld [vmem:[%s2 + $0x134] sm:$0xf]
        %v3995 = vld [vmem:[%s2 + $0x138] sm:$0xf]
        %v3996 = vld [vmem:[%s2 + $0x13c] sm:$0xf]
        %v3997 = vld [vmem:[%s2 + $0x140] sm:$0xf]
        %v3998 = vld [vmem:[%s2 + $0x144] sm:$0xf]
        %v3999 = vld [vmem:[%s2 + $0x148] sm:$0xf]
        %v4000 = vld [vmem:[%s2 + $0x14c] sm:$0xf]
        %v4001 = vld [vmem:[%s2 + $0x150] sm:$0xf]
        %v4002 = vld [vmem:[%s2 + $0x154] sm:$0xf]
        %v4003 = vld [vmem:[%s2 + $0x158] sm:$0xf]
        %v4004 = vld [vmem:[%s2 + $0x15c] sm:$0xf]
        %v4005 = vld [vmem:[%s2 + $0x160] sm:$0xf]
        %v4006 = vld [vmem:[%s2 + $0x164] sm:$0xf]
        %v4007 = vld [vmem:[%s2 + $0x168] sm:$0xf]
        %v4008 = vld [vmem:[%s2 + $0x16c] sm:$0xf]
        %v4009 = vld [vmem:[%s2 + $0x170] sm:$0xf]
        %v4010 = vld [vmem:[%s2 + $0x174] sm:$0xf]
        %v4011 = vld [vmem:[%s2 + $0x178] sm:$0xf]
        %v4012 = vld [vmem:[%s2 + $0x17c] sm:$0xf]
        %v4013 = vld [vmem:[%s2 + $0x180] sm:$0xf]
        %v4014 = vld [vmem:[%s2 + $0x184] sm:$0xf]
        %v4015 = vld [vmem:[%s2 + $0x188] sm:$0xf]
        %v4016 = vld [vmem:[%s2 + $0x18c] sm:$0xf]
        %v4017 = vld [vmem:[%s2 + $0x190] sm:$0xf]
        %v4018 = vld [vmem:[%s2 + $0x194] sm:$0xf]
        %v4019 = vld [vmem:[%s2 + $0x198] sm:$0xf]
        %v4020 = vld [vmem:[%s2 + $0x19c] sm:$0xf]
        %v4021 = vld [vmem:[%s2 + $0x1a0] sm:$0xf]
        %v4022 = vld [vmem:[%s2 + $0x1a4] sm:$0xf]
        %v4023 = vld [vmem:[%s2 + $0x1a8] sm:$0xf]
        %v4024 = vld [vmem:[%s2 + $0x1ac] sm:$0xf]
        %v4025 = vld [vmem:[%s2 + $0x1b0] sm:$0xf]
        %v4026 = vld [vmem:[%s2 + $0x1b4] sm:$0xf]
        %v4027 = vld [vmem:[%s2 + $0x1b8] sm:$0xf]
        %v4028 = vld [vmem:[%s2 + $0x1bc] sm:$0xf]
        %v4029 = vld [vmem:[%s2 + $0x1c0] sm:$0xf]
        %v4030 = vld [vmem:[%s2 + $0x1c4] sm:$0xf]
        %v4031 = vld [vmem:[%s2 + $0x1c8] sm:$0xf]
        %v4032 = vld [vmem:[%s2 + $0x1cc] sm:$0xf]
        %v4033 = vld [vmem:[%s2 + $0x1d0] sm:$0xf]
        %v4034 = vld [vmem:[%s2 + $0x1d4] sm:$0xf]
        %v4035 = vld [vmem:[%s2 + $0x1d8] sm:$0xf]
        %v4036 = vld [vmem:[%s2 + $0x1dc] sm:$0xf]
        %v4037 = vld [vmem:[%s2 + $0x1e0] sm:$0xf]
        %v4038 = vld [vmem:[%s2 + $0x1e4] sm:$0xf]
        %v4039 = vld [vmem:[%s2 + $0x1e8] sm:$0xf]
        %v4040 = vld [vmem:[%s2 + $0x1ec] sm:$0xf]
        %v4041 = vld [vmem:[%s2 + $0x1f0] sm:$0xf]
        %v4042 = vld [vmem:[%s2 + $0x1f4] sm:$0xf]
        %v4043 = vld [vmem:[%s2 + $0x1f8] sm:$0xf]
        %v4044 = vld [vmem:[%s2 + $0x1fc] sm:$0xf]
        %v4045 = vld [vmem:[%s2 + $0x200] sm:$0xf]
        %v4046 = vld [vmem:[%s2 + $0x204] sm:$0xf]
        %v4047 = vld [vmem:[%s2 + $0x208] sm:$0xf]
        %v4048 = vld [vmem:[%s2 + $0x20c] sm:$0xf]
        %v4049 = vld [vmem:[%s2 + $0x210] sm:$0xf]
        %v4050 = vld [vmem:[%s2 + $0x214] sm:$0xf]
        %v4051 = vld [vmem:[%s2 + $0x218] sm:$0xf]
        %v4052 = vld [vmem:[%s2 + $0x21c] sm:$0xf]
        %v4053 = vld [vmem:[%s2 + $0x220] sm:$0xf]
        %v4054 = vld [vmem:[%s2 + $0x224] sm:$0xf]
        %v4055 = vld [vmem:[%s2 + $0x228] sm:$0xf]
        %v4056 = vld [vmem:[%s2 + $0x22c] sm:$0xf]
        %v4057 = vld [vmem:[%s2 + $0x230] sm:$0xf]
        %v4058 = vld [vmem:[%s2 + $0x234] sm:$0xf]
        %v4059 = vld [vmem:[%s2 + $0x238] sm:$0xf]
        %v4060 = vld [vmem:[%s2 + $0x23c] sm:$0xf]
        %v4061 = vld [vmem:[%s3 + $0x1] sm:$0x1]
        %v4062 = vperm.slane %v4061, 0
        %v4207 = vunpack.c.l.b16 %v3917
        %v4208 = vunpack.c.l.b16 %v3918
        %v4209 = vunpack.c.l.b16 %v3919
        %v4210 = vunpack.c.l.b16 %v3920
        %v4211 = vunpack.c.l.b16 %v3921
        %v4212 = vunpack.c.l.b16 %v3922
        %v4213 = vunpack.c.l.b16 %v3923
        %v4214 = vunpack.c.l.b16 %v3924
        %v4215 = vunpack.c.l.b16 %v3925
        %v4216 = vunpack.c.l.b16 %v3926
        %v4217 = vunpack.c.l.b16 %v3927
        %v4218 = vunpack.c.l.b16 %v3928
        %v4219 = vunpack.c.l.b16 %v3929
        %v4220 = vunpack.c.l.b16 %v3930
        %v4221 = vunpack.c.l.b16 %v3931
        %v4222 = vunpack.c.l.b16 %v3932
        %v4223 = vunpack.c.l.b16 %v3933
        %v4224 = vunpack.c.l.b16 %v3934
        %v4225 = vunpack.c.l.b16 %v3935
        %v4226 = vunpack.c.l.b16 %v3936
        %v4227 = vunpack.c.l.b16 %v3937
        %v4228 = vunpack.c.l.b16 %v3938
        %v4229 = vunpack.c.l.b16 %v3939
        %v4230 = vunpack.c.l.b16 %v3940
        %v4231 = vunpack.c.l.b16 %v3941
        %v4232 = vunpack.c.l.b16 %v3942
        %v4233 = vunpack.c.l.b16 %v3943
        %v4234 = vunpack.c.l.b16 %v3944
        %v4235 = vunpack.c.l.b16 %v3945
        %v4236 = vunpack.c.l.b16 %v3946
        %v4237 = vunpack.c.l.b16 %v3947
        %v4238 = vunpack.c.l.b16 %v3948
        %v4239 = vunpack.c.l.b16 %v3949
        %v4240 = vunpack.c.l.b16 %v3950
        %v4241 = vunpack.c.l.b16 %v3951
        %v4242 = vunpack.c.l.b16 %v3952
        %v4243 = vunpack.c.l.b16 %v3953
        %v4244 = vunpack.c.l.b16 %v3954
        %v4245 = vunpack.c.l.b16 %v3955
        %v4246 = vunpack.c.l.b16 %v3956
        %v4247 = vunpack.c.l.b16 %v3957
        %v4248 = vunpack.c.l.b16 %v3958
        %v4249 = vunpack.c.l.b16 %v3959
        %v4250 = vunpack.c.l.b16 %v3960
        %v4251 = vunpack.c.l.b16 %v3961
        %v4252 = vunpack.c.l.b16 %v3962
        %v4253 = vunpack.c.l.b16 %v3963
        %v4254 = vunpack.c.l.b16 %v3964
        %v4255 = vunpack.c.l.b16 %v3965
        %v4256 = vunpack.c.l.b16 %v3966
        %v4257 = vunpack.c.l.b16 %v3967
        %v4258 = vunpack.c.l.b16 %v3968
        %v4259 = vunpack.c.l.b16 %v3969
        %v4260 = vunpack.c.l.b16 %v3970
        %v4261 = vunpack.c.l.b16 %v3971
        %v4262 = vunpack.c.l.b16 %v3972
        %v4263 = vunpack.c.l.b16 %v3973
        %v4264 = vunpack.c.l.b16 %v3974
        %v4265 = vunpack.c.l.b16 %v3975
        %v4266 = vunpack.c.l.b16 %v3976
        %v4267 = vunpack.c.l.b16 %v3977
        %v4268 = vunpack.c.l.b16 %v3978
        %v4269 = vunpack.c.l.b16 %v3979
        %v4270 = vunpack.c.l.b16 %v3980
        %v4271 = vunpack.c.l.b16 %v3981
        %v4272 = vunpack.c.l.b16 %v3982
        %v4273 = vunpack.c.l.b16 %v3983
        %v4274 = vunpack.c.l.b16 %v3984
        %v4275 = vunpack.c.l.b16 %v3985
        %v4276 = vunpack.c.l.b16 %v3986
        %v4277 = vunpack.c.l.b16 %v3987
        %v4278 = vunpack.c.l.b16 %v3988
        %v4279 = vunpack.c.l.b16 %v3989
        %v4280 = vunpack.c.l.b16 %v3990
        %v4281 = vunpack.c.l.b16 %v3991
        %v4282 = vunpack.c.l.b16 %v3992
        %v4283 = vunpack.c.l.b16 %v3993
        %v4284 = vunpack.c.l.b16 %v3994
        %v4285 = vunpack.c.l.b16 %v3995
        %v4286 = vunpack.c.l.b16 %v3996
        %v4287 = vunpack.c.l.b16 %v3997
        %v4288 = vunpack.c.l.b16 %v3998
        %v4289 = vunpack.c.l.b16 %v3999
        %v4290 = vunpack.c.l.b16 %v4000
        %v4291 = vunpack.c.l.b16 %v4001
        %v4292 = vunpack.c.l.b16 %v4002
        %v4293 = vunpack.c.l.b16 %v4003
        %v4294 = vunpack.c.l.b16 %v4004
        %v4295 = vunpack.c.l.b16 %v4005
        %v4296 = vunpack.c.l.b16 %v4006
        %v4297 = vunpack.c.l.b16 %v4007
        %v4298 = vunpack.c.l.b16 %v4008
        %v4299 = vunpack.c.l.b16 %v4009
        %v4300 = vunpack.c.l.b16 %v4010
        %v4301 = vunpack.c.l.b16 %v4011
        %v4302 = vunpack.c.l.b16 %v4012
        %v4303 = vunpack.c.l.b16 %v4013
        %v4304 = vunpack.c.l.b16 %v4014
        %v4305 = vunpack.c.l.b16 %v4015
        %v4306 = vunpack.c.l.b16 %v4016
        %v4307 = vunpack.c.l.b16 %v4017
        %v4308 = vunpack.c.l.b16 %v4018
        %v4309 = vunpack.c.l.b16 %v4019
        %v4310 = vunpack.c.l.b16 %v4020
        %v4311 = vunpack.c.l.b16 %v4021
        %v4312 = vunpack.c.l.b16 %v4022
        %v4313 = vunpack.c.l.b16 %v4023
        %v4314 = vunpack.c.l.b16 %v4024
        %v4315 = vunpack.c.l.b16 %v4025
        %v4316 = vunpack.c.l.b16 %v4026
        %v4317 = vunpack.c.l.b16 %v4027
        %v4318 = vunpack.c.l.b16 %v4028
        %v4319 = vunpack.c.l.b16 %v4029
        %v4320 = vunpack.c.l.b16 %v4030
        %v4321 = vunpack.c.l.b16 %v4031
        %v4322 = vunpack.c.l.b16 %v4032
        %v4323 = vunpack.c.l.b16 %v4033
        %v4324 = vunpack.c.l.b16 %v4034
        %v4325 = vunpack.c.l.b16 %v4035
        %v4326 = vunpack.c.l.b16 %v4036
        %v4327 = vunpack.c.l.b16 %v4037
        %v4328 = vunpack.c.l.b16 %v4038
        %v4329 = vunpack.c.l.b16 %v4039
        %v4330 = vunpack.c.l.b16 %v4040
        %v4331 = vunpack.c.l.b16 %v4041
        %v4332 = vunpack.c.l.b16 %v4042
        %v4333 = vunpack.c.l.b16 %v4043
        %v4334 = vunpack.c.l.b16 %v4044
        %v4335 = vunpack.c.l.b16 %v4045
        %v4336 = vunpack.c.l.b16 %v4046
        %v4337 = vunpack.c.l.b16 %v4047
        %v4338 = vunpack.c.l.b16 %v4048
        %v4339 = vunpack.c.l.b16 %v4049
        %v4340 = vunpack.c.l.b16 %v4050
        %v4341 = vunpack.c.l.b16 %v4051
        %v4342 = vunpack.c.l.b16 %v4052
        %v4343 = vunpack.c.l.b16 %v4053
        %v4344 = vunpack.c.l.b16 %v4054
        %v4345 = vunpack.c.l.b16 %v4055
        %v4346 = vunpack.c.l.b16 %v4056
        %v4347 = vunpack.c.l.b16 %v4057
        %v4348 = vunpack.c.l.b16 %v4058
        %v4349 = vunpack.c.l.b16 %v4059
        %v4350 = vunpack.c.l.b16 %v4060
        %v4351 = vpack.c.b16 %v4208, %v4207
        %v4352 = vpack.c.b16 %v4210, %v4209
        %v4353 = vpack.c.b16 %v4212, %v4211
        %v4354 = vpack.c.b16 %v4214, %v4213
        %v4355 = vpack.c.b16 %v4216, %v4215
        %v4356 = vpack.c.b16 %v4218, %v4217
        %v4357 = vpack.c.b16 %v4220, %v4219
        %v4358 = vpack.c.b16 %v4222, %v4221
        %v4359 = vpack.c.b16 %v4224, %v4223
        %v4360 = vpack.c.b16 %v4226, %v4225
        %v4361 = vpack.c.b16 %v4228, %v4227
        %v4362 = vpack.c.b16 %v4230, %v4229
        %v4363 = vpack.c.b16 %v4232, %v4231
        %v4364 = vpack.c.b16 %v4234, %v4233
        %v4365 = vpack.c.b16 %v4236, %v4235
        %v4366 = vpack.c.b16 %v4238, %v4237
        %v4367 = vpack.c.b16 %v4240, %v4239
        %v4368 = vpack.c.b16 %v4242, %v4241
        %v4369 = vpack.c.b16 %v4244, %v4243
        %v4370 = vpack.c.b16 %v4246, %v4245
        %v4371 = vpack.c.b16 %v4248, %v4247
        %v4372 = vpack.c.b16 %v4250, %v4249
        %v4373 = vpack.c.b16 %v4252, %v4251
        %v4374 = vpack.c.b16 %v4254, %v4253
        %v4375 = vpack.c.b16 %v4256, %v4255
        %v4376 = vpack.c.b16 %v4258, %v4257
        %v4377 = vpack.c.b16 %v4260, %v4259
        %v4378 = vpack.c.b16 %v4262, %v4261
        %v4379 = vpack.c.b16 %v4264, %v4263
        %v4380 = vpack.c.b16 %v4266, %v4265
        %v4381 = vpack.c.b16 %v4268, %v4267
        %v4382 = vpack.c.b16 %v4270, %v4269
        %v4383 = vpack.c.b16 %v4272, %v4271
        %v4384 = vpack.c.b16 %v4274, %v4273
        %v4385 = vpack.c.b16 %v4276, %v4275
        %v4386 = vpack.c.b16 %v4278, %v4277
        %v4387 = vpack.c.b16 %v4280, %v4279
        %v4388 = vpack.c.b16 %v4282, %v4281
        %v4389 = vpack.c.b16 %v4284, %v4283
        %v4390 = vpack.c.b16 %v4286, %v4285
        %v4391 = vpack.c.b16 %v4288, %v4287
        %v4392 = vpack.c.b16 %v4290, %v4289
        %v4393 = vpack.c.b16 %v4292, %v4291
        %v4394 = vpack.c.b16 %v4294, %v4293
        %v4395 = vpack.c.b16 %v4296, %v4295
        %v4396 = vpack.c.b16 %v4298, %v4297
        %v4397 = vpack.c.b16 %v4300, %v4299
        %v4398 = vpack.c.b16 %v4302, %v4301
        %v4399 = vpack.c.b16 %v4304, %v4303
        %v4400 = vpack.c.b16 %v4306, %v4305
        %v4401 = vpack.c.b16 %v4308, %v4307
        %v4402 = vpack.c.b16 %v4310, %v4309
        %v4403 = vpack.c.b16 %v4312, %v4311
        %v4404 = vpack.c.b16 %v4314, %v4313
        %v4405 = vpack.c.b16 %v4316, %v4315
        %v4406 = vpack.c.b16 %v4318, %v4317
        %v4407 = vpack.c.b16 %v4320, %v4319
        %v4408 = vpack.c.b16 %v4322, %v4321
        %v4409 = vpack.c.b16 %v4324, %v4323
        %v4410 = vpack.c.b16 %v4326, %v4325
        %v4411 = vpack.c.b16 %v4328, %v4327
        %v4412 = vpack.c.b16 %v4330, %v4329
        %v4413 = vpack.c.b16 %v4332, %v4331
        %v4414 = vpack.c.b16 %v4334, %v4333
        %v4415 = vpack.c.b16 %v4336, %v4335
        %v4416 = vpack.c.b16 %v4338, %v4337
        %v4417 = vpack.c.b16 %v4340, %v4339
        %v4418 = vpack.c.b16 %v4342, %v4341
        %v4419 = vpack.c.b16 %v4344, %v4343
        %v4420 = vpack.c.b16 %v4346, %v4345
        %v4421 = vpack.c.b16 %v4348, %v4347
        %v4422 = vpack.c.b16 %v4350, %v4349
        %4495 = vmatpush.bf16.msra.mxu0 %v4358
        %4496 = vmatpush.bf16.msra.mxu0 %v4357
        %4497 = vmatpush.bf16.msra.mxu0 %v4356
        %4498 = vmatpush.bf16.msra.mxu0 %v4355
        %4499 = vmatpush.bf16.msra.mxu0 %v4354
        %4500 = vmatpush.bf16.msra.mxu0 %v4353
        %4501 = vmatpush.bf16.msra.mxu0 %v4352
        %4502 = vmatpush.bf16.msra.mxu0 %v4351
        %4503 = vmatmul.bf16.gmra.mxu0 %v3733
        %v4504 = vpop.f32.mrf.mxu0
        %v4505 = vadd.f32 %v4062, %v4504
        %v4506 = vpop.f32.mrf.mxu0
        %v4507 = vadd.f32 %v4062, %v4506
        %4508 = vmatmul.bf16.gmra.mxu0 %v3734
        %v4509 = vpop.f32.mrf.mxu0
        %v4510 = vadd.f32 %v4062, %v4509
        %v4511 = vpop.f32.mrf.mxu0
        %v4512 = vadd.f32 %v4062, %v4511
        %4513 = vmatmul.bf16.gmra.mxu0 %v3735
        %v4514 = vpop.f32.mrf.mxu0
        %v4515 = vadd.f32 %v4062, %v4514
        %v4516 = vpop.f32.mrf.mxu0
        %v4517 = vadd.f32 %v4062, %v4516
        %4518 = vmatmul.bf16.gmra.mxu0 %v3736
        %v4519 = vpop.f32.mrf.mxu0
        %v4520 = vadd.f32 %v4062, %v4519
        %v4521 = vpop.f32.mrf.mxu0
        %v4522 = vadd.f32 %v4062, %v4521
        %4523 = vmatmul.bf16.gmra.mxu0 %v3737
        %v4524 = vpop.f32.mrf.mxu0
        %v4525 = vadd.f32 %v4062, %v4524
        %v4526 = vpop.f32.mrf.mxu0
        %v4527 = vadd.f32 %v4062, %v4526
        %4528 = vmatmul.bf16.gmra.mxu0 %v3738
        %v4529 = vpop.f32.mrf.mxu0
        %v4530 = vadd.f32 %v4062, %v4529
        %v4531 = vpop.f32.mrf.mxu0
        %v4532 = vadd.f32 %v4062, %v4531
        %4533 = vmatmul.bf16.gmra.mxu0 %v3739
        %v4534 = vpop.f32.mrf.mxu0
        %v4535 = vadd.f32 %v4062, %v4534
        %v4536 = vpop.f32.mrf.mxu0
        %v4537 = vadd.f32 %v4062, %v4536
        %4538 = vmatmul.bf16.gmra.mxu0 %v3740
        %v4539 = vpop.f32.mrf.mxu0
        %v4540 = vadd.f32 %v4062, %v4539
        %v4541 = vpop.f32.mrf.mxu0
        %v4542 = vadd.f32 %v4062, %v4541
        %4543 = vmatmul.bf16.gmra.mxu0 %v3741
        %v4544 = vpop.f32.mrf.mxu0
        %v4545 = vadd.f32 %v4062, %v4544
        %v4546 = vpop.f32.mrf.mxu0
        %v4547 = vadd.f32 %v4062, %v4546
        %4548 = vmatmul.bf16.gmra.mxu0 %v3742
        %v4549 = vpop.f32.mrf.mxu0
        %v4550 = vadd.f32 %v4062, %v4549
        %v4551 = vpop.f32.mrf.mxu0
        %v4552 = vadd.f32 %v4062, %v4551
        %4553 = vmatmul.bf16.gmra.mxu0 %v3743
        %v4554 = vpop.f32.mrf.mxu0
        %v4555 = vadd.f32 %v4062, %v4554
        %v4556 = vpop.f32.mrf.mxu0
        %v4557 = vadd.f32 %v4062, %v4556
        %4558 = vmatmul.bf16.gmra.mxu0 %v3744
        %v4559 = vpop.f32.mrf.mxu0
        %v4560 = vadd.f32 %v4062, %v4559
        %v4561 = vpop.f32.mrf.mxu0
        %v4562 = vadd.f32 %v4062, %v4561
        %4563 = vmatmul.bf16.gmra.mxu0 %v3745
        %v4564 = vpop.f32.mrf.mxu0
        %v4565 = vadd.f32 %v4062, %v4564
        %v4566 = vpop.f32.mrf.mxu0
        %v4567 = vadd.f32 %v4062, %v4566
        %4568 = vmatmul.bf16.gmra.mxu0 %v3746
        %v4569 = vpop.f32.mrf.mxu0
        %v4570 = vadd.f32 %v4062, %v4569
        %v4571 = vpop.f32.mrf.mxu0
        %v4572 = vadd.f32 %v4062, %v4571
        %4573 = vmatmul.bf16.gmra.mxu0 %v3747
        %v4574 = vpop.f32.mrf.mxu0
        %v4575 = vadd.f32 %v4062, %v4574
        %v4576 = vpop.f32.mrf.mxu0
        %v4577 = vadd.f32 %v4062, %v4576
        %4578 = vmatmul.bf16.gmra.mxu0 %v3748
        %v4579 = vpop.f32.mrf.mxu0
        %v4580 = vadd.f32 %v4062, %v4579
        %v4581 = vpop.f32.mrf.mxu0
        %v4582 = vadd.f32 %v4062, %v4581
        %4583 = vdwg.mxu0
        %4584 = vmatpush.bf16.msra.mxu0 %v4366
        %4585 = vmatpush.bf16.msra.mxu0 %v4365
        %4586 = vmatpush.bf16.msra.mxu0 %v4364
        %4587 = vmatpush.bf16.msra.mxu0 %v4363
        %4588 = vmatpush.bf16.msra.mxu0 %v4362
        %4589 = vmatpush.bf16.msra.mxu0 %v4361
        %4590 = vmatpush.bf16.msra.mxu0 %v4360
        %4591 = vmatpush.bf16.msra.mxu0 %v4359
        %4592 = vmatmul.bf16.gmra.mxu0 %v3797
        %v4593 = vpop.f32.mrf.mxu0
        %v4594 = vadd.f32 %v4505, %v4593
        %v4595 = vpop.f32.mrf.mxu0
        %v4596 = vadd.f32 %v4507, %v4595
        %4597 = vmatmul.bf16.gmra.mxu0 %v3798
        %v4598 = vpop.f32.mrf.mxu0
        %v4599 = vadd.f32 %v4510, %v4598
        %v4600 = vpop.f32.mrf.mxu0
        %v4601 = vadd.f32 %v4512, %v4600
        %4602 = vmatmul.bf16.gmra.mxu0 %v3799
        %v4603 = vpop.f32.mrf.mxu0
        %v4604 = vadd.f32 %v4515, %v4603
        %v4605 = vpop.f32.mrf.mxu0
        %v4606 = vadd.f32 %v4517, %v4605
        %4607 = vmatmul.bf16.gmra.mxu0 %v3800
        %v4608 = vpop.f32.mrf.mxu0
        %v4609 = vadd.f32 %v4520, %v4608
        %v4610 = vpop.f32.mrf.mxu0
        %v4611 = vadd.f32 %v4522, %v4610
        %4612 = vmatmul.bf16.gmra.mxu0 %v3801
        %v4613 = vpop.f32.mrf.mxu0
        %v4614 = vadd.f32 %v4525, %v4613
        %v4615 = vpop.f32.mrf.mxu0
        %v4616 = vadd.f32 %v4527, %v4615
        %4617 = vmatmul.bf16.gmra.mxu0 %v3802
        %v4618 = vpop.f32.mrf.mxu0
        %v4619 = vadd.f32 %v4530, %v4618
        %v4620 = vpop.f32.mrf.mxu0
        %v4621 = vadd.f32 %v4532, %v4620
        %4622 = vmatmul.bf16.gmra.mxu0 %v3803
        %v4623 = vpop.f32.mrf.mxu0
        %v4624 = vadd.f32 %v4535, %v4623
        %v4625 = vpop.f32.mrf.mxu0
        %v4626 = vadd.f32 %v4537, %v4625
        %4627 = vmatmul.bf16.gmra.mxu0 %v3804
        %v4628 = vpop.f32.mrf.mxu0
        %v4629 = vadd.f32 %v4540, %v4628
        %v4630 = vpop.f32.mrf.mxu0
        %v4631 = vadd.f32 %v4542, %v4630
        %4632 = vmatmul.bf16.gmra.mxu0 %v3805
        %v4633 = vpop.f32.mrf.mxu0
        %v4634 = vadd.f32 %v4545, %v4633
        %v4635 = vpop.f32.mrf.mxu0
        %v4636 = vadd.f32 %v4547, %v4635
        %4637 = vmatmul.bf16.gmra.mxu0 %v3806
        %v4638 = vpop.f32.mrf.mxu0
        %v4639 = vadd.f32 %v4550, %v4638
        %v4640 = vpop.f32.mrf.mxu0
        %v4641 = vadd.f32 %v4552, %v4640
        %4642 = vmatmul.bf16.gmra.mxu0 %v3807
        %v4643 = vpop.f32.mrf.mxu0
        %v4644 = vadd.f32 %v4555, %v4643
        %v4645 = vpop.f32.mrf.mxu0
        %v4646 = vadd.f32 %v4557, %v4645
        %4647 = vmatmul.bf16.gmra.mxu0 %v3808
        %v4648 = vpop.f32.mrf.mxu0
        %v4649 = vadd.f32 %v4560, %v4648
        %v4650 = vpop.f32.mrf.mxu0
        %v4651 = vadd.f32 %v4562, %v4650
        %4652 = vmatmul.bf16.gmra.mxu0 %v3809
        %v4653 = vpop.f32.mrf.mxu0
        %v4654 = vadd.f32 %v4565, %v4653
        %v4655 = vpop.f32.mrf.mxu0
        %v4656 = vadd.f32 %v4567, %v4655
        %4657 = vmatmul.bf16.gmra.mxu0 %v3810
        %v4658 = vpop.f32.mrf.mxu0
        %v4659 = vadd.f32 %v4570, %v4658
        %v4660 = vpop.f32.mrf.mxu0
        %v4661 = vadd.f32 %v4572, %v4660
        %4662 = vmatmul.bf16.gmra.mxu0 %v3811
        %v4663 = vpop.f32.mrf.mxu0
        %v4664 = vadd.f32 %v4575, %v4663
        %v4665 = vpop.f32.mrf.mxu0
        %v4666 = vadd.f32 %v4577, %v4665
        %4667 = vmatmul.bf16.gmra.mxu0 %v3812
        %v4668 = vpop.f32.mrf.mxu0
        %v4669 = vadd.f32 %v4580, %v4668
        %v4670 = vpop.f32.mrf.mxu0
        %v4671 = vadd.f32 %v4582, %v4670
        %4672 = vdwg.mxu0
        %4673 = vmatpush.bf16.msra.mxu0 %v4374
        %4674 = vmatpush.bf16.msra.mxu0 %v4373
        %4675 = vmatpush.bf16.msra.mxu0 %v4372
        %4676 = vmatpush.bf16.msra.mxu0 %v4371
        %4677 = vmatpush.bf16.msra.mxu0 %v4370
        %4678 = vmatpush.bf16.msra.mxu0 %v4369
        %4679 = vmatpush.bf16.msra.mxu0 %v4368
        %4680 = vmatpush.bf16.msra.mxu0 %v4367
        %4681 = vmatmul.bf16.gmra.mxu0 %v3861
        %v4682 = vpop.f32.mrf.mxu0
        %v4683 = vadd.f32 %v4594, %v4682
        %v4684 = vpop.f32.mrf.mxu0
        %v4685 = vadd.f32 %v4596, %v4684
        %4686 = vmatmul.bf16.gmra.mxu0 %v3862
        %v4687 = vpop.f32.mrf.mxu0
        %v4688 = vadd.f32 %v4599, %v4687
        %v4689 = vpop.f32.mrf.mxu0
        %v4690 = vadd.f32 %v4601, %v4689
        %4691 = vmatmul.bf16.gmra.mxu0 %v3863
        %v4692 = vpop.f32.mrf.mxu0
        %v4693 = vadd.f32 %v4604, %v4692
        %v4694 = vpop.f32.mrf.mxu0
        %v4695 = vadd.f32 %v4606, %v4694
        %4696 = vmatmul.bf16.gmra.mxu0 %v3864
        %v4697 = vpop.f32.mrf.mxu0
        %v4698 = vadd.f32 %v4609, %v4697
        %v4699 = vpop.f32.mrf.mxu0
        %v4700 = vadd.f32 %v4611, %v4699
        %4701 = vmatmul.bf16.gmra.mxu0 %v3865
        %v4702 = vpop.f32.mrf.mxu0
        %v4703 = vadd.f32 %v4614, %v4702
        %v4704 = vpop.f32.mrf.mxu0
        %v4705 = vadd.f32 %v4616, %v4704
        %4706 = vmatmul.bf16.gmra.mxu0 %v3866
        %v4707 = vpop.f32.mrf.mxu0
        %v4708 = vadd.f32 %v4619, %v4707
        %v4709 = vpop.f32.mrf.mxu0
        %v4710 = vadd.f32 %v4621, %v4709
        %4711 = vmatmul.bf16.gmra.mxu0 %v3867
        %v4712 = vpop.f32.mrf.mxu0
        %v4713 = vadd.f32 %v4624, %v4712
        %v4714 = vpop.f32.mrf.mxu0
        %v4715 = vadd.f32 %v4626, %v4714
        %4716 = vmatmul.bf16.gmra.mxu0 %v3868
        %v4717 = vpop.f32.mrf.mxu0
        %v4718 = vadd.f32 %v4629, %v4717
        %v4719 = vpop.f32.mrf.mxu0
        %v4720 = vadd.f32 %v4631, %v4719
        %4721 = vmatmul.bf16.gmra.mxu0 %v3869
        %v4722 = vpop.f32.mrf.mxu0
        %v4723 = vadd.f32 %v4634, %v4722
        %v4724 = vpop.f32.mrf.mxu0
        %v4725 = vadd.f32 %v4636, %v4724
        %4726 = vmatmul.bf16.gmra.mxu0 %v3870
        %v4727 = vpop.f32.mrf.mxu0
        %v4728 = vadd.f32 %v4639, %v4727
        %v4729 = vpop.f32.mrf.mxu0
        %v4730 = vadd.f32 %v4641, %v4729
        %4731 = vmatmul.bf16.gmra.mxu0 %v3871
        %v4732 = vpop.f32.mrf.mxu0
        %v4733 = vadd.f32 %v4644, %v4732
        %v4734 = vpop.f32.mrf.mxu0
        %v4735 = vadd.f32 %v4646, %v4734
        %4736 = vmatmul.bf16.gmra.mxu0 %v3872
        %v4737 = vpop.f32.mrf.mxu0
        %v4738 = vadd.f32 %v4649, %v4737
        %v4739 = vpop.f32.mrf.mxu0
        %v4740 = vadd.f32 %v4651, %v4739
        %4741 = vmatmul.bf16.gmra.mxu0 %v3873
        %v4742 = vpop.f32.mrf.mxu0
        %v4743 = vadd.f32 %v4654, %v4742
        %v4744 = vpop.f32.mrf.mxu0
        %v4745 = vadd.f32 %v4656, %v4744
        %4746 = vmatmul.bf16.gmra.mxu0 %v3874
        %v4747 = vpop.f32.mrf.mxu0
        %v4748 = vadd.f32 %v4659, %v4747
        %v4749 = vpop.f32.mrf.mxu0
        %v4750 = vadd.f32 %v4661, %v4749
        %4751 = vmatmul.bf16.gmra.mxu0 %v3875
        %v4752 = vpop.f32.mrf.mxu0
        %v4753 = vadd.f32 %v4664, %v4752
        %v4754 = vpop.f32.mrf.mxu0
        %v4755 = vadd.f32 %v4666, %v4754
        %4756 = vmatmul.bf16.gmra.mxu0 %v3876
        %v4757 = vpop.f32.mrf.mxu0
        %v4758 = vadd.f32 %v4669, %v4757
        %v4759 = vpop.f32.mrf.mxu0
        %v4760 = vadd.f32 %v4671, %v4759
        %4761 = vdwg.mxu0
        %4762 = vmatpush.bf16.msra.mxu0 %v4382
        %4763 = vmatpush.bf16.msra.mxu0 %v4381
        %4764 = vmatpush.bf16.msra.mxu0 %v4380
        %4765 = vmatpush.bf16.msra.mxu0 %v4379
        %4766 = vmatpush.bf16.msra.mxu0 %v4378
        %4767 = vmatpush.bf16.msra.mxu0 %v4377
        %4768 = vmatpush.bf16.msra.mxu0 %v4376
        %4769 = vmatpush.bf16.msra.mxu0 %v4375
        %4770 = vmatmul.bf16.gmra.mxu0 %v3734
        %v4771 = vpop.f32.mrf.mxu0
        %v4772 = vadd.f32 %v4683, %v4771
        %v4773 = vpop.f32.mrf.mxu0
        %v4774 = vadd.f32 %v4685, %v4773
        %4775 = vmatmul.bf16.gmra.mxu0 %v3735
        %v4776 = vpop.f32.mrf.mxu0
        %v4777 = vadd.f32 %v4688, %v4776
        %v4778 = vpop.f32.mrf.mxu0
        %v4779 = vadd.f32 %v4690, %v4778
        %4780 = vmatmul.bf16.gmra.mxu0 %v3736
        %v4781 = vpop.f32.mrf.mxu0
        %v4782 = vadd.f32 %v4693, %v4781
        %v4783 = vpop.f32.mrf.mxu0
        %v4784 = vadd.f32 %v4695, %v4783
        %4785 = vmatmul.bf16.gmra.mxu0 %v3737
        %v4786 = vpop.f32.mrf.mxu0
        %v4787 = vadd.f32 %v4698, %v4786
        %v4788 = vpop.f32.mrf.mxu0
        %v4789 = vadd.f32 %v4700, %v4788
        %4790 = vmatmul.bf16.gmra.mxu0 %v3738
        %v4791 = vpop.f32.mrf.mxu0
        %v4792 = vadd.f32 %v4703, %v4791
        %v4793 = vpop.f32.mrf.mxu0
        %v4794 = vadd.f32 %v4705, %v4793
        %4795 = vmatmul.bf16.gmra.mxu0 %v3739
        %v4796 = vpop.f32.mrf.mxu0
        %v4797 = vadd.f32 %v4708, %v4796
        %v4798 = vpop.f32.mrf.mxu0
        %v4799 = vadd.f32 %v4710, %v4798
        %4800 = vmatmul.bf16.gmra.mxu0 %v3740
        %v4801 = vpop.f32.mrf.mxu0
        %v4802 = vadd.f32 %v4713, %v4801
        %v4803 = vpop.f32.mrf.mxu0
        %v4804 = vadd.f32 %v4715, %v4803
        %4805 = vmatmul.bf16.gmra.mxu0 %v3741
        %v4806 = vpop.f32.mrf.mxu0
        %v4807 = vadd.f32 %v4718, %v4806
        %v4808 = vpop.f32.mrf.mxu0
        %v4809 = vadd.f32 %v4720, %v4808
        %4810 = vmatmul.bf16.gmra.mxu0 %v3742
        %v4811 = vpop.f32.mrf.mxu0
        %v4812 = vadd.f32 %v4723, %v4811
        %v4813 = vpop.f32.mrf.mxu0
        %v4814 = vadd.f32 %v4725, %v4813
        %4815 = vmatmul.bf16.gmra.mxu0 %v3743
        %v4816 = vpop.f32.mrf.mxu0
        %v4817 = vadd.f32 %v4728, %v4816
        %v4818 = vpop.f32.mrf.mxu0
        %v4819 = vadd.f32 %v4730, %v4818
        %4820 = vmatmul.bf16.gmra.mxu0 %v3744
        %v4821 = vpop.f32.mrf.mxu0
        %v4822 = vadd.f32 %v4733, %v4821
        %v4823 = vpop.f32.mrf.mxu0
        %v4824 = vadd.f32 %v4735, %v4823
        %4825 = vmatmul.bf16.gmra.mxu0 %v3745
        %v4826 = vpop.f32.mrf.mxu0
        %v4827 = vadd.f32 %v4738, %v4826
        %v4828 = vpop.f32.mrf.mxu0
        %v4829 = vadd.f32 %v4740, %v4828
        %4830 = vmatmul.bf16.gmra.mxu0 %v3746
        %v4831 = vpop.f32.mrf.mxu0
        %v4832 = vadd.f32 %v4743, %v4831
        %v4833 = vpop.f32.mrf.mxu0
        %v4834 = vadd.f32 %v4745, %v4833
        %4835 = vmatmul.bf16.gmra.mxu0 %v3747
        %v4836 = vpop.f32.mrf.mxu0
        %v4837 = vadd.f32 %v4748, %v4836
        %v4838 = vpop.f32.mrf.mxu0
        %v4839 = vadd.f32 %v4750, %v4838
        %4840 = vmatmul.bf16.gmra.mxu0 %v3748
        %v4841 = vpop.f32.mrf.mxu0
        %v4842 = vadd.f32 %v4753, %v4841
        %v4843 = vpop.f32.mrf.mxu0
        %v4844 = vadd.f32 %v4755, %v4843
        %4845 = vmatmul.bf16.gmra.mxu0 %v3895
        %v4846 = vpop.f32.mrf.mxu0
        %v4847 = vadd.f32 %v4758, %v4846
        %v4848 = vpop.f32.mrf.mxu0
        %v4849 = vadd.f32 %v4760, %v4848
        %4850 = vdwg.mxu0
        %4851 = vmatpush.bf16.msra.mxu0 %v4390
        %4852 = vmatpush.bf16.msra.mxu0 %v4389
        %4853 = vmatpush.bf16.msra.mxu0 %v4388
        %4854 = vmatpush.bf16.msra.mxu0 %v4387
        %4855 = vmatpush.bf16.msra.mxu0 %v4386
        %4856 = vmatpush.bf16.msra.mxu0 %v4385
        %4857 = vmatpush.bf16.msra.mxu0 %v4384
        %4858 = vmatpush.bf16.msra.mxu0 %v4383
        %4859 = vmatmul.bf16.gmra.mxu0 %v3798
        %v4860 = vpop.f32.mrf.mxu0
        %v4861 = vadd.f32 %v4772, %v4860
        %v4862 = vpop.f32.mrf.mxu0
        %v4863 = vadd.f32 %v4774, %v4862
        %4864 = vmatmul.bf16.gmra.mxu0 %v3799
        %v4865 = vpop.f32.mrf.mxu0
        %v4866 = vadd.f32 %v4777, %v4865
        %v4867 = vpop.f32.mrf.mxu0
        %v4868 = vadd.f32 %v4779, %v4867
        %4869 = vmatmul.bf16.gmra.mxu0 %v3800
        %v4870 = vpop.f32.mrf.mxu0
        %v4871 = vadd.f32 %v4782, %v4870
        %v4872 = vpop.f32.mrf.mxu0
        %v4873 = vadd.f32 %v4784, %v4872
        %4874 = vmatmul.bf16.gmra.mxu0 %v3801
        %v4875 = vpop.f32.mrf.mxu0
        %v4876 = vadd.f32 %v4787, %v4875
        %v4877 = vpop.f32.mrf.mxu0
        %v4878 = vadd.f32 %v4789, %v4877
        %4879 = vmatmul.bf16.gmra.mxu0 %v3802
        %v4880 = vpop.f32.mrf.mxu0
        %v4881 = vadd.f32 %v4792, %v4880
        %v4882 = vpop.f32.mrf.mxu0
        %v4883 = vadd.f32 %v4794, %v4882
        %4884 = vmatmul.bf16.gmra.mxu0 %v3803
        %v4885 = vpop.f32.mrf.mxu0
        %v4886 = vadd.f32 %v4797, %v4885
        %v4887 = vpop.f32.mrf.mxu0
        %v4888 = vadd.f32 %v4799, %v4887
        %4889 = vmatmul.bf16.gmra.mxu0 %v3804
        %v4890 = vpop.f32.mrf.mxu0
        %v4891 = vadd.f32 %v4802, %v4890
        %v4892 = vpop.f32.mrf.mxu0
        %v4893 = vadd.f32 %v4804, %v4892
        %4894 = vmatmul.bf16.gmra.mxu0 %v3805
        %v4895 = vpop.f32.mrf.mxu0
        %v4896 = vadd.f32 %v4807, %v4895
        %v4897 = vpop.f32.mrf.mxu0
        %v4898 = vadd.f32 %v4809, %v4897
        %4899 = vmatmul.bf16.gmra.mxu0 %v3806
        %v4900 = vpop.f32.mrf.mxu0
        %v4901 = vadd.f32 %v4812, %v4900
        %v4902 = vpop.f32.mrf.mxu0
        %v4903 = vadd.f32 %v4814, %v4902
        %4904 = vmatmul.bf16.gmra.mxu0 %v3807
        %v4905 = vpop.f32.mrf.mxu0
        %v4906 = vadd.f32 %v4817, %v4905
        %v4907 = vpop.f32.mrf.mxu0
        %v4908 = vadd.f32 %v4819, %v4907
        %4909 = vmatmul.bf16.gmra.mxu0 %v3808
        %v4910 = vpop.f32.mrf.mxu0
        %v4911 = vadd.f32 %v4822, %v4910
        %v4912 = vpop.f32.mrf.mxu0
        %v4913 = vadd.f32 %v4824, %v4912
        %4914 = vmatmul.bf16.gmra.mxu0 %v3809
        %v4915 = vpop.f32.mrf.mxu0
        %v4916 = vadd.f32 %v4827, %v4915
        %v4917 = vpop.f32.mrf.mxu0
        %v4918 = vadd.f32 %v4829, %v4917
        %4919 = vmatmul.bf16.gmra.mxu0 %v3810
        %v4920 = vpop.f32.mrf.mxu0
        %v4921 = vadd.f32 %v4832, %v4920
        %v4922 = vpop.f32.mrf.mxu0
        %v4923 = vadd.f32 %v4834, %v4922
        %4924 = vmatmul.bf16.gmra.mxu0 %v3811
        %v4925 = vpop.f32.mrf.mxu0
        %v4926 = vadd.f32 %v4837, %v4925
        %v4927 = vpop.f32.mrf.mxu0
        %v4928 = vadd.f32 %v4839, %v4927
        %4929 = vmatmul.bf16.gmra.mxu0 %v3812
        %v4930 = vpop.f32.mrf.mxu0
        %v4931 = vadd.f32 %v4842, %v4930
        %v4932 = vpop.f32.mrf.mxu0
        %v4933 = vadd.f32 %v4844, %v4932
        %4934 = vmatmul.bf16.gmra.mxu0 %v3899
        %v4935 = vpop.f32.mrf.mxu0
        %v4936 = vadd.f32 %v4847, %v4935
        %v4937 = vpop.f32.mrf.mxu0
        %v4938 = vadd.f32 %v4849, %v4937
        %4939 = vdwg.mxu0
        %4940 = vmatpush.bf16.msra.mxu0 %v4398
        %4941 = vmatpush.bf16.msra.mxu0 %v4397
        %4942 = vmatpush.bf16.msra.mxu0 %v4396
        %4943 = vmatpush.bf16.msra.mxu0 %v4395
        %4944 = vmatpush.bf16.msra.mxu0 %v4394
        %4945 = vmatpush.bf16.msra.mxu0 %v4393
        %4946 = vmatpush.bf16.msra.mxu0 %v4392
        %4947 = vmatpush.bf16.msra.mxu0 %v4391
        %4948 = vmatmul.bf16.gmra.mxu0 %v3862
        %v4949 = vpop.f32.mrf.mxu0
        %v4950 = vadd.f32 %v4861, %v4949
        %v4951 = vpop.f32.mrf.mxu0
        %v4952 = vadd.f32 %v4863, %v4951
        %4953 = vmatmul.bf16.gmra.mxu0 %v3863
        %v4954 = vpop.f32.mrf.mxu0
        %v4955 = vadd.f32 %v4866, %v4954
        %v4956 = vpop.f32.mrf.mxu0
        %v4957 = vadd.f32 %v4868, %v4956
        %4958 = vmatmul.bf16.gmra.mxu0 %v3864
        %v4959 = vpop.f32.mrf.mxu0
        %v4960 = vadd.f32 %v4871, %v4959
        %v4961 = vpop.f32.mrf.mxu0
        %v4962 = vadd.f32 %v4873, %v4961
        %4963 = vmatmul.bf16.gmra.mxu0 %v3865
        %v4964 = vpop.f32.mrf.mxu0
        %v4965 = vadd.f32 %v4876, %v4964
        %v4966 = vpop.f32.mrf.mxu0
        %v4967 = vadd.f32 %v4878, %v4966
        %4968 = vmatmul.bf16.gmra.mxu0 %v3866
        %v4969 = vpop.f32.mrf.mxu0
        %v4970 = vadd.f32 %v4881, %v4969
        %v4971 = vpop.f32.mrf.mxu0
        %v4972 = vadd.f32 %v4883, %v4971
        %4973 = vmatmul.bf16.gmra.mxu0 %v3867
        %v4974 = vpop.f32.mrf.mxu0
        %v4975 = vadd.f32 %v4886, %v4974
        %v4976 = vpop.f32.mrf.mxu0
        %v4977 = vadd.f32 %v4888, %v4976
        %4978 = vmatmul.bf16.gmra.mxu0 %v3868
        %v4979 = vpop.f32.mrf.mxu0
        %v4980 = vadd.f32 %v4891, %v4979
        %v4981 = vpop.f32.mrf.mxu0
        %v4982 = vadd.f32 %v4893, %v4981
        %4983 = vmatmul.bf16.gmra.mxu0 %v3869
        %v4984 = vpop.f32.mrf.mxu0
        %v4985 = vadd.f32 %v4896, %v4984
        %v4986 = vpop.f32.mrf.mxu0
        %v4987 = vadd.f32 %v4898, %v4986
        %4988 = vmatmul.bf16.gmra.mxu0 %v3870
        %v4989 = vpop.f32.mrf.mxu0
        %v4990 = vadd.f32 %v4901, %v4989
        %v4991 = vpop.f32.mrf.mxu0
        %v4992 = vadd.f32 %v4903, %v4991
        %4993 = vmatmul.bf16.gmra.mxu0 %v3871
        %v4994 = vpop.f32.mrf.mxu0
        %v4995 = vadd.f32 %v4906, %v4994
        %v4996 = vpop.f32.mrf.mxu0
        %v4997 = vadd.f32 %v4908, %v4996
        %4998 = vmatmul.bf16.gmra.mxu0 %v3872
        %v4999 = vpop.f32.mrf.mxu0
        %v5000 = vadd.f32 %v4911, %v4999
        %v5001 = vpop.f32.mrf.mxu0
        %v5002 = vadd.f32 %v4913, %v5001
        %5003 = vmatmul.bf16.gmra.mxu0 %v3873
        %v5004 = vpop.f32.mrf.mxu0
        %v5005 = vadd.f32 %v4916, %v5004
        %v5006 = vpop.f32.mrf.mxu0
        %v5007 = vadd.f32 %v4918, %v5006
        %5008 = vmatmul.bf16.gmra.mxu0 %v3874
        %v5009 = vpop.f32.mrf.mxu0
        %v5010 = vadd.f32 %v4921, %v5009
        %v5011 = vpop.f32.mrf.mxu0
        %v5012 = vadd.f32 %v4923, %v5011
        %5013 = vmatmul.bf16.gmra.mxu0 %v3875
        %v5014 = vpop.f32.mrf.mxu0
        %v5015 = vadd.f32 %v4926, %v5014
        %v5016 = vpop.f32.mrf.mxu0
        %v5017 = vadd.f32 %v4928, %v5016
        %5018 = vmatmul.bf16.gmra.mxu0 %v3876
        %v5019 = vpop.f32.mrf.mxu0
        %v5020 = vadd.f32 %v4931, %v5019
        %v5021 = vpop.f32.mrf.mxu0
        %v5022 = vadd.f32 %v4933, %v5021
        %5023 = vmatmul.bf16.gmra.mxu0 %v3903
        %v5024 = vpop.f32.mrf.mxu0
        %v5025 = vadd.f32 %v4936, %v5024
        %v5026 = vpop.f32.mrf.mxu0
        %v5027 = vadd.f32 %v4938, %v5026
        %5028 = vdwg.mxu0
        %5029 = vmatpush.bf16.msra.mxu0 %v4406
        %5030 = vmatpush.bf16.msra.mxu0 %v4405
        %5031 = vmatpush.bf16.msra.mxu0 %v4404
        %5032 = vmatpush.bf16.msra.mxu0 %v4403
        %5033 = vmatpush.bf16.msra.mxu0 %v4402
        %5034 = vmatpush.bf16.msra.mxu0 %v4401
        %5035 = vmatpush.bf16.msra.mxu0 %v4400
        %5036 = vmatpush.bf16.msra.mxu0 %v4399
        %5037 = vmatmul.bf16.gmra.mxu0 %v3735
        %v5038 = vpop.f32.mrf.mxu0
        %v5039 = vadd.f32 %v4950, %v5038
        %v5040 = vpop.f32.mrf.mxu0
        %v5041 = vadd.f32 %v4952, %v5040
        %5042 = vmatmul.bf16.gmra.mxu0 %v3736
        %v5043 = vpop.f32.mrf.mxu0
        %v5044 = vadd.f32 %v4955, %v5043
        %v5045 = vpop.f32.mrf.mxu0
        %v5046 = vadd.f32 %v4957, %v5045
        %5047 = vmatmul.bf16.gmra.mxu0 %v3737
        %v5048 = vpop.f32.mrf.mxu0
        %v5049 = vadd.f32 %v4960, %v5048
        %v5050 = vpop.f32.mrf.mxu0
        %v5051 = vadd.f32 %v4962, %v5050
        %5052 = vmatmul.bf16.gmra.mxu0 %v3738
        %v5053 = vpop.f32.mrf.mxu0
        %v5054 = vadd.f32 %v4965, %v5053
        %v5055 = vpop.f32.mrf.mxu0
        %v5056 = vadd.f32 %v4967, %v5055
        %5057 = vmatmul.bf16.gmra.mxu0 %v3739
        %v5058 = vpop.f32.mrf.mxu0
        %v5059 = vadd.f32 %v4970, %v5058
        %v5060 = vpop.f32.mrf.mxu0
        %v5061 = vadd.f32 %v4972, %v5060
        %5062 = vmatmul.bf16.gmra.mxu0 %v3740
        %v5063 = vpop.f32.mrf.mxu0
        %v5064 = vadd.f32 %v4975, %v5063
        %v5065 = vpop.f32.mrf.mxu0
        %v5066 = vadd.f32 %v4977, %v5065
        %5067 = vmatmul.bf16.gmra.mxu0 %v3741
        %v5068 = vpop.f32.mrf.mxu0
        %v5069 = vadd.f32 %v4980, %v5068
        %v5070 = vpop.f32.mrf.mxu0
        %v5071 = vadd.f32 %v4982, %v5070
        %5072 = vmatmul.bf16.gmra.mxu0 %v3742
        %v5073 = vpop.f32.mrf.mxu0
        %v5074 = vadd.f32 %v4985, %v5073
        %v5075 = vpop.f32.mrf.mxu0
        %v5076 = vadd.f32 %v4987, %v5075
        %5077 = vmatmul.bf16.gmra.mxu0 %v3743
        %v5078 = vpop.f32.mrf.mxu0
        %v5079 = vadd.f32 %v4990, %v5078
        %v5080 = vpop.f32.mrf.mxu0
        %v5081 = vadd.f32 %v4992, %v5080
        %5082 = vmatmul.bf16.gmra.mxu0 %v3744
        %v5083 = vpop.f32.mrf.mxu0
        %v5084 = vadd.f32 %v4995, %v5083
        %v5085 = vpop.f32.mrf.mxu0
        %v5086 = vadd.f32 %v4997, %v5085
        %5087 = vmatmul.bf16.gmra.mxu0 %v3745
        %v5088 = vpop.f32.mrf.mxu0
        %v5089 = vadd.f32 %v5000, %v5088
        %v5090 = vpop.f32.mrf.mxu0
        %v5091 = vadd.f32 %v5002, %v5090
        %5092 = vmatmul.bf16.gmra.mxu0 %v3746
        %v5093 = vpop.f32.mrf.mxu0
        %v5094 = vadd.f32 %v5005, %v5093
        %v5095 = vpop.f32.mrf.mxu0
        %v5096 = vadd.f32 %v5007, %v5095
        %5097 = vmatmul.bf16.gmra.mxu0 %v3747
        %v5098 = vpop.f32.mrf.mxu0
        %v5099 = vadd.f32 %v5010, %v5098
        %v5100 = vpop.f32.mrf.mxu0
        %v5101 = vadd.f32 %v5012, %v5100
        %5102 = vmatmul.bf16.gmra.mxu0 %v3748
        %v5103 = vpop.f32.mrf.mxu0
        %v5104 = vadd.f32 %v5015, %v5103
        %v5105 = vpop.f32.mrf.mxu0
        %v5106 = vadd.f32 %v5017, %v5105
        %5107 = vmatmul.bf16.gmra.mxu0 %v3895
        %v5108 = vpop.f32.mrf.mxu0
        %v5109 = vadd.f32 %v5020, %v5108
        %v5110 = vpop.f32.mrf.mxu0
        %v5111 = vadd.f32 %v5022, %v5110
        %5112 = vmatmul.bf16.gmra.mxu0 %v3907
        %v5113 = vpop.f32.mrf.mxu0
        %v5114 = vadd.f32 %v5025, %v5113
        %v5115 = vpop.f32.mrf.mxu0
        %v5116 = vadd.f32 %v5027, %v5115
        %5117 = vdwg.mxu0
        %5118 = vmatpush.bf16.msra.mxu0 %v4414
        %5119 = vmatpush.bf16.msra.mxu0 %v4413
        %5120 = vmatpush.bf16.msra.mxu0 %v4412
        %5121 = vmatpush.bf16.msra.mxu0 %v4411
        %5122 = vmatpush.bf16.msra.mxu0 %v4410
        %5123 = vmatpush.bf16.msra.mxu0 %v4409
        %5124 = vmatpush.bf16.msra.mxu0 %v4408
        %5125 = vmatpush.bf16.msra.mxu0 %v4407
        %5126 = vmatmul.bf16.gmra.mxu0 %v3799
        %v5127 = vpop.f32.mrf.mxu0
        %v5128 = vadd.f32 %v5039, %v5127
        %v5129 = vpop.f32.mrf.mxu0
        %v5130 = vadd.f32 %v5041, %v5129
        %5131 = vmatmul.bf16.gmra.mxu0 %v3800
        %v5132 = vpop.f32.mrf.mxu0
        %v5133 = vadd.f32 %v5044, %v5132
        %v5134 = vpop.f32.mrf.mxu0
        %v5135 = vadd.f32 %v5046, %v5134
        %5136 = vmatmul.bf16.gmra.mxu0 %v3801
        %v5137 = vpop.f32.mrf.mxu0
        %v5138 = vadd.f32 %v5049, %v5137
        %v5139 = vpop.f32.mrf.mxu0
        %v5140 = vadd.f32 %v5051, %v5139
        %5141 = vmatmul.bf16.gmra.mxu0 %v3802
        %v5142 = vpop.f32.mrf.mxu0
        %v5143 = vadd.f32 %v5054, %v5142
        %v5144 = vpop.f32.mrf.mxu0
        %v5145 = vadd.f32 %v5056, %v5144
        %5146 = vmatmul.bf16.gmra.mxu0 %v3803
        %v5147 = vpop.f32.mrf.mxu0
        %v5148 = vadd.f32 %v5059, %v5147
        %v5149 = vpop.f32.mrf.mxu0
        %v5150 = vadd.f32 %v5061, %v5149
        %5151 = vmatmul.bf16.gmra.mxu0 %v3804
        %v5152 = vpop.f32.mrf.mxu0
        %v5153 = vadd.f32 %v5064, %v5152
        %v5154 = vpop.f32.mrf.mxu0
        %v5155 = vadd.f32 %v5066, %v5154
        %5156 = vmatmul.bf16.gmra.mxu0 %v3805
        %v5157 = vpop.f32.mrf.mxu0
        %v5158 = vadd.f32 %v5069, %v5157
        %v5159 = vpop.f32.mrf.mxu0
        %v5160 = vadd.f32 %v5071, %v5159
        %5161 = vmatmul.bf16.gmra.mxu0 %v3806
        %v5162 = vpop.f32.mrf.mxu0
        %v5163 = vadd.f32 %v5074, %v5162
        %v5164 = vpop.f32.mrf.mxu0
        %v5165 = vadd.f32 %v5076, %v5164
        %5166 = vmatmul.bf16.gmra.mxu0 %v3807
        %v5167 = vpop.f32.mrf.mxu0
        %v5168 = vadd.f32 %v5079, %v5167
        %v5169 = vpop.f32.mrf.mxu0
        %v5170 = vadd.f32 %v5081, %v5169
        %5171 = vmatmul.bf16.gmra.mxu0 %v3808
        %v5172 = vpop.f32.mrf.mxu0
        %v5173 = vadd.f32 %v5084, %v5172
        %v5174 = vpop.f32.mrf.mxu0
        %v5175 = vadd.f32 %v5086, %v5174
        %5176 = vmatmul.bf16.gmra.mxu0 %v3809
        %v5177 = vpop.f32.mrf.mxu0
        %v5178 = vadd.f32 %v5089, %v5177
        %v5179 = vpop.f32.mrf.mxu0
        %v5180 = vadd.f32 %v5091, %v5179
        %5181 = vmatmul.bf16.gmra.mxu0 %v3810
        %v5182 = vpop.f32.mrf.mxu0
        %v5183 = vadd.f32 %v5094, %v5182
        %v5184 = vpop.f32.mrf.mxu0
        %v5185 = vadd.f32 %v5096, %v5184
        %5186 = vmatmul.bf16.gmra.mxu0 %v3811
        %v5187 = vpop.f32.mrf.mxu0
        %v5188 = vadd.f32 %v5099, %v5187
        %v5189 = vpop.f32.mrf.mxu0
        %v5190 = vadd.f32 %v5101, %v5189
        %5191 = vmatmul.bf16.gmra.mxu0 %v3812
        %v5192 = vpop.f32.mrf.mxu0
        %v5193 = vadd.f32 %v5104, %v5192
        %v5194 = vpop.f32.mrf.mxu0
        %v5195 = vadd.f32 %v5106, %v5194
        %5196 = vmatmul.bf16.gmra.mxu0 %v3899
        %v5197 = vpop.f32.mrf.mxu0
        %v5198 = vadd.f32 %v5109, %v5197
        %v5199 = vpop.f32.mrf.mxu0
        %v5200 = vadd.f32 %v5111, %v5199
        %5201 = vmatmul.bf16.gmra.mxu0 %v3911
        %v5202 = vpop.f32.mrf.mxu0
        %v5203 = vadd.f32 %v5114, %v5202
        %v5204 = vpop.f32.mrf.mxu0
        %v5205 = vadd.f32 %v5116, %v5204
        %5206 = vdwg.mxu0
        %5207 = vmatpush.bf16.msra.mxu0 %v4422
        %5208 = vmatpush.bf16.msra.mxu0 %v4421
        %5209 = vmatpush.bf16.msra.mxu0 %v4420
        %5210 = vmatpush.bf16.msra.mxu0 %v4419
        %5211 = vmatpush.bf16.msra.mxu0 %v4418
        %5212 = vmatpush.bf16.msra.mxu0 %v4417
        %5213 = vmatpush.bf16.msra.mxu0 %v4416
        %5214 = vmatpush.bf16.msra.mxu0 %v4415
        %5215 = vmatmul.bf16.gmra.mxu0 %v3863
        %v5216 = vpop.f32.mrf.mxu0
        %v5217 = vadd.f32 %v5128, %v5216
        %v5218 = vpop.f32.mrf.mxu0
        %v5219 = vadd.f32 %v5130, %v5218
        %5220 = vmatmul.bf16.gmra.mxu0 %v3864
        %v5221 = vpop.f32.mrf.mxu0
        %v5222 = vadd.f32 %v5133, %v5221
        %v5223 = vpop.f32.mrf.mxu0
        %v5224 = vadd.f32 %v5135, %v5223
        %5225 = vmatmul.bf16.gmra.mxu0 %v3865
        %v5226 = vpop.f32.mrf.mxu0
        %v5227 = vadd.f32 %v5138, %v5226
        %v5228 = vpop.f32.mrf.mxu0
        %v5229 = vadd.f32 %v5140, %v5228
        %5230 = vmatmul.bf16.gmra.mxu0 %v3866
        %v5231 = vpop.f32.mrf.mxu0
        %v5232 = vadd.f32 %v5143, %v5231
        %v5233 = vpop.f32.mrf.mxu0
        %v5234 = vadd.f32 %v5145, %v5233
        %5235 = vmatmul.bf16.gmra.mxu0 %v3867
        %v5236 = vpop.f32.mrf.mxu0
        %v5237 = vadd.f32 %v5148, %v5236
        %v5238 = vpop.f32.mrf.mxu0
        %v5239 = vadd.f32 %v5150, %v5238
        %5240 = vmatmul.bf16.gmra.mxu0 %v3868
        %v5241 = vpop.f32.mrf.mxu0
        %v5242 = vadd.f32 %v5153, %v5241
        %v5243 = vpop.f32.mrf.mxu0
        %v5244 = vadd.f32 %v5155, %v5243
        %5245 = vmatmul.bf16.gmra.mxu0 %v3869
        %v5246 = vpop.f32.mrf.mxu0
        %v5247 = vadd.f32 %v5158, %v5246
        %v5248 = vpop.f32.mrf.mxu0
        %v5249 = vadd.f32 %v5160, %v5248
        %5250 = vmatmul.bf16.gmra.mxu0 %v3870
        %v5251 = vpop.f32.mrf.mxu0
        %v5252 = vadd.f32 %v5163, %v5251
        %v5253 = vpop.f32.mrf.mxu0
        %v5254 = vadd.f32 %v5165, %v5253
        %5255 = vmatmul.bf16.gmra.mxu0 %v3871
        %v5256 = vpop.f32.mrf.mxu0
        %v5257 = vadd.f32 %v5168, %v5256
        %v5258 = vpop.f32.mrf.mxu0
        %v5259 = vadd.f32 %v5170, %v5258
        %5260 = vmatmul.bf16.gmra.mxu0 %v3872
        %v5261 = vpop.f32.mrf.mxu0
        %v5262 = vadd.f32 %v5173, %v5261
        %v5263 = vpop.f32.mrf.mxu0
        %v5264 = vadd.f32 %v5175, %v5263
        %5265 = vmatmul.bf16.gmra.mxu0 %v3873
        %v5266 = vpop.f32.mrf.mxu0
        %v5267 = vadd.f32 %v5178, %v5266
        %v5268 = vpop.f32.mrf.mxu0
        %v5269 = vadd.f32 %v5180, %v5268
        %5270 = vmatmul.bf16.gmra.mxu0 %v3874
        %v5271 = vpop.f32.mrf.mxu0
        %v5272 = vadd.f32 %v5183, %v5271
        %v5273 = vpop.f32.mrf.mxu0
        %v5274 = vadd.f32 %v5185, %v5273
        %5275 = vmatmul.bf16.gmra.mxu0 %v3875
        %v5276 = vpop.f32.mrf.mxu0
        %v5277 = vadd.f32 %v5188, %v5276
        %v5278 = vpop.f32.mrf.mxu0
        %v5279 = vadd.f32 %v5190, %v5278
        %5280 = vmatmul.bf16.gmra.mxu0 %v3876
        %v5281 = vpop.f32.mrf.mxu0
        %v5282 = vadd.f32 %v5193, %v5281
        %v5283 = vpop.f32.mrf.mxu0
        %v5284 = vadd.f32 %v5195, %v5283
        %5285 = vmatmul.bf16.gmra.mxu0 %v3903
        %v5286 = vpop.f32.mrf.mxu0
        %v5287 = vadd.f32 %v5198, %v5286
        %v5288 = vpop.f32.mrf.mxu0
        %v5289 = vadd.f32 %v5200, %v5288
        %5290 = vmatmul.bf16.gmra.mxu0 %v3915
        %v5291 = vpop.f32.mrf.mxu0
        %v5292 = vadd.f32 %v5203, %v5291
        %v5293 = vpop.f32.mrf.mxu0
        %v5294 = vadd.f32 %v5205, %v5293
        %5295 = vdwg.mxu0
        %v5296 = vadd.f32 %v5217, %v345
        %v5297 = vadd.f32 %v5219, %v347
        %v5298 = vadd.f32 %v5222, %v350
        %v5299 = vadd.f32 %v5224, %v352
        %v5300 = vadd.f32 %v5227, %v355
        %v5301 = vadd.f32 %v5229, %v357
        %v5302 = vadd.f32 %v5232, %v360
        %v5303 = vadd.f32 %v5234, %v362
        %v5304 = vadd.f32 %v5237, %v365
        %v5305 = vadd.f32 %v5239, %v367
        %v5306 = vadd.f32 %v5242, %v370
        %v5307 = vadd.f32 %v5244, %v372
        %v5308 = vadd.f32 %v5247, %v375
        %v5309 = vadd.f32 %v5249, %v377
        %v5310 = vadd.f32 %v5252, %v380
        %v5311 = vadd.f32 %v5254, %v382
        %v5312 = vadd.f32 %v5257, %v385
        %v5313 = vadd.f32 %v5259, %v387
        %v5314 = vadd.f32 %v5262, %v390
        %v5315 = vadd.f32 %v5264, %v392
        %v5316 = vadd.f32 %v5267, %v395
        %v5317 = vadd.f32 %v5269, %v397
        %v5318 = vadd.f32 %v5272, %v400
        %v5319 = vadd.f32 %v5274, %v402
        %v5320 = vadd.f32 %v5277, %v405
        %v5321 = vadd.f32 %v5279, %v407
        %v5322 = vadd.f32 %v5282, %v410
        %v5323 = vadd.f32 %v5284, %v412
        %v5324 = vadd.f32 %v5287, %v415
        %v5325 = vadd.f32 %v5289, %v417
        %v5326 = vadd.f32 %v5292, %v568
        %v5327 = vadd.f32 %v5294, %v570
        %5328 = vst [vmem:[%s221] sm:$0xff] %v5296
        %5329 = vst [vmem:[%s221 + $0x8] sm:$0xff] %v5297
        %5330 = vst [vmem:[%s221 + $0x10] sm:$0xff] %v5298
        %5331 = vst [vmem:[%s221 + $0x18] sm:$0xff] %v5299
        %5332 = vst [vmem:[%s221 + $0x20] sm:$0xff] %v5300
        %5333 = vst [vmem:[%s221 + $0x28] sm:$0xff] %v5301
        %5334 = vst [vmem:[%s221 + $0x30] sm:$0xff] %v5302
        %5335 = vst [vmem:[%s221 + $0x38] sm:$0xff] %v5303
        %5336 = vst [vmem:[%s221 + $0x40] sm:$0xff] %v5304
        %5337 = vst [vmem:[%s221 + $0x48] sm:$0xff] %v5305
        %5338 = vst [vmem:[%s221 + $0x50] sm:$0xff] %v5306
        %5339 = vst [vmem:[%s221 + $0x58] sm:$0xff] %v5307
        %5340 = vst [vmem:[%s221 + $0x60] sm:$0xff] %v5308
        %5341 = vst [vmem:[%s221 + $0x68] sm:$0xff] %v5309
        %5342 = vst [vmem:[%s221 + $0x70] sm:$0xff] %v5310
        %5343 = vst [vmem:[%s221 + $0x78] sm:$0xff] %v5311
        %5344 = vst [vmem:[%s221 + $0x80] sm:$0xff] %v5312
        %5345 = vst [vmem:[%s221 + $0x88] sm:$0xff] %v5313
        %5346 = vst [vmem:[%s221 + $0x90] sm:$0xff] %v5314
        %5347 = vst [vmem:[%s221 + $0x98] sm:$0xff] %v5315
        %5348 = vst [vmem:[%s221 + $0xa0] sm:$0xff] %v5316
        %5349 = vst [vmem:[%s221 + $0xa8] sm:$0xff] %v5317
        %5350 = vst [vmem:[%s221 + $0xb0] sm:$0xff] %v5318
        %5351 = vst [vmem:[%s221 + $0xb8] sm:$0xff] %v5319
        %5352 = vst [vmem:[%s221 + $0xc0] sm:$0xff] %v5320
        %5353 = vst [vmem:[%s221 + $0xc8] sm:$0xff] %v5321
        %5354 = vst [vmem:[%s221 + $0xd0] sm:$0xff] %v5322
        %5355 = vst [vmem:[%s221 + $0xd8] sm:$0xff] %v5323
        %5356 = vst [vmem:[%s221 + $0xe0] sm:$0xff] %v5324
        %5357 = vst [vmem:[%s221 + $0xe8] sm:$0xff] %v5325
        %5358 = vst [vmem:[%s221 + $0xf0] sm:$0xff] %v5326
        %5359 = vst [vmem:[%s221 + $0xf8] sm:$0xff] %v5327
        %v5360 = vadd.f32 %v5296, %v5297
        %v5361 = vadd.f32 %v5360, %v5298
        %v5362 = vadd.f32 %v5361, %v5299
        %v5363 = vadd.f32 %v5362, %v5300
        %v5364 = vadd.f32 %v5363, %v5301
        %v5365 = vadd.f32 %v5364, %v5302
        %v5366 = vadd.f32 %v5365, %v5303
        %v5367 = vadd.f32 %v5366, %v5304
        %v5368 = vadd.f32 %v5367, %v5305
        %v5369 = vadd.f32 %v5368, %v5306
        %v5370 = vadd.f32 %v5369, %v5307
        %v5371 = vadd.f32 %v5370, %v5308
        %v5372 = vadd.f32 %v5371, %v5309
        %v5373 = vadd.f32 %v5372, %v5310
        %v5374 = vadd.f32 %v5373, %v5311
        %v5375 = vadd.f32 %v5374, %v5312
        %v5376 = vadd.f32 %v5375, %v5313
        %v5377 = vadd.f32 %v5376, %v5314
        %v5378 = vadd.f32 %v5377, %v5315
        %v5379 = vadd.f32 %v5378, %v5316
        %v5380 = vadd.f32 %v5379, %v5317
        %v5381 = vadd.f32 %v5380, %v5318
        %v5382 = vadd.f32 %v5381, %v5319
        %v5383 = vadd.f32 %v5382, %v5320
        %v5384 = vadd.f32 %v5383, %v5321
        %v5385 = vadd.f32 %v5384, %v5322
        %v5386 = vadd.f32 %v5385, %v5323
        %v5387 = vadd.f32 %v5386, %v5324
        %v5388 = vadd.f32 %v5387, %v5325
        %v5389 = vadd.f32 %v5388, %v5326
        %v5390 = vadd.f32 %v5389, %v5327
        %v5391 = vrot.slane %v5390, 4
        %v5392 = vadd.f32 %v5390, %v5391
        %v5393 = vrot.slane %v5392, 2
        %v5394 = vadd.f32 %v5392, %v5393
        %v5395 = vrot.slane %v5394, 1
        %v5396 = vadd.f32 %v5394, %v5395
        %5397 = vst [vmem:[%s228] sm:$0x1] %v5396
        %v5398 = vmul.f32 %v5296, %v5296
        %v5399 = vmul.f32 %v5297, %v5297
        %v5400 = vmul.f32 %v5298, %v5298
        %v5401 = vmul.f32 %v5299, %v5299
        %v5402 = vmul.f32 %v5300, %v5300
        %v5403 = vmul.f32 %v5301, %v5301
        %v5404 = vmul.f32 %v5302, %v5302
        %v5405 = vmul.f32 %v5303, %v5303
        %v5406 = vmul.f32 %v5304, %v5304
        %v5407 = vmul.f32 %v5305, %v5305
        %v5408 = vmul.f32 %v5306, %v5306
        %v5409 = vmul.f32 %v5307, %v5307
        %v5410 = vmul.f32 %v5308, %v5308
        %v5411 = vmul.f32 %v5309, %v5309
        %v5412 = vmul.f32 %v5310, %v5310
        %v5413 = vmul.f32 %v5311, %v5311
        %v5414 = vmul.f32 %v5312, %v5312
        %v5415 = vmul.f32 %v5313, %v5313
        %v5416 = vmul.f32 %v5314, %v5314
        %v5417 = vmul.f32 %v5315, %v5315
        %v5418 = vmul.f32 %v5316, %v5316
        %v5419 = vmul.f32 %v5317, %v5317
        %v5420 = vmul.f32 %v5318, %v5318
        %v5421 = vmul.f32 %v5319, %v5319
        %v5422 = vmul.f32 %v5320, %v5320
        %v5423 = vmul.f32 %v5321, %v5321
        %v5424 = vmul.f32 %v5322, %v5322
        %v5425 = vmul.f32 %v5323, %v5323
        %v5426 = vmul.f32 %v5324, %v5324
        %v5427 = vmul.f32 %v5325, %v5325
        %v5428 = vmul.f32 %v5326, %v5326
        %v5429 = vmul.f32 %v5327, %v5327
        %v5430 = vadd.f32 %v5398, %v5399
        %v5431 = vadd.f32 %v5430, %v5400
        %v5432 = vadd.f32 %v5431, %v5401
        %v5433 = vadd.f32 %v5432, %v5402
        %v5434 = vadd.f32 %v5433, %v5403
        %v5435 = vadd.f32 %v5434, %v5404
        %v5436 = vadd.f32 %v5435, %v5405
        %v5437 = vadd.f32 %v5436, %v5406
        %v5438 = vadd.f32 %v5437, %v5407
        %v5439 = vadd.f32 %v5438, %v5408
        %v5440 = vadd.f32 %v5439, %v5409
        %v5441 = vadd.f32 %v5440, %v5410
        %v5442 = vadd.f32 %v5441, %v5411
        %v5443 = vadd.f32 %v5442, %v5412
        %v5444 = vadd.f32 %v5443, %v5413
        %v5445 = vadd.f32 %v5444, %v5414
        %v5446 = vadd.f32 %v5445, %v5415
        %v5447 = vadd.f32 %v5446, %v5416
        %v5448 = vadd.f32 %v5447, %v5417
        %v5449 = vadd.f32 %v5448, %v5418
        %v5450 = vadd.f32 %v5449, %v5419
        %v5451 = vadd.f32 %v5450, %v5420
        %v5452 = vadd.f32 %v5451, %v5421
        %v5453 = vadd.f32 %v5452, %v5422
        %v5454 = vadd.f32 %v5453, %v5423
        %v5455 = vadd.f32 %v5454, %v5424
        %v5456 = vadd.f32 %v5455, %v5425
        %v5457 = vadd.f32 %v5456, %v5426
        %v5458 = vadd.f32 %v5457, %v5427
        %v5459 = vadd.f32 %v5458, %v5428
        %v5460 = vadd.f32 %v5459, %v5429
        %v5461 = vrot.slane %v5460, 4
        %v5462 = vadd.f32 %v5460, %v5461
        %v5463 = vrot.slane %v5462, 2
        %v5464 = vadd.f32 %v5462, %v5463
        %v5465 = vrot.slane %v5464, 1
        %v5466 = vadd.f32 %v5464, %v5465
        %5467 = vst [vmem:[%s228 + $0x1] sm:$0x1] %v5466
        %s5468 = sand.u32 %s120, 1
        %s5469 = scalar_lea.sflag [#allocation4], %s5468
        %s5470 = sand.u32 %s120, 1
        %s5471 = smul.addr %s5470, 256
        %s5472 = scalar_lea.vmem [#allocation3], %s5471
        %s5473 = sand.u32 %s146, 1
        %s5474 = scalar_lea.sflag [#allocation6], %s5473
        %s5475 = sand.u32 %s146, 1
        %s5476 = smul.addr %s5475, 2
        %s5477 = scalar_lea.vmem [#allocation5], %s5476
        // Predicated region
        $region37: #{tpu_custom_call.1} parent=35 // pred_check
          %p5478 = pneg %p130
        $region38: #{tpu_custom_call.1} parent=35 // pred_check_branch
          %5480 = sbr.rel (%p5478) target = $region40
        $region39: #{tpu_custom_call.1} parent=35 // pred_region
          %5482 = vsyncadd %s5469, 0
          %s5483 = smul.addr %s23, 32
          %s5484 = smul.addr %s5483, 8
          %s5485 = scalar_lea.hbm %s4, %s5484
          %s5486 = sshll.u32 %s5472, 4
          %s5487 = int_to_ptr.vmem [resolvable:$true] %s5486
          %s5488 = sshll.u32 %s5485, 4
          %s5489 = int_to_ptr.hbm [resolvable:$true] %s5488
          %5494 = dma.vmem_to_hbm [thread:$0]  %s5487, 4096, %s5489, %s5469, 128, 128, 8
        $region40: #{tpu_custom_call.1} parent=35 // pred_fallthru
          _
        // Predicated region
        $region41: #{tpu_custom_call.1} parent=35 // pred_check
          %p5495 = pneg %p156
        $region42: #{tpu_custom_call.1} parent=35 // pred_check_branch
          %5497 = sbr.rel (%p5495) target = $region44
        $region43: #{tpu_custom_call.1} parent=35 // pred_region
          %5499 = vsyncadd %s5474, 0
          %s5500 = smul.addr %s23, 2
          %s5501 = scalar_lea.hbm %s5, %s5500
          %s5503 = sshll.u32 %s5477, 4
          %s5504 = int_to_ptr.vmem [resolvable:$true] %s5503
          %s5505 = sshll.u32 %s5501, 4
          %s5506 = int_to_ptr.hbm [resolvable:$true] %s5505
          %5508 = dma.vmem_to_hbm [thread:$0]  %s5504, 32, %s5506, %s5474
        $region44: #{tpu_custom_call.1} parent=35 // pred_fallthru
          _
      $region36: #{tpu_custom_call.1} parent=5 // pred_fallthru
        _
      %p5509 = scmp.le.s32.totalorder 2, %s18
      // Predicated region
      $region45: #{tpu_custom_call.1} parent=5 // pred_check
        %p5510 = pneg %p5509
      $region46: #{tpu_custom_call.1} parent=5 // pred_check_branch
        %5512 = sbr.rel (%p5510) target = $region48
      $region47: #{tpu_custom_call.1} parent=5 // pred_region
        %s5513 = ssub.s32 %s18, 2
        // Predicated region
        $region49: #{tpu_custom_call.1} parent=47 // pred_check
          %p5514 = pneg %p136
        $region50: #{tpu_custom_call.1} parent=47 // pred_check_branch
          %5516 = sbr.rel (%p5514) target = $region52
        $region51: #{tpu_custom_call.1} parent=47 // pred_region
          %s5517 = sand.u32 %s121, 1
          %s5518 = scalar_lea.sflag [#allocation4], %s5517
          %s5519 = sand.u32 %s121, 1
          %s5520 = smul.addr %s5519, 256
          %s5521 = scalar_lea.vmem [#allocation3], %s5520
          %5523 = dma.done %s5518, 4096
        $region52: #{tpu_custom_call.1} parent=47 // pred_fallthru
          _
        // Predicated region
        $region53: #{tpu_custom_call.1} parent=47 // pred_check
          %p5524 = pneg %p162
        $region54: #{tpu_custom_call.1} parent=47 // pred_check_branch
          %5526 = sbr.rel (%p5524) target = $region56
        $region55: #{tpu_custom_call.1} parent=47 // pred_region
          %s5527 = sand.u32 %s147, 1
          %s5528 = scalar_lea.sflag [#allocation6], %s5527
          %s5529 = sand.u32 %s147, 1
          %s5530 = smul.addr %s5529, 2
          %s5531 = scalar_lea.vmem [#allocation5], %s5530
          %5533 = dma.done %s5528, 32
        $region56: #{tpu_custom_call.1} parent=47 // pred_fallthru
          _
      $region48: #{tpu_custom_call.1} parent=5 // pred_fallthru
        _
    $region6: #{tpu_custom_call.1} parent=1 // loop_footer
      %s22 = sadd.s32 1, %s18
    $region7: #{tpu_custom_call.1} parent=1 // loop_footer_branch
      %17 = sbr.rel target = $region3
    $region8: #{tpu_custom_call.1} parent=1 // loop_exit
      _
    %5534 = vsyncpa [#allocation4], 1
    %s5535 = scalar_lea.sflag [#allocation4], 1
    %5536 = vsyncpa %s5535, 1
    %5537 = vsyncpa [#allocation6], 1
    %s5538 = scalar_lea.sflag [#allocation6], 1
    %5539 = vsyncpa %s5538, 1

</llo_original>
